<compile_context>
chip_gen: v5e
topology: v5e:2x2
jax: 0.10.0
libtpu: 0.0.40
codegen_flags: <defaults>
</compile_context>

<pallas_src>
import math
import random

import jax
import jax.numpy as jnp
from jax.experimental import pallas as pl
from jax.experimental.pallas import tpu as pltpu

# ----------------------------- model hyper-params (small) -----------------------------
HIDDEN = 32          # HIDDEN_DIM (scaled down from 512)
EMBED = 32           # ENCODER/DECODER_EMBED_DIM (scaled down from 256)
NUM_LAYERS = 2
INPUT_DIM = 37       # |SRC_VOCAB|
OUTPUT_DIM = 41      # |TRG_VOCAB|
SRC_LEN = 8
TRG_LEN = 6
BATCH = 2

VOCAB_PAD = ((OUTPUT_DIM + 127) // 128) * 128   # lane-dense padded vocab (=128)
NEG = -1e30                                      # bias for padded vocab columns

assert NUM_LAYERS == 2, "fused kernels below are written for 2 LSTM layers"


# ----------------------------------- shared gate math -----------------------------------
def _lstm_gate(gates, c_prev):
    """Gate order (i, f, g, o) matches torch.nn.LSTM. gates: (B, 4H), f32."""
    H = HIDDEN
    i_g = jax.nn.sigmoid(gates[:, 0 * H:1 * H])
    f_g = jax.nn.sigmoid(gates[:, 1 * H:2 * H])
    g_g = jnp.tanh(gates[:, 2 * H:3 * H])
    o_g = jax.nn.sigmoid(gates[:, 3 * H:4 * H])
    c_new = f_g * c_prev + i_g * g_g
    h_new = o_g * jnp.tanh(c_new)
    return h_new, c_new


# ------------------------------------ encoder kernel ------------------------------------
def encoder_kernel(emb_ref, wih0_ref, b0_ref, whh0_ref,
                   wih1_ref, whh1_ref, b1_ref,
                   attn_we_ref, attn_b_ref,
                   enc_ref, ep_ref, h_ref, c_ref):
    """Both encoder LSTM layers over the whole source sequence, single invocation.

    emb_ref : (S, B, E)   embedded source tokens (gather done in XLA)
    enc_ref : (B, S, H)   top-layer outputs, batch-major (attention keys / values)
    ep_ref  : (B, S, H)   enc @ W_attn_enc + b_attn   (hoisted out of the decoder loop)
    h_ref / c_ref : (L, B, H) final hidden / cell state
    """
    S, B, E = emb_ref.shape
    H = HIDDEN

    # ---- bulk layer-0 input projection: one MXU pass for all timesteps ----
    emb = emb_ref[...].reshape(S * B, E)
    gx0 = (jnp.dot(emb, wih0_ref[...], preferred_element_type=jnp.float32)
           + b0_ref[...]).reshape(S, B, 4 * H)

    # ---- layer-0 recurrence: only h0 @ W_hh on the serial chain ----
    whh0 = whh0_ref[...]
    h0 = jnp.zeros((B, H), jnp.float32)
    c0 = jnp.zeros((B, H), jnp.float32)
    h0_list = []
    for t in range(S):                                  # static, fully unrolled
        g0 = gx0[t] + jnp.dot(h0, whh0, preferred_element_type=jnp.float32)
        h0, c0 = _lstm_gate(g0, c0)
        h0_list.append(h0)
    # inter-layer dropout = identity (eval mode)

    # ---- bulk layer-1 input projection over all stored layer-0 outputs ----
    h0_all = jnp.concatenate(h0_list, axis=0)           # (S*B, H)
    gx1 = (jnp.dot(h0_all, wih1_ref[...], preferred_element_type=jnp.float32)
           + b1_ref[...]).reshape(S, B, 4 * H)

    # ---- layer-1 recurrence ----
    whh1 = whh1_ref[...]
    h1 = jnp.zeros((B, H), jnp.float32)
    c1 = jnp.zeros((B, H), jnp.float32)
    h1_list = []
    for t in range(S):
        g1 = gx1[t] + jnp.dot(h1, whh1, preferred_element_type=jnp.float32)
        h1, c1 = _lstm_gate(g1, c1)
        h1_list.append(h1)

    # ---- single batch-major store + hoisted encoder-side attention projection ----
    enc_all = jnp.stack(h1_list, axis=1)                # (B, S, H)
    enc_ref[...] = enc_all
    ep = (jnp.dot(enc_all.reshape(B * S, H), attn_we_ref[...],
                  preferred_element_type=jnp.float32)
          + attn_b_ref[...]).reshape(B, S, H)
    ep_ref[...] = ep

    h_ref[0] = h0
    h_ref[1] = h1
    c_ref[0] = c0
    c_ref[1] = c1


def encoder_forward(src, p):
    S, B = src.shape
    emb = p["enc_emb"][src].astype(jnp.float32)          # (S, B, E), XLA gather
    vmem = pl.BlockSpec(memory_space=pltpu.MemorySpace.VMEM)
    out_shape = (jax.ShapeDtypeStruct((B, S, HIDDEN), jnp.float32),        # enc (B,S,H)
                 jax.ShapeDtypeStruct((B, S, HIDDEN), jnp.float32),        # ep  (B,S,H)
                 jax.ShapeDtypeStruct((NUM_LAYERS, B, HIDDEN), jnp.float32),
                 jax.ShapeDtypeStruct((NUM_LAYERS, B, HIDDEN), jnp.float32))
    return pl.pallas_call(
        encoder_kernel,
        out_shape=out_shape,
        in_specs=[vmem] * 9,
        out_specs=(vmem, vmem, vmem, vmem),
    )(emb, p["enc_wih0"], p["enc_b0"], p["enc_whh0"],
      p["enc_wih1"], p["enc_whh1"], p["enc_b1"],
      p["attn_we"], p["attn_b"])


# ------------------------------------ decoder kernel ------------------------------------
def decoder_kernel(trg_ref, tf_ref,                 # SMEM: (T, B) int32, (T-1,) int32
                   h0_ref, c0_ref,                  # (L, B, H) initial decoder state
                   enc_ref, ep_ref,                 # (B, S, H) each
                   attn_wh_ref, attn_v_ref,         # (H, H), (1, H)
                   emb_ref,                         # (Vp, E) decoder embedding (padded)
                   w0_ref, b0_ref,                  # fused [W_ih;W_hh] layer 0: (E+2H,4H)
                   w1_ref, b1_ref,                  # fused layer 1: (2H, 4H)
                   fcw_ref, fcb_ref,                # (E+2H, Vp), (1, Vp)  fc_out (padded)
                   out_ref):                        # (T-1, B, Vp) logits
    n_steps, B, VP = out_ref.shape

    enc = enc_ref[...]
    ep = ep_ref[...]
    attn_wh = attn_wh_ref[...]
    attn_v = attn_v_ref[...]
    emb_tab = emb_ref[...]
    w0 = w0_ref[...]
    b0 = b0_ref[...]
    w1 = w1_ref[...]
    b1 = b1_ref[...]
    fcw = fcw_ref[...]
    fcb = fcb_ref[...]

    lane = jax.lax.broadcasted_iota(jnp.int32, (1, VP), 1)
    col = jax.lax.broadcasted_iota(jnp.int32, (B, VP), 1)

    def trg_onehot(step):
        # Build the one-hot of trg[step] from int32 token ids in SMEM (no HBM tensor).
        rows = [(lane == trg_ref[step, b]).astype(jnp.float32) for b in range(B)]
        return jnp.concatenate(rows, axis=0)             # (B, VP)

    h = [h0_ref[0], h0_ref[1]]
    c = [c0_ref[0], c0_ref[1]]
    inp = trg_onehot(0)                                  # first decoder input = trg[0]

    for t in range(n_steps):                             # static, fully unrolled
        # ---- embedding (one-hot @ table; dropout = identity) ----
        embedded = jnp.dot(inp, emb_tab, preferred_element_type=jnp.float32)     # (B, E)

        # ---- Bahdanau attention (encoder-side projection `ep` precomputed) ----
        hp = jnp.dot(h[1], attn_wh, preferred_element_type=jnp.float32)          # (B, H)
        energy = jnp.tanh(hp[:, None, :] + ep)                                   # (B, S, H)
        scores = jnp.sum(energy * attn_v, axis=-1)                               # (B, S)
        m = jnp.max(scores, axis=-1, keepdims=True)
        e = jnp.exp(scores - m)
        a = e * pl.reciprocal(jnp.sum(e, axis=-1, keepdims=True), approx=True)   # softmax
        # context reduction routed through the MXU (batched matmul, like flash-attn)
        weighted = jnp.einsum('bqs,bsh->bqh', a[:, None, :], enc,
                              preferred_element_type=jnp.float32)[:, 0, :]       # (B, H)

        ew = jnp.concatenate([embedded, weighted], axis=1)                       # (B, E+H)

        # ---- 2-layer LSTM step: fused [x | h] @ [W_ih; W_hh] (one matmul per layer) ----
        g0 = jnp.dot(jnp.concatenate([ew, h[0]], axis=1), w0,
                     preferred_element_type=jnp.float32) + b0
        h0n, c0n = _lstm_gate(g0, c[0])
        g1 = jnp.dot(jnp.concatenate([h0n, h[1]], axis=1), w1,
                     preferred_element_type=jnp.float32) + b1
        h1n, c1n = _lstm_gate(g1, c[1])
        h = [h0n, h1n]
        c = [c0n, c1n]

        # ---- fc_out: lane-dense (128-wide) padded logits; weight rows pre-permuted to
        #      the [embedded | weighted | h_top] order so `ew` is reused ----
        logits = jnp.dot(jnp.concatenate([ew, h1n], axis=1), fcw,
                         preferred_element_type=jnp.float32) + fcb               # (B, Vp)
        out_ref[t] = logits

        # ---- next input: teacher forcing vs greedy (first-max tie-break, like torch) ----
        # (kept as max + masked-min instead of jnp.argmax for robust Mosaic lowering;
        #  equality with the row max is exact so the tie-break is deterministic)
        mx = jnp.max(logits, axis=-1, keepdims=True)
        first = jnp.min(jnp.where(logits == mx, col, VP), axis=-1, keepdims=True)
        top1_oh = (col == first).astype(jnp.float32)                             # (B, Vp)
        tf = tf_ref[t].astype(jnp.float32)                                       # 0/1 scalar
        inp = tf * trg_onehot(t + 1) + (1.0 - tf) * top1_oh


def decoder_forward(trg, tf_flags, h0, c0, enc_bsh, ep, p):
    T, B = trg.shape
    vmem = pl.BlockSpec(memory_space=pltpu.MemorySpace.VMEM)
    smem = pl.BlockSpec(memory_space=pltpu.MemorySpace.SMEM)
    operands = (trg, tf_flags, h0, c0, enc_bsh, ep,
                p["attn_wh"], p["attn_v"], p["dec_emb_p"],
                p["dec_w0"], p["dec_b0"], p["dec_w1"], p["dec_b1"],
                p["fc_w_p"], p["fc_b_p"])
    in_specs = [smem, smem] + [vmem] * (len(operands) - 2)
    return pl.pallas_call(
        decoder_kernel,
        out_shape=jax.ShapeDtypeStruct((T - 1, B, VOCAB_PAD), jnp.float32),
        in_specs=in_specs,
        out_specs=vmem,
    )(*operands)


# ------------------------------------- parameters -------------------------------------
def _uniform(key, shape, bound):
    return jax.random.uniform(key, shape, jnp.float32, -bound, bound)


def init_params(key):
    keys = iter(jax.random.split(key, 32))
    p = {}
    k_h = 1.0 / math.sqrt(HIDDEN)

    # --- encoder ---
    p["enc_emb"] = jax.random.normal(next(keys), (INPUT_DIM, EMBED), jnp.float32)
    enc_w = []
    for layer in range(NUM_LAYERS):
        in_dim = EMBED if layer == 0 else HIDDEN
        w_ih = _uniform(next(keys), (4 * HIDDEN, in_dim), k_h)
        w_hh = _uniform(next(keys), (4 * HIDDEN, HIDDEN), k_h)
        b_ih = _uniform(next(keys), (4 * HIDDEN,), k_h)
        b_hh = _uniform(next(keys), (4 * HIDDEN,), k_h)
        enc_w.append((w_ih.T, w_hh.T, (b_ih + b_hh).reshape(1, -1)))
    p["enc_wih0"], p["enc_whh0"], p["enc_b0"] = enc_w[0]
    p["enc_wih1"], p["enc_whh1"], p["enc_b1"] = enc_w[1]

    # --- attention: attn = Linear(2H, H), v = Linear(H, 1, bias=False) ---
    w_attn = _uniform(next(keys), (HIDDEN, 2 * HIDDEN), 1.0 / math.sqrt(2 * HIDDEN))
    p["attn_wh"] = w_attn[:, :HIDDEN].T                   # (H, H) multiplies decoder hidden
    p["attn_we"] = w_attn[:, HIDDEN:].T                   # (H, H) multiplies encoder outputs
    p["attn_b"] = _uniform(next(keys), (1, HIDDEN), 1.0 / math.sqrt(2 * HIDDEN))
    p["attn_v"] = _uniform(next(keys), (1, HIDDEN), k_h)  # v.weight row

    # --- decoder (embedding + fc_out padded to lane-dense VOCAB_PAD) ---
    dec_emb = jax.random.normal(next(keys), (OUTPUT_DIM, EMBED), jnp.float32)
    p["dec_emb_p"] = jnp.zeros((VOCAB_PAD, EMBED), jnp.float32).at[:OUTPUT_DIM].set(dec_emb)

    for layer in range(NUM_LAYERS):
        in_dim = (EMBED + HIDDEN) if layer == 0 else HIDDEN
        w_ih = _uniform(next(keys), (4 * HIDDEN, in_dim), k_h)
        w_hh = _uniform(next(keys), (4 * HIDDEN, HIDDEN), k_h)
        b_ih = _uniform(next(keys), (4 * HIDDEN,), k_h)
        b_hh = _uniform(next(keys), (4 * HIDDEN,), k_h)
        # fused [W_ih; W_hh] so the kernel does one matmul on [x | h]
        p[f"dec_w{layer}"] = jnp.concatenate([w_ih.T, w_hh.T], axis=0)  # (in+H, 4H)
        p[f"dec_b{layer}"] = (b_ih + b_hh).reshape(1, -1)

    fc_in = 2 * HIDDEN + EMBED
    fc_w = _uniform(next(keys), (OUTPUT_DIM, fc_in), 1.0 / math.sqrt(fc_in))
    fc_b = _uniform(next(keys), (OUTPUT_DIM,), 1.0 / math.sqrt(fc_in))
    fc_wT = fc_w.T                                        # rows ordered [h_top | weighted | embedded]
    # permute rows to [embedded | weighted | h_top] so the kernel reuses its ew concat
    fc_perm = jnp.concatenate([fc_wT[2 * HIDDEN:],
                               fc_wT[HIDDEN:2 * HIDDEN],
                               fc_wT[:HIDDEN]], axis=0)   # (E+2H, V)
    p["fc_w_p"] = jnp.zeros((fc_in, VOCAB_PAD), jnp.float32).at[:, :OUTPUT_DIM].set(fc_perm)
    # padded vocab columns get a huge negative bias so greedy argmax never selects them
    p["fc_b_p"] = jnp.full((1, VOCAB_PAD), NEG, jnp.float32).at[0, :OUTPUT_DIM].set(fc_b)
    return p


# ------------------------------------ forward pass ------------------------------------
@jax.jit
def seq2seq_forward(src, trg, tf_flags, params):
    B = src.shape[1]
    enc_bsh, ep, h_enc, c_enc = encoder_forward(src, params)        # fused encoder kernel
    logits_p = decoder_forward(trg, tf_flags, h_enc, c_enc, enc_bsh, ep, params)
    logits = logits_p[:, :, :OUTPUT_DIM]                            # strip lane padding
    zeros0 = jnp.zeros((1, B, OUTPUT_DIM), jnp.float32)             # outputs[0] stays zero
    return jnp.concatenate([zeros0, logits], axis=0)                # (T, B, V)


# ----------------------------------------- main ----------------------------------------
if __name__ == "__main__":
    key = jax.random.PRNGKey(0)
    k_p, k_src, k_trg = jax.random.split(key, 3)
    params = init_params(k_p)

    src = jax.random.randint(k_src, (SRC_LEN, BATCH), 0, INPUT_DIM, dtype=jnp.int32)
    trg = jax.random.randint(k_trg, (TRG_LEN, BATCH), 0, OUTPUT_DIM, dtype=jnp.int32)

    # deterministic teacher-forcing decisions (host-side, passed as data, not baked in)
    rng = random.Random(0)
    tf_flags = jnp.asarray([1 if rng.random() < 0.5 else 0 for _ in range(TRG_LEN - 1)],
                           dtype=jnp.int32)

    out = seq2seq_forward(src, trg, tf_flags, params)
    out = jax.block_until_ready(out)
    assert out.shape == (TRG_LEN, BATCH, OUTPUT_DIM)
    assert bool(jnp.all(jnp.isfinite(out)))
    print("KERNEL_OK")
</pallas_src>

<mosaic_0001>
module attributes {stable_mosaic.version = 11 : i64} {
  func.func @decoder_kernel(%arg0: memref<6x2xi32, #tpu.memory_space<smem>>, %arg1: memref<5xi32, #tpu.memory_space<smem>>, %arg2: memref<2x2x32xf32, #tpu.memory_space<vmem>>, %arg3: memref<2x2x32xf32, #tpu.memory_space<vmem>>, %arg4: memref<2x8x32xf32, #tpu.memory_space<vmem>>, %arg5: memref<2x8x32xf32, #tpu.memory_space<vmem>>, %arg6: memref<32x32xf32, #tpu.memory_space<vmem>>, %arg7: memref<1x32xf32, #tpu.memory_space<vmem>>, %arg8: memref<128x32xf32, #tpu.memory_space<vmem>>, %arg9: memref<96x128xf32, #tpu.memory_space<vmem>>, %arg10: memref<1x128xf32, #tpu.memory_space<vmem>>, %arg11: memref<64x128xf32, #tpu.memory_space<vmem>>, %arg12: memref<1x128xf32, #tpu.memory_space<vmem>>, %arg13: memref<96x128xf32, #tpu.memory_space<vmem>>, %arg14: memref<1x128xf32, #tpu.memory_space<vmem>>, %arg15: memref<5x2x128xf32, #tpu.memory_space<vmem>>) attributes {dimension_semantics = [], scalar_prefetch = 0 : i64, scratch_operands = 0 : i64, tpu.core_type = #tpu.core_type<tc>} {
    %c0 = arith.constant 0 : index
    %c0_0 = arith.constant 0 : index
    %c0_1 = arith.constant 0 : index
    %0 = vector.load %arg4[%c0, %c0_0, %c0_1] : memref<2x8x32xf32, #tpu.memory_space<vmem>>, vector<2x8x32xf32>
    %c0_2 = arith.constant 0 : index
    %c0_3 = arith.constant 0 : index
    %c0_4 = arith.constant 0 : index
    %1 = vector.load %arg5[%c0_2, %c0_3, %c0_4] : memref<2x8x32xf32, #tpu.memory_space<vmem>>, vector<2x8x32xf32>
    %c0_5 = arith.constant 0 : index
    %c0_6 = arith.constant 0 : index
    %2 = vector.load %arg6[%c0_5, %c0_6] : memref<32x32xf32, #tpu.memory_space<vmem>>, vector<32x32xf32>
    %c0_7 = arith.constant 0 : index
    %c0_8 = arith.constant 0 : index
    %3 = vector.load %arg7[%c0_7, %c0_8] : memref<1x32xf32, #tpu.memory_space<vmem>>, vector<1x32xf32>
    %c0_9 = arith.constant 0 : index
    %c0_10 = arith.constant 0 : index
    %4 = vector.load %arg8[%c0_9, %c0_10] : memref<128x32xf32, #tpu.memory_space<vmem>>, vector<128x32xf32>
    %c0_11 = arith.constant 0 : index
    %c0_12 = arith.constant 0 : index
    %5 = vector.load %arg9[%c0_11, %c0_12] : memref<96x128xf32, #tpu.memory_space<vmem>>, vector<96x128xf32>
    %c0_13 = arith.constant 0 : index
    %c0_14 = arith.constant 0 : index
    %6 = vector.load %arg10[%c0_13, %c0_14] : memref<1x128xf32, #tpu.memory_space<vmem>>, vector<1x128xf32>
    %c0_15 = arith.constant 0 : index
    %c0_16 = arith.constant 0 : index
    %7 = vector.load %arg11[%c0_15, %c0_16] : memref<64x128xf32, #tpu.memory_space<vmem>>, vector<64x128xf32>
    %c0_17 = arith.constant 0 : index
    %c0_18 = arith.constant 0 : index
    %8 = vector.load %arg12[%c0_17, %c0_18] : memref<1x128xf32, #tpu.memory_space<vmem>>, vector<1x128xf32>
    %c0_19 = arith.constant 0 : index
    %c0_20 = arith.constant 0 : index
    %9 = vector.load %arg13[%c0_19, %c0_20] : memref<96x128xf32, #tpu.memory_space<vmem>>, vector<96x128xf32>
    %c0_21 = arith.constant 0 : index
    %c0_22 = arith.constant 0 : index
    %10 = vector.load %arg14[%c0_21, %c0_22] : memref<1x128xf32, #tpu.memory_space<vmem>>, vector<1x128xf32>
    %11 = tpu.iota {dimensions = array<i32: 1>} : vector<1x128xi32>
    %12 = tpu.iota {dimensions = array<i32: 1>} : vector<2x128xi32>
    %c0_23 = arith.constant 0 : index
    %c0_24 = arith.constant 0 : index
    %c0_25 = arith.constant 0 : index
    %13 = vector.load %arg2[%c0_23, %c0_24, %c0_25] : memref<2x2x32xf32, #tpu.memory_space<vmem>>, vector<1x2x32xf32>
    %14 = vector.shape_cast %13 : vector<1x2x32xf32> to vector<2x32xf32>
    %c1 = arith.constant 1 : index
    %c0_26 = arith.constant 0 : index
    %c0_27 = arith.constant 0 : index
    %15 = vector.load %arg2[%c1, %c0_26, %c0_27] : memref<2x2x32xf32, #tpu.memory_space<vmem>>, vector<1x2x32xf32>
    %16 = vector.shape_cast %15 : vector<1x2x32xf32> to vector<2x32xf32>
    %c0_28 = arith.constant 0 : index
    %c0_29 = arith.constant 0 : index
    %c0_30 = arith.constant 0 : index
    %17 = vector.load %arg3[%c0_28, %c0_29, %c0_30] : memref<2x2x32xf32, #tpu.memory_space<vmem>>, vector<1x2x32xf32>
    %18 = vector.shape_cast %17 : vector<1x2x32xf32> to vector<2x32xf32>
    %c1_31 = arith.constant 1 : index
    %c0_32 = arith.constant 0 : index
    %c0_33 = arith.constant 0 : index
    %19 = vector.load %arg3[%c1_31, %c0_32, %c0_33] : memref<2x2x32xf32, #tpu.memory_space<vmem>>, vector<1x2x32xf32>
    %20 = vector.shape_cast %19 : vector<1x2x32xf32> to vector<2x32xf32>
    %c0_34 = arith.constant 0 : index
    %c0_35 = arith.constant 0 : index
    %21 = memref.load %arg0[%c0_34, %c0_35] : memref<6x2xi32, #tpu.memory_space<smem>>
    %22 = vector.broadcast %21 : i32 to vector<1x128xi32>
    %23 = arith.cmpi eq, %11, %22 : vector<1x128xi32>
    %24 = arith.extui %23 : vector<1x128xi1> to vector<1x128xi32>
    %25 = arith.sitofp %24 : vector<1x128xi32> to vector<1x128xf32>
    %c0_36 = arith.constant 0 : index
    %c1_37 = arith.constant 1 : index
    %26 = memref.load %arg0[%c0_36, %c1_37] : memref<6x2xi32, #tpu.memory_space<smem>>
    %27 = vector.broadcast %26 : i32 to vector<1x128xi32>
    %28 = arith.cmpi eq, %11, %27 : vector<1x128xi32>
    %29 = arith.extui %28 : vector<1x128xi1> to vector<1x128xi32>
    %30 = arith.sitofp %29 : vector<1x128xi32> to vector<1x128xf32>
    %31 = tpu.concatenate %25, %30 in 0 : vector<1x128xf32>, vector<1x128xf32> -> vector<2x128xf32>
    %cst = arith.constant dense<0.000000e+00> : vector<2x32xf32>
    %32 = tpu.matmul %31, %4, %cst {dimension_numbers = #tpu.dot_dimension_numbers<[1], [0], [0], [1], [0, 0, 1, 1], [], []>} : vector<2x128xf32>, vector<128x32xf32>, vector<2x32xf32> -> vector<2x32xf32>
    %cst_38 = arith.constant dense<0.000000e+00> : vector<2x32xf32>
    %33 = tpu.matmul %16, %2, %cst_38 {dimension_numbers = #tpu.dot_dimension_numbers<[1], [0], [0], [1], [0, 0, 1, 1], [], []>} : vector<2x32xf32>, vector<32x32xf32>, vector<2x32xf32> -> vector<2x32xf32>
    %34 = vector.shape_cast %33 : vector<2x32xf32> to vector<2x1x32xf32>
    %35 = vector.broadcast %34 : vector<2x1x32xf32> to vector<2x8x32xf32>
    %36 = arith.addf %35, %1 : vector<2x8x32xf32>
    %37 = math.tanh %36 : vector<2x8x32xf32>
    %38 = vector.shape_cast %3 : vector<1x32xf32> to vector<1x1x32xf32>
    %39 = vector.broadcast %38 : vector<1x1x32xf32> to vector<2x8x32xf32>
    %40 = arith.mulf %37, %39 : vector<2x8x32xf32>
    %cst_39 = arith.constant dense<0.000000e+00> : vector<2x8xf32>
    %41 = vector.multi_reduction <add>, %40, %cst_39 [2] : vector<2x8x32xf32> to vector<2x8xf32>
    %cst_40 = arith.constant dense<0xFF800000> : vector<2xf32>
    %42 = vector.multi_reduction <maximumf>, %41, %cst_40 [1] : vector<2x8xf32> to vector<2xf32>
    %43 = vector.shape_cast %42 : vector<2xf32> to vector<2x1xf32>
    %44 = vector.broadcast %43 : vector<2x1xf32> to vector<2x8xf32>
    %45 = arith.subf %41, %44 : vector<2x8xf32>
    %46 = math.exp %45 : vector<2x8xf32>
    %cst_41 = arith.constant dense<0.000000e+00> : vector<2xf32>
    %47 = vector.multi_reduction <add>, %46, %cst_41 [1] : vector<2x8xf32> to vector<2xf32>
    %48 = vector.shape_cast %47 : vector<2xf32> to vector<2x1xf32>
    %49 = tpu.reciprocal %48 {approx = true} : vector<2x1xf32> -> vector<2x1xf32>
    %50 = vector.broadcast %49 : vector<2x1xf32> to vector<2x8xf32>
    %51 = arith.mulf %46, %50 : vector<2x8xf32>
    %52 = vector.shape_cast %51 : vector<2x8xf32> to vector<2x1x8xf32>
    "tpu.trace_start"() <{level = 10 : i32, message = "bqs,bsh->bqh"}> : () -> ()
    %cst_42 = arith.constant dense<0.000000e+00> : vector<2x1x32xf32>
    %53 = tpu.matmul %52, %0, %cst_42 {dimension_numbers = #tpu.dot_dimension_numbers<[2], [1], [1], [2], [0, 0, 0, 1, 1, 2], [0], [0]>} : vector<2x1x8xf32>, vector<2x8x32xf32>, vector<2x1x32xf32> -> vector<2x1x32xf32>
    "tpu.trace_stop"() : () -> ()
    %54 = vector.shape_cast %53 : vector<2x1x32xf32> to vector<2x32xf32>
    %55 = tpu.concatenate %32, %54 in 1 : vector<2x32xf32>, vector<2x32xf32> -> vector<2x64xf32>
    %56 = tpu.concatenate %55, %14 in 1 : vector<2x64xf32>, vector<2x32xf32> -> vector<2x96xf32>
    %cst_43 = arith.constant dense<0.000000e+00> : vector<2x128xf32>
    %57 = tpu.matmul %56, %5, %cst_43 {dimension_numbers = #tpu.dot_dimension_numbers<[1], [0], [0], [1], [0, 0, 1, 1], [], []>} : vector<2x96xf32>, vector<96x128xf32>, vector<2x128xf32> -> vector<2x128xf32>
    %58 = vector.broadcast %6 : vector<1x128xf32> to vector<2x128xf32>
    %59 = arith.addf %57, %58 : vector<2x128xf32>
    %60 = vector.extract_strided_slice %59 {offsets = [0, 0], sizes = [2, 32], strides = [1, 1]} : vector<2x128xf32> to vector<2x32xf32>
    %61 = arith.negf %60 : vector<2x32xf32>
    %62 = math.exp %61 : vector<2x32xf32>
    %cst_44 = arith.constant 1.000000e+00 : f32
    %63 = vector.broadcast %cst_44 : f32 to vector<2x32xf32>
    %64 = arith.addf %63, %62 : vector<2x32xf32>
    %65 = arith.divf %63, %64 : vector<2x32xf32>
    %66 = vector.extract_strided_slice %59 {offsets = [0, 32], sizes = [2, 32], strides = [1, 1]} : vector<2x128xf32> to vector<2x32xf32>
    %67 = arith.negf %66 : vector<2x32xf32>
    %68 = math.exp %67 : vector<2x32xf32>
    %cst_45 = arith.constant 1.000000e+00 : f32
    %69 = vector.broadcast %cst_45 : f32 to vector<2x32xf32>
    %70 = arith.addf %69, %68 : vector<2x32xf32>
    %71 = arith.divf %69, %70 : vector<2x32xf32>
    %72 = vector.extract_strided_slice %59 {offsets = [0, 64], sizes = [2, 32], strides = [1, 1]} : vector<2x128xf32> to vector<2x32xf32>
    %73 = math.tanh %72 : vector<2x32xf32>
    %74 = vector.extract_strided_slice %59 {offsets = [0, 96], sizes = [2, 32], strides = [1, 1]} : vector<2x128xf32> to vector<2x32xf32>
    %75 = arith.negf %74 : vector<2x32xf32>
    %76 = math.exp %75 : vector<2x32xf32>
    %cst_46 = arith.constant 1.000000e+00 : f32
    %77 = vector.broadcast %cst_46 : f32 to vector<2x32xf32>
    %78 = arith.addf %77, %76 : vector<2x32xf32>
    %79 = arith.divf %77, %78 : vector<2x32xf32>
    %80 = arith.mulf %71, %18 : vector<2x32xf32>
    %81 = arith.mulf %65, %73 : vector<2x32xf32>
    %82 = arith.addf %80, %81 : vector<2x32xf32>
    %83 = math.tanh %82 : vector<2x32xf32>
    %84 = arith.mulf %79, %83 : vector<2x32xf32>
    %85 = tpu.concatenate %84, %16 in 1 : vector<2x32xf32>, vector<2x32xf32> -> vector<2x64xf32>
    %cst_47 = arith.constant dense<0.000000e+00> : vector<2x128xf32>
    %86 = tpu.matmul %85, %7, %cst_47 {dimension_numbers = #tpu.dot_dimension_numbers<[1], [0], [0], [1], [0, 0, 1, 1], [], []>} : vector<2x64xf32>, vector<64x128xf32>, vector<2x128xf32> -> vector<2x128xf32>
    %87 = vector.broadcast %8 : vector<1x128xf32> to vector<2x128xf32>
    %88 = arith.addf %86, %87 : vector<2x128xf32>
    %89 = vector.extract_strided_slice %88 {offsets = [0, 0], sizes = [2, 32], strides = [1, 1]} : vector<2x128xf32> to vector<2x32xf32>
    %90 = arith.negf %89 : vector<2x32xf32>
    %91 = math.exp %90 : vector<2x32xf32>
    %cst_48 = arith.constant 1.000000e+00 : f32
    %92 = vector.broadcast %cst_48 : f32 to vector<2x32xf32>
    %93 = arith.addf %92, %91 : vector<2x32xf32>
    %94 = arith.divf %92, %93 : vector<2x32xf32>
    %95 = vector.extract_strided_slice %88 {offsets = [0, 32], sizes = [2, 32], strides = [1, 1]} : vector<2x128xf32> to vector<2x32xf32>
    %96 = arith.negf %95 : vector<2x32xf32>
    %97 = math.exp %96 : vector<2x32xf32>
    %cst_49 = arith.constant 1.000000e+00 : f32
    %98 = vector.broadcast %cst_49 : f32 to vector<2x32xf32>
    %99 = arith.addf %98, %97 : vector<2x32xf32>
    %100 = arith.divf %98, %99 : vector<2x32xf32>
    %101 = vector.extract_strided_slice %88 {offsets = [0, 64], sizes = [2, 32], strides = [1, 1]} : vector<2x128xf32> to vector<2x32xf32>
    %102 = math.tanh %101 : vector<2x32xf32>
    %103 = vector.extract_strided_slice %88 {offsets = [0, 96], sizes = [2, 32], strides = [1, 1]} : vector<2x128xf32> to vector<2x32xf32>
    %104 = arith.negf %103 : vector<2x32xf32>
    %105 = math.exp %104 : vector<2x32xf32>
    %cst_50 = arith.constant 1.000000e+00 : f32
    %106 = vector.broadcast %cst_50 : f32 to vector<2x32xf32>
    %107 = arith.addf %106, %105 : vector<2x32xf32>
    %108 = arith.divf %106, %107 : vector<2x32xf32>
    %109 = arith.mulf %100, %20 : vector<2x32xf32>
    %110 = arith.mulf %94, %102 : vector<2x32xf32>
    %111 = arith.addf %109, %110 : vector<2x32xf32>
    %112 = math.tanh %111 : vector<2x32xf32>
    %113 = arith.mulf %108, %112 : vector<2x32xf32>
    %114 = tpu.concatenate %55, %113 in 1 : vector<2x64xf32>, vector<2x32xf32> -> vector<2x96xf32>
    %cst_51 = arith.constant dense<0.000000e+00> : vector<2x128xf32>
    %115 = tpu.matmul %114, %9, %cst_51 {dimension_numbers = #tpu.dot_dimension_numbers<[1], [0], [0], [1], [0, 0, 1, 1], [], []>} : vector<2x96xf32>, vector<96x128xf32>, vector<2x128xf32> -> vector<2x128xf32>
    %116 = vector.broadcast %10 : vector<1x128xf32> to vector<2x128xf32>
    %117 = arith.addf %115, %116 : vector<2x128xf32>
    %c0_52 = arith.constant 0 : index
    %c0_53 = arith.constant 0 : index
    %c0_54 = arith.constant 0 : index
    %118 = vector.load %arg15[%c0_52, %c0_53, %c0_54] : memref<5x2x128xf32, #tpu.memory_space<vmem>>, vector<1x2x128xf32>
    %119 = vector.shape_cast %118 : vector<1x2x128xf32> to vector<2x128xf32>
    %120 = vector.shape_cast %117 : vector<2x128xf32> to vector<1x2x128xf32>
    tpu.vector_store %arg15[%c0_52, %c0_53, %c0_54], %120 {strides = array<i32>} : memref<5x2x128xf32, #tpu.memory_space<vmem>>, vector<1x2x128xf32>,
    %cst_55 = arith.constant dense<0xFF800000> : vector<2xf32>
    %121 = vector.multi_reduction <maximumf>, %117, %cst_55 [1] : vector<2x128xf32> to vector<2xf32>
    %122 = vector.shape_cast %121 : vector<2xf32> to vector<2x1xf32>
    %123 = vector.broadcast %122 : vector<2x1xf32> to vector<2x128xf32>
    %124 = arith.cmpf oeq, %117, %123 : vector<2x128xf32>
    %c128_i32 = arith.constant 128 : i32
    %125 = vector.broadcast %c128_i32 : i32 to vector<2x128xi32>
    %126 = arith.select %124, %12, %125 : vector<2x128xi1>, vector<2x128xi32>
    %cst_56 = arith.constant dense<2147483647> : vector<2xi32>
    %127 = vector.multi_reduction <minsi>, %126, %cst_56 [1] : vector<2x128xi32> to vector<2xi32>
    %128 = vector.shape_cast %127 : vector<2xi32> to vector<2x1xi32>
    %129 = vector.broadcast %128 : vector<2x1xi32> to vector<2x128xi32>
    %130 = arith.cmpi eq, %12, %129 : vector<2x128xi32>
    %131 = arith.extui %130 : vector<2x128xi1> to vector<2x128xi32>
    %132 = arith.sitofp %131 : vector<2x128xi32> to vector<2x128xf32>
    %c0_57 = arith.constant 0 : index
    %133 = memref.load %arg1[%c0_57] : memref<5xi32, #tpu.memory_space<smem>>
    %134 = arith.sitofp %133 : i32 to f32
    %c1_58 = arith.constant 1 : index
    %c0_59 = arith.constant 0 : index
    %135 = memref.load %arg0[%c1_58, %c0_59] : memref<6x2xi32, #tpu.memory_space<smem>>
    %136 = vector.broadcast %135 : i32 to vector<1x128xi32>
    %137 = arith.cmpi eq, %11, %136 : vector<1x128xi32>
    %138 = arith.extui %137 : vector<1x128xi1> to vector<1x128xi32>
    %139 = arith.sitofp %138 : vector<1x128xi32> to vector<1x128xf32>
    %c1_60 = arith.constant 1 : index
    %c1_61 = arith.constant 1 : index
    %140 = memref.load %arg0[%c1_60, %c1_61] : memref<6x2xi32, #tpu.memory_space<smem>>
    %141 = vector.broadcast %140 : i32 to vector<1x128xi32>
    %142 = arith.cmpi eq, %11, %141 : vector<1x128xi32>
    %143 = arith.extui %142 : vector<1x128xi1> to vector<1x128xi32>
    %144 = arith.sitofp %143 : vector<1x128xi32> to vector<1x128xf32>
    %145 = tpu.concatenate %139, %144 in 0 : vector<1x128xf32>, vector<1x128xf32> -> vector<2x128xf32>
    %146 = vector.broadcast %134 : f32 to vector<2x128xf32>
    %147 = arith.mulf %146, %145 : vector<2x128xf32>
    %cst_62 = arith.constant 1.000000e+00 : f32
    %148 = arith.subf %cst_62, %134 : f32
    %149 = vector.broadcast %148 : f32 to vector<2x128xf32>
    %150 = arith.mulf %149, %132 : vector<2x128xf32>
    %151 = arith.addf %147, %150 : vector<2x128xf32>
    %cst_63 = arith.constant dense<0.000000e+00> : vector<2x32xf32>
    %152 = tpu.matmul %151, %4, %cst_63 {dimension_numbers = #tpu.dot_dimension_numbers<[1], [0], [0], [1], [0, 0, 1, 1], [], []>} : vector<2x128xf32>, vector<128x32xf32>, vector<2x32xf32> -> vector<2x32xf32>
    %cst_64 = arith.constant dense<0.000000e+00> : vector<2x32xf32>
    %153 = tpu.matmul %113, %2, %cst_64 {dimension_numbers = #tpu.dot_dimension_numbers<[1], [0], [0], [1], [0, 0, 1, 1], [], []>} : vector<2x32xf32>, vector<32x32xf32>, vector<2x32xf32> -> vector<2x32xf32>
    %154 = vector.shape_cast %153 : vector<2x32xf32> to vector<2x1x32xf32>
    %155 = vector.broadcast %154 : vector<2x1x32xf32> to vector<2x8x32xf32>
    %156 = arith.addf %155, %1 : vector<2x8x32xf32>
    %157 = math.tanh %156 : vector<2x8x32xf32>
    %158 = vector.shape_cast %3 : vector<1x32xf32> to vector<1x1x32xf32>
    %159 = vector.broadcast %158 : vector<1x1x32xf32> to vector<2x8x32xf32>
    %160 = arith.mulf %157, %159 : vector<2x8x32xf32>
    %cst_65 = arith.constant dense<0.000000e+00> : vector<2x8xf32>
    %161 = vector.multi_reduction <add>, %160, %cst_65 [2] : vector<2x8x32xf32> to vector<2x8xf32>
    %cst_66 = arith.constant dense<0xFF800000> : vector<2xf32>
    %162 = vector.multi_reduction <maximumf>, %161, %cst_66 [1] : vector<2x8xf32> to vector<2xf32>
    %163 = vector.shape_cast %162 : vector<2xf32> to vector<2x1xf32>
    %164 = vector.broadcast %163 : vector<2x1xf32> to vector<2x8xf32>
    %165 = arith.subf %161, %164 : vector<2x8xf32>
    %166 = math.exp %165 : vector<2x8xf32>
    %cst_67 = arith.constant dense<0.000000e+00> : vector<2xf32>
    %167 = vector.multi_reduction <add>, %166, %cst_67 [1] : vector<2x8xf32> to vector<2xf32>
    %168 = vector.shape_cast %167 : vector<2xf32> to vector<2x1xf32>
    %169 = tpu.reciprocal %168 {approx = true} : vector<2x1xf32> -> vector<2x1xf32>
    %170 = vector.broadcast %169 : vector<2x1xf32> to vector<2x8xf32>
    %171 = arith.mulf %166, %170 : vector<2x8xf32>
    %172 = vector.shape_cast %171 : vector<2x8xf32> to vector<2x1x8xf32>
    "tpu.trace_start"() <{level = 10 : i32, message = "bqs,bsh->bqh"}> : () -> ()
    %cst_68 = arith.constant dense<0.000000e+00> : vector<2x1x32xf32>
    %173 = tpu.matmul %172, %0, %cst_68 {dimension_numbers = #tpu.dot_dimension_numbers<[2], [1], [1], [2], [0, 0, 0, 1, 1, 2], [0], [0]>} : vector<2x1x8xf32>, vector<2x8x32xf32>, vector<2x1x32xf32> -> vector<2x1x32xf32>
    "tpu.trace_stop"() : () -> ()
    %174 = vector.shape_cast %173 : vector<2x1x32xf32> to vector<2x32xf32>
    %175 = tpu.concatenate %152, %174 in 1 : vector<2x32xf32>, vector<2x32xf32> -> vector<2x64xf32>
    %176 = tpu.concatenate %175, %84 in 1 : vector<2x64xf32>, vector<2x32xf32> -> vector<2x96xf32>
    %cst_69 = arith.constant dense<0.000000e+00> : vector<2x128xf32>
    %177 = tpu.matmul %176, %5, %cst_69 {dimension_numbers = #tpu.dot_dimension_numbers<[1], [0], [0], [1], [0, 0, 1, 1], [], []>} : vector<2x96xf32>, vector<96x128xf32>, vector<2x128xf32> -> vector<2x128xf32>
    %178 = vector.broadcast %6 : vector<1x128xf32> to vector<2x128xf32>
    %179 = arith.addf %177, %178 : vector<2x128xf32>
    %180 = vector.extract_strided_slice %179 {offsets = [0, 0], sizes = [2, 32], strides = [1, 1]} : vector<2x128xf32> to vector<2x32xf32>
    %181 = arith.negf %180 : vector<2x32xf32>
    %182 = math.exp %181 : vector<2x32xf32>
    %cst_70 = arith.constant 1.000000e+00 : f32
    %183 = vector.broadcast %cst_70 : f32 to vector<2x32xf32>
    %184 = arith.addf %183, %182 : vector<2x32xf32>
    %185 = arith.divf %183, %184 : vector<2x32xf32>
    %186 = vector.extract_strided_slice %179 {offsets = [0, 32], sizes = [2, 32], strides = [1, 1]} : vector<2x128xf32> to vector<2x32xf32>
    %187 = arith.negf %186 : vector<2x32xf32>
    %188 = math.exp %187 : vector<2x32xf32>
    %cst_71 = arith.constant 1.000000e+00 : f32
    %189 = vector.broadcast %cst_71 : f32 to vector<2x32xf32>
    %190 = arith.addf %189, %188 : vector<2x32xf32>
    %191 = arith.divf %189, %190 : vector<2x32xf32>
    %192 = vector.extract_strided_slice %179 {offsets = [0, 64], sizes = [2, 32], strides = [1, 1]} : vector<2x128xf32> to vector<2x32xf32>
    %193 = math.tanh %192 : vector<2x32xf32>
    %194 = vector.extract_strided_slice %179 {offsets = [0, 96], sizes = [2, 32], strides = [1, 1]} : vector<2x128xf32> to vector<2x32xf32>
    %195 = arith.negf %194 : vector<2x32xf32>
    %196 = math.exp %195 : vector<2x32xf32>
    %cst_72 = arith.constant 1.000000e+00 : f32
    %197 = vector.broadcast %cst_72 : f32 to vector<2x32xf32>
    %198 = arith.addf %197, %196 : vector<2x32xf32>
    %199 = arith.divf %197, %198 : vector<2x32xf32>
    %200 = arith.mulf %191, %82 : vector<2x32xf32>
    %201 = arith.mulf %185, %193 : vector<2x32xf32>
    %202 = arith.addf %200, %201 : vector<2x32xf32>
    %203 = math.tanh %202 : vector<2x32xf32>
    %204 = arith.mulf %199, %203 : vector<2x32xf32>
    %205 = tpu.concatenate %204, %113 in 1 : vector<2x32xf32>, vector<2x32xf32> -> vector<2x64xf32>
    %cst_73 = arith.constant dense<0.000000e+00> : vector<2x128xf32>
    %206 = tpu.matmul %205, %7, %cst_73 {dimension_numbers = #tpu.dot_dimension_numbers<[1], [0], [0], [1], [0, 0, 1, 1], [], []>} : vector<2x64xf32>, vector<64x128xf32>, vector<2x128xf32> -> vector<2x128xf32>
    %207 = vector.broadcast %8 : vector<1x128xf32> to vector<2x128xf32>
    %208 = arith.addf %206, %207 : vector<2x128xf32>
    %209 = vector.extract_strided_slice %208 {offsets = [0, 0], sizes = [2, 32], strides = [1, 1]} : vector<2x128xf32> to vector<2x32xf32>
    %210 = arith.negf %209 : vector<2x32xf32>
    %211 = math.exp %210 : vector<2x32xf32>
    %cst_74 = arith.constant 1.000000e+00 : f32
    %212 = vector.broadcast %cst_74 : f32 to vector<2x32xf32>
    %213 = arith.addf %212, %211 : vector<2x32xf32>
    %214 = arith.divf %212, %213 : vector<2x32xf32>
    %215 = vector.extract_strided_slice %208 {offsets = [0, 32], sizes = [2, 32], strides = [1, 1]} : vector<2x128xf32> to vector<2x32xf32>
    %216 = arith.negf %215 : vector<2x32xf32>
    %217 = math.exp %216 : vector<2x32xf32>
    %cst_75 = arith.constant 1.000000e+00 : f32
    %218 = vector.broadcast %cst_75 : f32 to vector<2x32xf32>
    %219 = arith.addf %218, %217 : vector<2x32xf32>
    %220 = arith.divf %218, %219 : vector<2x32xf32>
    %221 = vector.extract_strided_slice %208 {offsets = [0, 64], sizes = [2, 32], strides = [1, 1]} : vector<2x128xf32> to vector<2x32xf32>
    %222 = math.tanh %221 : vector<2x32xf32>
    %223 = vector.extract_strided_slice %208 {offsets = [0, 96], sizes = [2, 32], strides = [1, 1]} : vector<2x128xf32> to vector<2x32xf32>
    %224 = arith.negf %223 : vector<2x32xf32>
    %225 = math.exp %224 : vector<2x32xf32>
    %cst_76 = arith.constant 1.000000e+00 : f32
    %226 = vector.broadcast %cst_76 : f32 to vector<2x32xf32>
    %227 = arith.addf %226, %225 : vector<2x32xf32>
    %228 = arith.divf %226, %227 : vector<2x32xf32>
    %229 = arith.mulf %220, %111 : vector<2x32xf32>
    %230 = arith.mulf %214, %222 : vector<2x32xf32>
    %231 = arith.addf %229, %230 : vector<2x32xf32>
    %232 = math.tanh %231 : vector<2x32xf32>
    %233 = arith.mulf %228, %232 : vector<2x32xf32>
    %234 = tpu.concatenate %175, %233 in 1 : vector<2x64xf32>, vector<2x32xf32> -> vector<2x96xf32>
    %cst_77 = arith.constant dense<0.000000e+00> : vector<2x128xf32>
    %235 = tpu.matmul %234, %9, %cst_77 {dimension_numbers = #tpu.dot_dimension_numbers<[1], [0], [0], [1], [0, 0, 1, 1], [], []>} : vector<2x96xf32>, vector<96x128xf32>, vector<2x128xf32> -> vector<2x128xf32>
    %236 = vector.broadcast %10 : vector<1x128xf32> to vector<2x128xf32>
    %237 = arith.addf %235, %236 : vector<2x128xf32>
    %c1_78 = arith.constant 1 : index
    %c0_79 = arith.constant 0 : index
    %c0_80 = arith.constant 0 : index
    %238 = vector.load %arg15[%c1_78, %c0_79, %c0_80] : memref<5x2x128xf32, #tpu.memory_space<vmem>>, vector<1x2x128xf32>
    %239 = vector.shape_cast %238 : vector<1x2x128xf32> to vector<2x128xf32>
    %240 = vector.shape_cast %237 : vector<2x128xf32> to vector<1x2x128xf32>
    tpu.vector_store %arg15[%c1_78, %c0_79, %c0_80], %240 {strides = array<i32>} : memref<5x2x128xf32, #tpu.memory_space<vmem>>, vector<1x2x128xf32>,
    %cst_81 = arith.constant dense<0xFF800000> : vector<2xf32>
    %241 = vector.multi_reduction <maximumf>, %237, %cst_81 [1] : vector<2x128xf32> to vector<2xf32>
    %242 = vector.shape_cast %241 : vector<2xf32> to vector<2x1xf32>
    %243 = vector.broadcast %242 : vector<2x1xf32> to vector<2x128xf32>
    %244 = arith.cmpf oeq, %237, %243 : vector<2x128xf32>
    %c128_i32_82 = arith.constant 128 : i32
    %245 = vector.broadcast %c128_i32_82 : i32 to vector<2x128xi32>
    %246 = arith.select %244, %12, %245 : vector<2x128xi1>, vector<2x128xi32>
    %cst_83 = arith.constant dense<2147483647> : vector<2xi32>
    %247 = vector.multi_reduction <minsi>, %246, %cst_83 [1] : vector<2x128xi32> to vector<2xi32>
    %248 = vector.shape_cast %247 : vector<2xi32> to vector<2x1xi32>
    %249 = vector.broadcast %248 : vector<2x1xi32> to vector<2x128xi32>
    %250 = arith.cmpi eq, %12, %249 : vector<2x128xi32>
    %251 = arith.extui %250 : vector<2x128xi1> to vector<2x128xi32>
    %252 = arith.sitofp %251 : vector<2x128xi32> to vector<2x128xf32>
    %c1_84 = arith.constant 1 : index
    %253 = memref.load %arg1[%c1_84] : memref<5xi32, #tpu.memory_space<smem>>
    %254 = arith.sitofp %253 : i32 to f32
    %c2 = arith.constant 2 : index
    %c0_85 = arith.constant 0 : index
    %255 = memref.load %arg0[%c2, %c0_85] : memref<6x2xi32, #tpu.memory_space<smem>>
    %256 = vector.broadcast %255 : i32 to vector<1x128xi32>
    %257 = arith.cmpi eq, %11, %256 : vector<1x128xi32>
    %258 = arith.extui %257 : vector<1x128xi1> to vector<1x128xi32>
    %259 = arith.sitofp %258 : vector<1x128xi32> to vector<1x128xf32>
    %c2_86 = arith.constant 2 : index
    %c1_87 = arith.constant 1 : index
    %260 = memref.load %arg0[%c2_86, %c1_87] : memref<6x2xi32, #tpu.memory_space<smem>>
    %261 = vector.broadcast %260 : i32 to vector<1x128xi32>
    %262 = arith.cmpi eq, %11, %261 : vector<1x128xi32>
    %263 = arith.extui %262 : vector<1x128xi1> to vector<1x128xi32>
    %264 = arith.sitofp %263 : vector<1x128xi32> to vector<1x128xf32>
    %265 = tpu.concatenate %259, %264 in 0 : vector<1x128xf32>, vector<1x128xf32> -> vector<2x128xf32>
    %266 = vector.broadcast %254 : f32 to vector<2x128xf32>
    %267 = arith.mulf %266, %265 : vector<2x128xf32>
    %cst_88 = arith.constant 1.000000e+00 : f32
    %268 = arith.subf %cst_88, %254 : f32
    %269 = vector.broadcast %268 : f32 to vector<2x128xf32>
    %270 = arith.mulf %269, %252 : vector<2x128xf32>
    %271 = arith.addf %267, %270 : vector<2x128xf32>
    %cst_89 = arith.constant dense<0.000000e+00> : vector<2x32xf32>
    %272 = tpu.matmul %271, %4, %cst_89 {dimension_numbers = #tpu.dot_dimension_numbers<[1], [0], [0], [1], [0, 0, 1, 1], [], []>} : vector<2x128xf32>, vector<128x32xf32>, vector<2x32xf32> -> vector<2x32xf32>
    %cst_90 = arith.constant dense<0.000000e+00> : vector<2x32xf32>
    %273 = tpu.matmul %233, %2, %cst_90 {dimension_numbers = #tpu.dot_dimension_numbers<[1], [0], [0], [1], [0, 0, 1, 1], [], []>} : vector<2x32xf32>, vector<32x32xf32>, vector<2x32xf32> -> vector<2x32xf32>
    %274 = vector.shape_cast %273 : vector<2x32xf32> to vector<2x1x32xf32>
    %275 = vector.broadcast %274 : vector<2x1x32xf32> to vector<2x8x32xf32>
    %276 = arith.addf %275, %1 : vector<2x8x32xf32>
    %277 = math.tanh %276 : vector<2x8x32xf32>
    %278 = vector.shape_cast %3 : vector<1x32xf32> to vector<1x1x32xf32>
    %279 = vector.broadcast %278 : vector<1x1x32xf32> to vector<2x8x32xf32>
    %280 = arith.mulf %277, %279 : vector<2x8x32xf32>
    %cst_91 = arith.constant dense<0.000000e+00> : vector<2x8xf32>
    %281 = vector.multi_reduction <add>, %280, %cst_91 [2] : vector<2x8x32xf32> to vector<2x8xf32>
    %cst_92 = arith.constant dense<0xFF800000> : vector<2xf32>
    %282 = vector.multi_reduction <maximumf>, %281, %cst_92 [1] : vector<2x8xf32> to vector<2xf32>
    %283 = vector.shape_cast %282 : vector<2xf32> to vector<2x1xf32>
    %284 = vector.broadcast %283 : vector<2x1xf32> to vector<2x8xf32>
    %285 = arith.subf %281, %284 : vector<2x8xf32>
    %286 = math.exp %285 : vector<2x8xf32>
    %cst_93 = arith.constant dense<0.000000e+00> : vector<2xf32>
    %287 = vector.multi_reduction <add>, %286, %cst_93 [1] : vector<2x8xf32> to vector<2xf32>
    %288 = vector.shape_cast %287 : vector<2xf32> to vector<2x1xf32>
    %289 = tpu.reciprocal %288 {approx = true} : vector<2x1xf32> -> vector<2x1xf32>
    %290 = vector.broadcast %289 : vector<2x1xf32> to vector<2x8xf32>
    %291 = arith.mulf %286, %290 : vector<2x8xf32>
    %292 = vector.shape_cast %291 : vector<2x8xf32> to vector<2x1x8xf32>
    "tpu.trace_start"() <{level = 10 : i32, message = "bqs,bsh->bqh"}> : () -> ()
    %cst_94 = arith.constant dense<0.000000e+00> : vector<2x1x32xf32>
    %293 = tpu.matmul %292, %0, %cst_94 {dimension_numbers = #tpu.dot_dimension_numbers<[2], [1], [1], [2], [0, 0, 0, 1, 1, 2], [0], [0]>} : vector<2x1x8xf32>, vector<2x8x32xf32>, vector<2x1x32xf32> -> vector<2x1x32xf32>
    "tpu.trace_stop"() : () -> ()
    %294 = vector.shape_cast %293 : vector<2x1x32xf32> to vector<2x32xf32>
    %295 = tpu.concatenate %272, %294 in 1 : vector<2x32xf32>, vector<2x32xf32> -> vector<2x64xf32>
    %296 = tpu.concatenate %295, %204 in 1 : vector<2x64xf32>, vector<2x32xf32> -> vector<2x96xf32>
    %cst_95 = arith.constant dense<0.000000e+00> : vector<2x128xf32>
    %297 = tpu.matmul %296, %5, %cst_95 {dimension_numbers = #tpu.dot_dimension_numbers<[1], [0], [0], [1], [0, 0, 1, 1], [], []>} : vector<2x96xf32>, vector<96x128xf32>, vector<2x128xf32> -> vector<2x128xf32>
    %298 = vector.broadcast %6 : vector<1x128xf32> to vector<2x128xf32>
    %299 = arith.addf %297, %298 : vector<2x128xf32>
    %300 = vector.extract_strided_slice %299 {offsets = [0, 0], sizes = [2, 32], strides = [1, 1]} : vector<2x128xf32> to vector<2x32xf32>
    %301 = arith.negf %300 : vector<2x32xf32>
    %302 = math.exp %301 : vector<2x32xf32>
    %cst_96 = arith.constant 1.000000e+00 : f32
    %303 = vector.broadcast %cst_96 : f32 to vector<2x32xf32>
    %304 = arith.addf %303, %302 : vector<2x32xf32>
    %305 = arith.divf %303, %304 : vector<2x32xf32>
    %306 = vector.extract_strided_slice %299 {offsets = [0, 32], sizes = [2, 32], strides = [1, 1]} : vector<2x128xf32> to vector<2x32xf32>
    %307 = arith.negf %306 : vector<2x32xf32>
    %308 = math.exp %307 : vector<2x32xf32>
    %cst_97 = arith.constant 1.000000e+00 : f32
    %309 = vector.broadcast %cst_97 : f32 to vector<2x32xf32>
    %310 = arith.addf %309, %308 : vector<2x32xf32>
    %311 = arith.divf %309, %310 : vector<2x32xf32>
    %312 = vector.extract_strided_slice %299 {offsets = [0, 64], sizes = [2, 32], strides = [1, 1]} : vector<2x128xf32> to vector<2x32xf32>
    %313 = math.tanh %312 : vector<2x32xf32>
    %314 = vector.extract_strided_slice %299 {offsets = [0, 96], sizes = [2, 32], strides = [1, 1]} : vector<2x128xf32> to vector<2x32xf32>
    %315 = arith.negf %314 : vector<2x32xf32>
    %316 = math.exp %315 : vector<2x32xf32>
    %cst_98 = arith.constant 1.000000e+00 : f32
    %317 = vector.broadcast %cst_98 : f32 to vector<2x32xf32>
    %318 = arith.addf %317, %316 : vector<2x32xf32>
    %319 = arith.divf %317, %318 : vector<2x32xf32>
    %320 = arith.mulf %311, %202 : vector<2x32xf32>
    %321 = arith.mulf %305, %313 : vector<2x32xf32>
    %322 = arith.addf %320, %321 : vector<2x32xf32>
    %323 = math.tanh %322 : vector<2x32xf32>
    %324 = arith.mulf %319, %323 : vector<2x32xf32>
    %325 = tpu.concatenate %324, %233 in 1 : vector<2x32xf32>, vector<2x32xf32> -> vector<2x64xf32>
    %cst_99 = arith.constant dense<0.000000e+00> : vector<2x128xf32>
    %326 = tpu.matmul %325, %7, %cst_99 {dimension_numbers = #tpu.dot_dimension_numbers<[1], [0], [0], [1], [0, 0, 1, 1], [], []>} : vector<2x64xf32>, vector<64x128xf32>, vector<2x128xf32> -> vector<2x128xf32>
    %327 = vector.broadcast %8 : vector<1x128xf32> to vector<2x128xf32>
    %328 = arith.addf %326, %327 : vector<2x128xf32>
    %329 = vector.extract_strided_slice %328 {offsets = [0, 0], sizes = [2, 32], strides = [1, 1]} : vector<2x128xf32> to vector<2x32xf32>
    %330 = arith.negf %329 : vector<2x32xf32>
    %331 = math.exp %330 : vector<2x32xf32>
    %cst_100 = arith.constant 1.000000e+00 : f32
    %332 = vector.broadcast %cst_100 : f32 to vector<2x32xf32>
    %333 = arith.addf %332, %331 : vector<2x32xf32>
    %334 = arith.divf %332, %333 : vector<2x32xf32>
    %335 = vector.extract_strided_slice %328 {offsets = [0, 32], sizes = [2, 32], strides = [1, 1]} : vector<2x128xf32> to vector<2x32xf32>
    %336 = arith.negf %335 : vector<2x32xf32>
    %337 = math.exp %336 : vector<2x32xf32>
    %cst_101 = arith.constant 1.000000e+00 : f32
    %338 = vector.broadcast %cst_101 : f32 to vector<2x32xf32>
    %339 = arith.addf %338, %337 : vector<2x32xf32>
    %340 = arith.divf %338, %339 : vector<2x32xf32>
    %341 = vector.extract_strided_slice %328 {offsets = [0, 64], sizes = [2, 32], strides = [1, 1]} : vector<2x128xf32> to vector<2x32xf32>
    %342 = math.tanh %341 : vector<2x32xf32>
    %343 = vector.extract_strided_slice %328 {offsets = [0, 96], sizes = [2, 32], strides = [1, 1]} : vector<2x128xf32> to vector<2x32xf32>
    %344 = arith.negf %343 : vector<2x32xf32>
    %345 = math.exp %344 : vector<2x32xf32>
    %cst_102 = arith.constant 1.000000e+00 : f32
    %346 = vector.broadcast %cst_102 : f32 to vector<2x32xf32>
    %347 = arith.addf %346, %345 : vector<2x32xf32>
    %348 = arith.divf %346, %347 : vector<2x32xf32>
    %349 = arith.mulf %340, %231 : vector<2x32xf32>
    %350 = arith.mulf %334, %342 : vector<2x32xf32>
    %351 = arith.addf %349, %350 : vector<2x32xf32>
    %352 = math.tanh %351 : vector<2x32xf32>
    %353 = arith.mulf %348, %352 : vector<2x32xf32>
    %354 = tpu.concatenate %295, %353 in 1 : vector<2x64xf32>, vector<2x32xf32> -> vector<2x96xf32>
    %cst_103 = arith.constant dense<0.000000e+00> : vector<2x128xf32>
    %355 = tpu.matmul %354, %9, %cst_103 {dimension_numbers = #tpu.dot_dimension_numbers<[1], [0], [0], [1], [0, 0, 1, 1], [], []>} : vector<2x96xf32>, vector<96x128xf32>, vector<2x128xf32> -> vector<2x128xf32>
    %356 = vector.broadcast %10 : vector<1x128xf32> to vector<2x128xf32>
    %357 = arith.addf %355, %356 : vector<2x128xf32>
    %c2_104 = arith.constant 2 : index
    %c0_105 = arith.constant 0 : index
    %c0_106 = arith.constant 0 : index
    %358 = vector.load %arg15[%c2_104, %c0_105, %c0_106] : memref<5x2x128xf32, #tpu.memory_space<vmem>>, vector<1x2x128xf32>
    %359 = vector.shape_cast %358 : vector<1x2x128xf32> to vector<2x128xf32>
    %360 = vector.shape_cast %357 : vector<2x128xf32> to vector<1x2x128xf32>
    tpu.vector_store %arg15[%c2_104, %c0_105, %c0_106], %360 {strides = array<i32>} : memref<5x2x128xf32, #tpu.memory_space<vmem>>, vector<1x2x128xf32>,
    %cst_107 = arith.constant dense<0xFF800000> : vector<2xf32>
    %361 = vector.multi_reduction <maximumf>, %357, %cst_107 [1] : vector<2x128xf32> to vector<2xf32>
    %362 = vector.shape_cast %361 : vector<2xf32> to vector<2x1xf32>
    %363 = vector.broadcast %362 : vector<2x1xf32> to vector<2x128xf32>
    %364 = arith.cmpf oeq, %357, %363 : vector<2x128xf32>
    %c128_i32_108 = arith.constant 128 : i32
    %365 = vector.broadcast %c128_i32_108 : i32 to vector<2x128xi32>
    %366 = arith.select %364, %12, %365 : vector<2x128xi1>, vector<2x128xi32>
    %cst_109 = arith.constant dense<2147483647> : vector<2xi32>
    %367 = vector.multi_reduction <minsi>, %366, %cst_109 [1] : vector<2x128xi32> to vector<2xi32>
    %368 = vector.shape_cast %367 : vector<2xi32> to vector<2x1xi32>
    %369 = vector.broadcast %368 : vector<2x1xi32> to vector<2x128xi32>
    %370 = arith.cmpi eq, %12, %369 : vector<2x128xi32>
    %371 = arith.extui %370 : vector<2x128xi1> to vector<2x128xi32>
    %372 = arith.sitofp %371 : vector<2x128xi32> to vector<2x128xf32>
    %c2_110 = arith.constant 2 : index
    %373 = memref.load %arg1[%c2_110] : memref<5xi32, #tpu.memory_space<smem>>
    %374 = arith.sitofp %373 : i32 to f32
    %c3 = arith.constant 3 : index
    %c0_111 = arith.constant 0 : index
    %375 = memref.load %arg0[%c3, %c0_111] : memref<6x2xi32, #tpu.memory_space<smem>>
    %376 = vector.broadcast %375 : i32 to vector<1x128xi32>
    %377 = arith.cmpi eq, %11, %376 : vector<1x128xi32>
    %378 = arith.extui %377 : vector<1x128xi1> to vector<1x128xi32>
    %379 = arith.sitofp %378 : vector<1x128xi32> to vector<1x128xf32>
    %c3_112 = arith.constant 3 : index
    %c1_113 = arith.constant 1 : index
    %380 = memref.load %arg0[%c3_112, %c1_113] : memref<6x2xi32, #tpu.memory_space<smem>>
    %381 = vector.broadcast %380 : i32 to vector<1x128xi32>
    %382 = arith.cmpi eq, %11, %381 : vector<1x128xi32>
    %383 = arith.extui %382 : vector<1x128xi1> to vector<1x128xi32>
    %384 = arith.sitofp %383 : vector<1x128xi32> to vector<1x128xf32>
    %385 = tpu.concatenate %379, %384 in 0 : vector<1x128xf32>, vector<1x128xf32> -> vector<2x128xf32>
    %386 = vector.broadcast %374 : f32 to vector<2x128xf32>
    %387 = arith.mulf %386, %385 : vector<2x128xf32>
    %cst_114 = arith.constant 1.000000e+00 : f32
    %388 = arith.subf %cst_114, %374 : f32
    %389 = vector.broadcast %388 : f32 to vector<2x128xf32>
    %390 = arith.mulf %389, %372 : vector<2x128xf32>
    %391 = arith.addf %387, %390 : vector<2x128xf32>
    %cst_115 = arith.constant dense<0.000000e+00> : vector<2x32xf32>
    %392 = tpu.matmul %391, %4, %cst_115 {dimension_numbers = #tpu.dot_dimension_numbers<[1], [0], [0], [1], [0, 0, 1, 1], [], []>} : vector<2x128xf32>, vector<128x32xf32>, vector<2x32xf32> -> vector<2x32xf32>
    %cst_116 = arith.constant dense<0.000000e+00> : vector<2x32xf32>
    %393 = tpu.matmul %353, %2, %cst_116 {dimension_numbers = #tpu.dot_dimension_numbers<[1], [0], [0], [1], [0, 0, 1, 1], [], []>} : vector<2x32xf32>, vector<32x32xf32>, vector<2x32xf32> -> vector<2x32xf32>
    %394 = vector.shape_cast %393 : vector<2x32xf32> to vector<2x1x32xf32>
    %395 = vector.broadcast %394 : vector<2x1x32xf32> to vector<2x8x32xf32>
    %396 = arith.addf %395, %1 : vector<2x8x32xf32>
    %397 = math.tanh %396 : vector<2x8x32xf32>
    %398 = vector.shape_cast %3 : vector<1x32xf32> to vector<1x1x32xf32>
    %399 = vector.broadcast %398 : vector<1x1x32xf32> to vector<2x8x32xf32>
    %400 = arith.mulf %397, %399 : vector<2x8x32xf32>
    %cst_117 = arith.constant dense<0.000000e+00> : vector<2x8xf32>
    %401 = vector.multi_reduction <add>, %400, %cst_117 [2] : vector<2x8x32xf32> to vector<2x8xf32>
    %cst_118 = arith.constant dense<0xFF800000> : vector<2xf32>
    %402 = vector.multi_reduction <maximumf>, %401, %cst_118 [1] : vector<2x8xf32> to vector<2xf32>
    %403 = vector.shape_cast %402 : vector<2xf32> to vector<2x1xf32>
    %404 = vector.broadcast %403 : vector<2x1xf32> to vector<2x8xf32>
    %405 = arith.subf %401, %404 : vector<2x8xf32>
    %406 = math.exp %405 : vector<2x8xf32>
    %cst_119 = arith.constant dense<0.000000e+00> : vector<2xf32>
    %407 = vector.multi_reduction <add>, %406, %cst_119 [1] : vector<2x8xf32> to vector<2xf32>
    %408 = vector.shape_cast %407 : vector<2xf32> to vector<2x1xf32>
    %409 = tpu.reciprocal %408 {approx = true} : vector<2x1xf32> -> vector<2x1xf32>
    %410 = vector.broadcast %409 : vector<2x1xf32> to vector<2x8xf32>
    %411 = arith.mulf %406, %410 : vector<2x8xf32>
    %412 = vector.shape_cast %411 : vector<2x8xf32> to vector<2x1x8xf32>
    "tpu.trace_start"() <{level = 10 : i32, message = "bqs,bsh->bqh"}> : () -> ()
    %cst_120 = arith.constant dense<0.000000e+00> : vector<2x1x32xf32>
    %413 = tpu.matmul %412, %0, %cst_120 {dimension_numbers = #tpu.dot_dimension_numbers<[2], [1], [1], [2], [0, 0, 0, 1, 1, 2], [0], [0]>} : vector<2x1x8xf32>, vector<2x8x32xf32>, vector<2x1x32xf32> -> vector<2x1x32xf32>
    "tpu.trace_stop"() : () -> ()
    %414 = vector.shape_cast %413 : vector<2x1x32xf32> to vector<2x32xf32>
    %415 = tpu.concatenate %392, %414 in 1 : vector<2x32xf32>, vector<2x32xf32> -> vector<2x64xf32>
    %416 = tpu.concatenate %415, %324 in 1 : vector<2x64xf32>, vector<2x32xf32> -> vector<2x96xf32>
    %cst_121 = arith.constant dense<0.000000e+00> : vector<2x128xf32>
    %417 = tpu.matmul %416, %5, %cst_121 {dimension_numbers = #tpu.dot_dimension_numbers<[1], [0], [0], [1], [0, 0, 1, 1], [], []>} : vector<2x96xf32>, vector<96x128xf32>, vector<2x128xf32> -> vector<2x128xf32>
    %418 = vector.broadcast %6 : vector<1x128xf32> to vector<2x128xf32>
    %419 = arith.addf %417, %418 : vector<2x128xf32>
    %420 = vector.extract_strided_slice %419 {offsets = [0, 0], sizes = [2, 32], strides = [1, 1]} : vector<2x128xf32> to vector<2x32xf32>
    %421 = arith.negf %420 : vector<2x32xf32>
    %422 = math.exp %421 : vector<2x32xf32>
    %cst_122 = arith.constant 1.000000e+00 : f32
    %423 = vector.broadcast %cst_122 : f32 to vector<2x32xf32>
    %424 = arith.addf %423, %422 : vector<2x32xf32>
    %425 = arith.divf %423, %424 : vector<2x32xf32>
    %426 = vector.extract_strided_slice %419 {offsets = [0, 32], sizes = [2, 32], strides = [1, 1]} : vector<2x128xf32> to vector<2x32xf32>
    %427 = arith.negf %426 : vector<2x32xf32>
    %428 = math.exp %427 : vector<2x32xf32>
    %cst_123 = arith.constant 1.000000e+00 : f32
    %429 = vector.broadcast %cst_123 : f32 to vector<2x32xf32>
    %430 = arith.addf %429, %428 : vector<2x32xf32>
    %431 = arith.divf %429, %430 : vector<2x32xf32>
    %432 = vector.extract_strided_slice %419 {offsets = [0, 64], sizes = [2, 32], strides = [1, 1]} : vector<2x128xf32> to vector<2x32xf32>
    %433 = math.tanh %432 : vector<2x32xf32>
    %434 = vector.extract_strided_slice %419 {offsets = [0, 96], sizes = [2, 32], strides = [1, 1]} : vector<2x128xf32> to vector<2x32xf32>
    %435 = arith.negf %434 : vector<2x32xf32>
    %436 = math.exp %435 : vector<2x32xf32>
    %cst_124 = arith.constant 1.000000e+00 : f32
    %437 = vector.broadcast %cst_124 : f32 to vector<2x32xf32>
    %438 = arith.addf %437, %436 : vector<2x32xf32>
    %439 = arith.divf %437, %438 : vector<2x32xf32>
    %440 = arith.mulf %431, %322 : vector<2x32xf32>
    %441 = arith.mulf %425, %433 : vector<2x32xf32>
    %442 = arith.addf %440, %441 : vector<2x32xf32>
    %443 = math.tanh %442 : vector<2x32xf32>
    %444 = arith.mulf %439, %443 : vector<2x32xf32>
    %445 = tpu.concatenate %444, %353 in 1 : vector<2x32xf32>, vector<2x32xf32> -> vector<2x64xf32>
    %cst_125 = arith.constant dense<0.000000e+00> : vector<2x128xf32>
    %446 = tpu.matmul %445, %7, %cst_125 {dimension_numbers = #tpu.dot_dimension_numbers<[1], [0], [0], [1], [0, 0, 1, 1], [], []>} : vector<2x64xf32>, vector<64x128xf32>, vector<2x128xf32> -> vector<2x128xf32>
    %447 = vector.broadcast %8 : vector<1x128xf32> to vector<2x128xf32>
    %448 = arith.addf %446, %447 : vector<2x128xf32>
    %449 = vector.extract_strided_slice %448 {offsets = [0, 0], sizes = [2, 32], strides = [1, 1]} : vector<2x128xf32> to vector<2x32xf32>
    %450 = arith.negf %449 : vector<2x32xf32>
    %451 = math.exp %450 : vector<2x32xf32>
    %cst_126 = arith.constant 1.000000e+00 : f32
    %452 = vector.broadcast %cst_126 : f32 to vector<2x32xf32>
    %453 = arith.addf %452, %451 : vector<2x32xf32>
    %454 = arith.divf %452, %453 : vector<2x32xf32>
    %455 = vector.extract_strided_slice %448 {offsets = [0, 32], sizes = [2, 32], strides = [1, 1]} : vector<2x128xf32> to vector<2x32xf32>
    %456 = arith.negf %455 : vector<2x32xf32>
    %457 = math.exp %456 : vector<2x32xf32>
    %cst_127 = arith.constant 1.000000e+00 : f32
    %458 = vector.broadcast %cst_127 : f32 to vector<2x32xf32>
    %459 = arith.addf %458, %457 : vector<2x32xf32>
    %460 = arith.divf %458, %459 : vector<2x32xf32>
    %461 = vector.extract_strided_slice %448 {offsets = [0, 64], sizes = [2, 32], strides = [1, 1]} : vector<2x128xf32> to vector<2x32xf32>
    %462 = math.tanh %461 : vector<2x32xf32>
    %463 = vector.extract_strided_slice %448 {offsets = [0, 96], sizes = [2, 32], strides = [1, 1]} : vector<2x128xf32> to vector<2x32xf32>
    %464 = arith.negf %463 : vector<2x32xf32>
    %465 = math.exp %464 : vector<2x32xf32>
    %cst_128 = arith.constant 1.000000e+00 : f32
    %466 = vector.broadcast %cst_128 : f32 to vector<2x32xf32>
    %467 = arith.addf %466, %465 : vector<2x32xf32>
    %468 = arith.divf %466, %467 : vector<2x32xf32>
    %469 = arith.mulf %460, %351 : vector<2x32xf32>
    %470 = arith.mulf %454, %462 : vector<2x32xf32>
    %471 = arith.addf %469, %470 : vector<2x32xf32>
    %472 = math.tanh %471 : vector<2x32xf32>
    %473 = arith.mulf %468, %472 : vector<2x32xf32>
    %474 = tpu.concatenate %415, %473 in 1 : vector<2x64xf32>, vector<2x32xf32> -> vector<2x96xf32>
    %cst_129 = arith.constant dense<0.000000e+00> : vector<2x128xf32>
    %475 = tpu.matmul %474, %9, %cst_129 {dimension_numbers = #tpu.dot_dimension_numbers<[1], [0], [0], [1], [0, 0, 1, 1], [], []>} : vector<2x96xf32>, vector<96x128xf32>, vector<2x128xf32> -> vector<2x128xf32>
    %476 = vector.broadcast %10 : vector<1x128xf32> to vector<2x128xf32>
    %477 = arith.addf %475, %476 : vector<2x128xf32>
    %c3_130 = arith.constant 3 : index
    %c0_131 = arith.constant 0 : index
    %c0_132 = arith.constant 0 : index
    %478 = vector.load %arg15[%c3_130, %c0_131, %c0_132] : memref<5x2x128xf32, #tpu.memory_space<vmem>>, vector<1x2x128xf32>
    %479 = vector.shape_cast %478 : vector<1x2x128xf32> to vector<2x128xf32>
    %480 = vector.shape_cast %477 : vector<2x128xf32> to vector<1x2x128xf32>
    tpu.vector_store %arg15[%c3_130, %c0_131, %c0_132], %480 {strides = array<i32>} : memref<5x2x128xf32, #tpu.memory_space<vmem>>, vector<1x2x128xf32>,
    %cst_133 = arith.constant dense<0xFF800000> : vector<2xf32>
    %481 = vector.multi_reduction <maximumf>, %477, %cst_133 [1] : vector<2x128xf32> to vector<2xf32>
    %482 = vector.shape_cast %481 : vector<2xf32> to vector<2x1xf32>
    %483 = vector.broadcast %482 : vector<2x1xf32> to vector<2x128xf32>
    %484 = arith.cmpf oeq, %477, %483 : vector<2x128xf32>
    %c128_i32_134 = arith.constant 128 : i32
    %485 = vector.broadcast %c128_i32_134 : i32 to vector<2x128xi32>
    %486 = arith.select %484, %12, %485 : vector<2x128xi1>, vector<2x128xi32>
    %cst_135 = arith.constant dense<2147483647> : vector<2xi32>
    %487 = vector.multi_reduction <minsi>, %486, %cst_135 [1] : vector<2x128xi32> to vector<2xi32>
    %488 = vector.shape_cast %487 : vector<2xi32> to vector<2x1xi32>
    %489 = vector.broadcast %488 : vector<2x1xi32> to vector<2x128xi32>
    %490 = arith.cmpi eq, %12, %489 : vector<2x128xi32>
    %491 = arith.extui %490 : vector<2x128xi1> to vector<2x128xi32>
    %492 = arith.sitofp %491 : vector<2x128xi32> to vector<2x128xf32>
    %c3_136 = arith.constant 3 : index
    %493 = memref.load %arg1[%c3_136] : memref<5xi32, #tpu.memory_space<smem>>
    %494 = arith.sitofp %493 : i32 to f32
    %c4 = arith.constant 4 : index
    %c0_137 = arith.constant 0 : index
    %495 = memref.load %arg0[%c4, %c0_137] : memref<6x2xi32, #tpu.memory_space<smem>>
    %496 = vector.broadcast %495 : i32 to vector<1x128xi32>
    %497 = arith.cmpi eq, %11, %496 : vector<1x128xi32>
    %498 = arith.extui %497 : vector<1x128xi1> to vector<1x128xi32>
    %499 = arith.sitofp %498 : vector<1x128xi32> to vector<1x128xf32>
    %c4_138 = arith.constant 4 : index
    %c1_139 = arith.constant 1 : index
    %500 = memref.load %arg0[%c4_138, %c1_139] : memref<6x2xi32, #tpu.memory_space<smem>>
    %501 = vector.broadcast %500 : i32 to vector<1x128xi32>
    %502 = arith.cmpi eq, %11, %501 : vector<1x128xi32>
    %503 = arith.extui %502 : vector<1x128xi1> to vector<1x128xi32>
    %504 = arith.sitofp %503 : vector<1x128xi32> to vector<1x128xf32>
    %505 = tpu.concatenate %499, %504 in 0 : vector<1x128xf32>, vector<1x128xf32> -> vector<2x128xf32>
    %506 = vector.broadcast %494 : f32 to vector<2x128xf32>
    %507 = arith.mulf %506, %505 : vector<2x128xf32>
    %cst_140 = arith.constant 1.000000e+00 : f32
    %508 = arith.subf %cst_140, %494 : f32
    %509 = vector.broadcast %508 : f32 to vector<2x128xf32>
    %510 = arith.mulf %509, %492 : vector<2x128xf32>
    %511 = arith.addf %507, %510 : vector<2x128xf32>
    %cst_141 = arith.constant dense<0.000000e+00> : vector<2x32xf32>
    %512 = tpu.matmul %511, %4, %cst_141 {dimension_numbers = #tpu.dot_dimension_numbers<[1], [0], [0], [1], [0, 0, 1, 1], [], []>} : vector<2x128xf32>, vector<128x32xf32>, vector<2x32xf32> -> vector<2x32xf32>
    %cst_142 = arith.constant dense<0.000000e+00> : vector<2x32xf32>
    %513 = tpu.matmul %473, %2, %cst_142 {dimension_numbers = #tpu.dot_dimension_numbers<[1], [0], [0], [1], [0, 0, 1, 1], [], []>} : vector<2x32xf32>, vector<32x32xf32>, vector<2x32xf32> -> vector<2x32xf32>
    %514 = vector.shape_cast %513 : vector<2x32xf32> to vector<2x1x32xf32>
    %515 = vector.broadcast %514 : vector<2x1x32xf32> to vector<2x8x32xf32>
    %516 = arith.addf %515, %1 : vector<2x8x32xf32>
    %517 = math.tanh %516 : vector<2x8x32xf32>
    %518 = vector.shape_cast %3 : vector<1x32xf32> to vector<1x1x32xf32>
    %519 = vector.broadcast %518 : vector<1x1x32xf32> to vector<2x8x32xf32>
    %520 = arith.mulf %517, %519 : vector<2x8x32xf32>
    %cst_143 = arith.constant dense<0.000000e+00> : vector<2x8xf32>
    %521 = vector.multi_reduction <add>, %520, %cst_143 [2] : vector<2x8x32xf32> to vector<2x8xf32>
    %cst_144 = arith.constant dense<0xFF800000> : vector<2xf32>
    %522 = vector.multi_reduction <maximumf>, %521, %cst_144 [1] : vector<2x8xf32> to vector<2xf32>
    %523 = vector.shape_cast %522 : vector<2xf32> to vector<2x1xf32>
    %524 = vector.broadcast %523 : vector<2x1xf32> to vector<2x8xf32>
    %525 = arith.subf %521, %524 : vector<2x8xf32>
    %526 = math.exp %525 : vector<2x8xf32>
    %cst_145 = arith.constant dense<0.000000e+00> : vector<2xf32>
    %527 = vector.multi_reduction <add>, %526, %cst_145 [1] : vector<2x8xf32> to vector<2xf32>
    %528 = vector.shape_cast %527 : vector<2xf32> to vector<2x1xf32>
    %529 = tpu.reciprocal %528 {approx = true} : vector<2x1xf32> -> vector<2x1xf32>
    %530 = vector.broadcast %529 : vector<2x1xf32> to vector<2x8xf32>
    %531 = arith.mulf %526, %530 : vector<2x8xf32>
    %532 = vector.shape_cast %531 : vector<2x8xf32> to vector<2x1x8xf32>
    "tpu.trace_start"() <{level = 10 : i32, message = "bqs,bsh->bqh"}> : () -> ()
    %cst_146 = arith.constant dense<0.000000e+00> : vector<2x1x32xf32>
    %533 = tpu.matmul %532, %0, %cst_146 {dimension_numbers = #tpu.dot_dimension_numbers<[2], [1], [1], [2], [0, 0, 0, 1, 1, 2], [0], [0]>} : vector<2x1x8xf32>, vector<2x8x32xf32>, vector<2x1x32xf32> -> vector<2x1x32xf32>
    "tpu.trace_stop"() : () -> ()
    %534 = vector.shape_cast %533 : vector<2x1x32xf32> to vector<2x32xf32>
    %535 = tpu.concatenate %512, %534 in 1 : vector<2x32xf32>, vector<2x32xf32> -> vector<2x64xf32>
    %536 = tpu.concatenate %535, %444 in 1 : vector<2x64xf32>, vector<2x32xf32> -> vector<2x96xf32>
    %cst_147 = arith.constant dense<0.000000e+00> : vector<2x128xf32>
    %537 = tpu.matmul %536, %5, %cst_147 {dimension_numbers = #tpu.dot_dimension_numbers<[1], [0], [0], [1], [0, 0, 1, 1], [], []>} : vector<2x96xf32>, vector<96x128xf32>, vector<2x128xf32> -> vector<2x128xf32>
    %538 = vector.broadcast %6 : vector<1x128xf32> to vector<2x128xf32>
    %539 = arith.addf %537, %538 : vector<2x128xf32>
    %540 = vector.extract_strided_slice %539 {offsets = [0, 0], sizes = [2, 32], strides = [1, 1]} : vector<2x128xf32> to vector<2x32xf32>
    %541 = arith.negf %540 : vector<2x32xf32>
    %542 = math.exp %541 : vector<2x32xf32>
    %cst_148 = arith.constant 1.000000e+00 : f32
    %543 = vector.broadcast %cst_148 : f32 to vector<2x32xf32>
    %544 = arith.addf %543, %542 : vector<2x32xf32>
    %545 = arith.divf %543, %544 : vector<2x32xf32>
    %546 = vector.extract_strided_slice %539 {offsets = [0, 32], sizes = [2, 32], strides = [1, 1]} : vector<2x128xf32> to vector<2x32xf32>
    %547 = arith.negf %546 : vector<2x32xf32>
    %548 = math.exp %547 : vector<2x32xf32>
    %cst_149 = arith.constant 1.000000e+00 : f32
    %549 = vector.broadcast %cst_149 : f32 to vector<2x32xf32>
    %550 = arith.addf %549, %548 : vector<2x32xf32>
    %551 = arith.divf %549, %550 : vector<2x32xf32>
    %552 = vector.extract_strided_slice %539 {offsets = [0, 64], sizes = [2, 32], strides = [1, 1]} : vector<2x128xf32> to vector<2x32xf32>
    %553 = math.tanh %552 : vector<2x32xf32>
    %554 = vector.extract_strided_slice %539 {offsets = [0, 96], sizes = [2, 32], strides = [1, 1]} : vector<2x128xf32> to vector<2x32xf32>
    %555 = arith.negf %554 : vector<2x32xf32>
    %556 = math.exp %555 : vector<2x32xf32>
    %cst_150 = arith.constant 1.000000e+00 : f32
    %557 = vector.broadcast %cst_150 : f32 to vector<2x32xf32>
    %558 = arith.addf %557, %556 : vector<2x32xf32>
    %559 = arith.divf %557, %558 : vector<2x32xf32>
    %560 = arith.mulf %551, %442 : vector<2x32xf32>
    %561 = arith.mulf %545, %553 : vector<2x32xf32>
    %562 = arith.addf %560, %561 : vector<2x32xf32>
    %563 = math.tanh %562 : vector<2x32xf32>
    %564 = arith.mulf %559, %563 : vector<2x32xf32>
    %565 = tpu.concatenate %564, %473 in 1 : vector<2x32xf32>, vector<2x32xf32> -> vector<2x64xf32>
    %cst_151 = arith.constant dense<0.000000e+00> : vector<2x128xf32>
    %566 = tpu.matmul %565, %7, %cst_151 {dimension_numbers = #tpu.dot_dimension_numbers<[1], [0], [0], [1], [0, 0, 1, 1], [], []>} : vector<2x64xf32>, vector<64x128xf32>, vector<2x128xf32> -> vector<2x128xf32>
    %567 = vector.broadcast %8 : vector<1x128xf32> to vector<2x128xf32>
    %568 = arith.addf %566, %567 : vector<2x128xf32>
    %569 = vector.extract_strided_slice %568 {offsets = [0, 0], sizes = [2, 32], strides = [1, 1]} : vector<2x128xf32> to vector<2x32xf32>
    %570 = arith.negf %569 : vector<2x32xf32>
    %571 = math.exp %570 : vector<2x32xf32>
    %cst_152 = arith.constant 1.000000e+00 : f32
    %572 = vector.broadcast %cst_152 : f32 to vector<2x32xf32>
    %573 = arith.addf %572, %571 : vector<2x32xf32>
    %574 = arith.divf %572, %573 : vector<2x32xf32>
    %575 = vector.extract_strided_slice %568 {offsets = [0, 32], sizes = [2, 32], strides = [1, 1]} : vector<2x128xf32> to vector<2x32xf32>
    %576 = arith.negf %575 : vector<2x32xf32>
    %577 = math.exp %576 : vector<2x32xf32>
    %cst_153 = arith.constant 1.000000e+00 : f32
    %578 = vector.broadcast %cst_153 : f32 to vector<2x32xf32>
    %579 = arith.addf %578, %577 : vector<2x32xf32>
    %580 = arith.divf %578, %579 : vector<2x32xf32>
    %581 = vector.extract_strided_slice %568 {offsets = [0, 64], sizes = [2, 32], strides = [1, 1]} : vector<2x128xf32> to vector<2x32xf32>
    %582 = math.tanh %581 : vector<2x32xf32>
    %583 = vector.extract_strided_slice %568 {offsets = [0, 96], sizes = [2, 32], strides = [1, 1]} : vector<2x128xf32> to vector<2x32xf32>
    %584 = arith.negf %583 : vector<2x32xf32>
    %585 = math.exp %584 : vector<2x32xf32>
    %cst_154 = arith.constant 1.000000e+00 : f32
    %586 = vector.broadcast %cst_154 : f32 to vector<2x32xf32>
    %587 = arith.addf %586, %585 : vector<2x32xf32>
    %588 = arith.divf %586, %587 : vector<2x32xf32>
    %589 = arith.mulf %580, %471 : vector<2x32xf32>
    %590 = arith.mulf %574, %582 : vector<2x32xf32>
    %591 = arith.addf %589, %590 : vector<2x32xf32>
    %592 = math.tanh %591 : vector<2x32xf32>
    %593 = arith.mulf %588, %592 : vector<2x32xf32>
    %594 = tpu.concatenate %535, %593 in 1 : vector<2x64xf32>, vector<2x32xf32> -> vector<2x96xf32>
    %cst_155 = arith.constant dense<0.000000e+00> : vector<2x128xf32>
    %595 = tpu.matmul %594, %9, %cst_155 {dimension_numbers = #tpu.dot_dimension_numbers<[1], [0], [0], [1], [0, 0, 1, 1], [], []>} : vector<2x96xf32>, vector<96x128xf32>, vector<2x128xf32> -> vector<2x128xf32>
    %596 = vector.broadcast %10 : vector<1x128xf32> to vector<2x128xf32>
    %597 = arith.addf %595, %596 : vector<2x128xf32>
    %c4_156 = arith.constant 4 : index
    %c0_157 = arith.constant 0 : index
    %c0_158 = arith.constant 0 : index
    %598 = vector.load %arg15[%c4_156, %c0_157, %c0_158] : memref<5x2x128xf32, #tpu.memory_space<vmem>>, vector<1x2x128xf32>
    %599 = vector.shape_cast %598 : vector<1x2x128xf32> to vector<2x128xf32>
    %600 = vector.shape_cast %597 : vector<2x128xf32> to vector<1x2x128xf32>
    tpu.vector_store %arg15[%c4_156, %c0_157, %c0_158], %600 {strides = array<i32>} : memref<5x2x128xf32, #tpu.memory_space<vmem>>, vector<1x2x128xf32>,
    return
  }
}

module attributes {stable_mosaic.version = 11 : i64} {
  func.func @encoder_kernel(%arg0: memref<8x2x32xf32, #tpu.memory_space<vmem>>, %arg1: memref<32x128xf32, #tpu.memory_space<vmem>>, %arg2: memref<1x128xf32, #tpu.memory_space<vmem>>, %arg3: memref<32x128xf32, #tpu.memory_space<vmem>>, %arg4: memref<32x128xf32, #tpu.memory_space<vmem>>, %arg5: memref<32x128xf32, #tpu.memory_space<vmem>>, %arg6: memref<1x128xf32, #tpu.memory_space<vmem>>, %arg7: memref<32x32xf32, #tpu.memory_space<vmem>>, %arg8: memref<1x32xf32, #tpu.memory_space<vmem>>, %arg9: memref<2x8x32xf32, #tpu.memory_space<vmem>>, %arg10: memref<2x8x32xf32, #tpu.memory_space<vmem>>, %arg11: memref<2x2x32xf32, #tpu.memory_space<vmem>>, %arg12: memref<2x2x32xf32, #tpu.memory_space<vmem>>) attributes {dimension_semantics = [], scalar_prefetch = 0 : i64, scratch_operands = 0 : i64, tpu.core_type = #tpu.core_type<tc>} {
    %c0 = arith.constant 0 : index
    %c0_0 = arith.constant 0 : index
    %c0_1 = arith.constant 0 : index
    %0 = vector.load %arg0[%c0, %c0_0, %c0_1] : memref<8x2x32xf32, #tpu.memory_space<vmem>>, vector<8x2x32xf32>
    %1 = vector.shape_cast %0 : vector<8x2x32xf32> to vector<16x32xf32>
    %c0_2 = arith.constant 0 : index
    %c0_3 = arith.constant 0 : index
    %2 = vector.load %arg1[%c0_2, %c0_3] : memref<32x128xf32, #tpu.memory_space<vmem>>, vector<32x128xf32>
    %cst = arith.constant dense<0.000000e+00> : vector<16x128xf32>
    %3 = tpu.matmul %1, %2, %cst {dimension_numbers = #tpu.dot_dimension_numbers<[1], [0], [0], [1], [0, 0, 1, 1], [], []>} : vector<16x32xf32>, vector<32x128xf32>, vector<16x128xf32> -> vector<16x128xf32>
    %c0_4 = arith.constant 0 : index
    %c0_5 = arith.constant 0 : index
    %4 = vector.load %arg2[%c0_4, %c0_5] : memref<1x128xf32, #tpu.memory_space<vmem>>, vector<1x128xf32>
    %5 = vector.broadcast %4 : vector<1x128xf32> to vector<16x128xf32>
    %6 = arith.addf %3, %5 : vector<16x128xf32>
    %7 = vector.shape_cast %6 : vector<16x128xf32> to vector<8x2x128xf32>
    %c0_6 = arith.constant 0 : index
    %c0_7 = arith.constant 0 : index
    %8 = vector.load %arg3[%c0_6, %c0_7] : memref<32x128xf32, #tpu.memory_space<vmem>>, vector<32x128xf32>
    %cst_8 = arith.constant 0.000000e+00 : f32
    %9 = vector.broadcast %cst_8 : f32 to vector<2x32xf32>
    %cst_9 = arith.constant 0.000000e+00 : f32
    %10 = vector.broadcast %cst_9 : f32 to vector<2x32xf32>
    %11 = vector.extract_strided_slice %7 {offsets = [0, 0, 0], sizes = [1, 2, 128], strides = [1, 1, 1]} : vector<8x2x128xf32> to vector<1x2x128xf32>
    %12 = vector.shape_cast %11 : vector<1x2x128xf32> to vector<2x128xf32>
    %cst_10 = arith.constant dense<0.000000e+00> : vector<2x128xf32>
    %13 = tpu.matmul %9, %8, %cst_10 {dimension_numbers = #tpu.dot_dimension_numbers<[1], [0], [0], [1], [0, 0, 1, 1], [], []>} : vector<2x32xf32>, vector<32x128xf32>, vector<2x128xf32> -> vector<2x128xf32>
    %14 = arith.addf %12, %13 : vector<2x128xf32>
    %15 = vector.extract_strided_slice %14 {offsets = [0, 0], sizes = [2, 32], strides = [1, 1]} : vector<2x128xf32> to vector<2x32xf32>
    %16 = arith.negf %15 : vector<2x32xf32>
    %17 = math.exp %16 : vector<2x32xf32>
    %cst_11 = arith.constant 1.000000e+00 : f32
    %18 = vector.broadcast %cst_11 : f32 to vector<2x32xf32>
    %19 = arith.addf %18, %17 : vector<2x32xf32>
    %20 = arith.divf %18, %19 : vector<2x32xf32>
    %21 = vector.extract_strided_slice %14 {offsets = [0, 32], sizes = [2, 32], strides = [1, 1]} : vector<2x128xf32> to vector<2x32xf32>
    %22 = arith.negf %21 : vector<2x32xf32>
    %23 = math.exp %22 : vector<2x32xf32>
    %cst_12 = arith.constant 1.000000e+00 : f32
    %24 = vector.broadcast %cst_12 : f32 to vector<2x32xf32>
    %25 = arith.addf %24, %23 : vector<2x32xf32>
    %26 = arith.divf %24, %25 : vector<2x32xf32>
    %27 = vector.extract_strided_slice %14 {offsets = [0, 64], sizes = [2, 32], strides = [1, 1]} : vector<2x128xf32> to vector<2x32xf32>
    %28 = math.tanh %27 : vector<2x32xf32>
    %29 = vector.extract_strided_slice %14 {offsets = [0, 96], sizes = [2, 32], strides = [1, 1]} : vector<2x128xf32> to vector<2x32xf32>
    %30 = arith.negf %29 : vector<2x32xf32>
    %31 = math.exp %30 : vector<2x32xf32>
    %cst_13 = arith.constant 1.000000e+00 : f32
    %32 = vector.broadcast %cst_13 : f32 to vector<2x32xf32>
    %33 = arith.addf %32, %31 : vector<2x32xf32>
    %34 = arith.divf %32, %33 : vector<2x32xf32>
    %35 = arith.mulf %26, %10 : vector<2x32xf32>
    %36 = arith.mulf %20, %28 : vector<2x32xf32>
    %37 = arith.addf %35, %36 : vector<2x32xf32>
    %38 = math.tanh %37 : vector<2x32xf32>
    %39 = arith.mulf %34, %38 : vector<2x32xf32>
    %40 = vector.extract_strided_slice %7 {offsets = [1, 0, 0], sizes = [1, 2, 128], strides = [1, 1, 1]} : vector<8x2x128xf32> to vector<1x2x128xf32>
    %41 = vector.shape_cast %40 : vector<1x2x128xf32> to vector<2x128xf32>
    %cst_14 = arith.constant dense<0.000000e+00> : vector<2x128xf32>
    %42 = tpu.matmul %39, %8, %cst_14 {dimension_numbers = #tpu.dot_dimension_numbers<[1], [0], [0], [1], [0, 0, 1, 1], [], []>} : vector<2x32xf32>, vector<32x128xf32>, vector<2x128xf32> -> vector<2x128xf32>
    %43 = arith.addf %41, %42 : vector<2x128xf32>
    %44 = vector.extract_strided_slice %43 {offsets = [0, 0], sizes = [2, 32], strides = [1, 1]} : vector<2x128xf32> to vector<2x32xf32>
    %45 = arith.negf %44 : vector<2x32xf32>
    %46 = math.exp %45 : vector<2x32xf32>
    %cst_15 = arith.constant 1.000000e+00 : f32
    %47 = vector.broadcast %cst_15 : f32 to vector<2x32xf32>
    %48 = arith.addf %47, %46 : vector<2x32xf32>
    %49 = arith.divf %47, %48 : vector<2x32xf32>
    %50 = vector.extract_strided_slice %43 {offsets = [0, 32], sizes = [2, 32], strides = [1, 1]} : vector<2x128xf32> to vector<2x32xf32>
    %51 = arith.negf %50 : vector<2x32xf32>
    %52 = math.exp %51 : vector<2x32xf32>
    %cst_16 = arith.constant 1.000000e+00 : f32
    %53 = vector.broadcast %cst_16 : f32 to vector<2x32xf32>
    %54 = arith.addf %53, %52 : vector<2x32xf32>
    %55 = arith.divf %53, %54 : vector<2x32xf32>
    %56 = vector.extract_strided_slice %43 {offsets = [0, 64], sizes = [2, 32], strides = [1, 1]} : vector<2x128xf32> to vector<2x32xf32>
    %57 = math.tanh %56 : vector<2x32xf32>
    %58 = vector.extract_strided_slice %43 {offsets = [0, 96], sizes = [2, 32], strides = [1, 1]} : vector<2x128xf32> to vector<2x32xf32>
    %59 = arith.negf %58 : vector<2x32xf32>
    %60 = math.exp %59 : vector<2x32xf32>
    %cst_17 = arith.constant 1.000000e+00 : f32
    %61 = vector.broadcast %cst_17 : f32 to vector<2x32xf32>
    %62 = arith.addf %61, %60 : vector<2x32xf32>
    %63 = arith.divf %61, %62 : vector<2x32xf32>
    %64 = arith.mulf %55, %37 : vector<2x32xf32>
    %65 = arith.mulf %49, %57 : vector<2x32xf32>
    %66 = arith.addf %64, %65 : vector<2x32xf32>
    %67 = math.tanh %66 : vector<2x32xf32>
    %68 = arith.mulf %63, %67 : vector<2x32xf32>
    %69 = vector.extract_strided_slice %7 {offsets = [2, 0, 0], sizes = [1, 2, 128], strides = [1, 1, 1]} : vector<8x2x128xf32> to vector<1x2x128xf32>
    %70 = vector.shape_cast %69 : vector<1x2x128xf32> to vector<2x128xf32>
    %cst_18 = arith.constant dense<0.000000e+00> : vector<2x128xf32>
    %71 = tpu.matmul %68, %8, %cst_18 {dimension_numbers = #tpu.dot_dimension_numbers<[1], [0], [0], [1], [0, 0, 1, 1], [], []>} : vector<2x32xf32>, vector<32x128xf32>, vector<2x128xf32> -> vector<2x128xf32>
    %72 = arith.addf %70, %71 : vector<2x128xf32>
    %73 = vector.extract_strided_slice %72 {offsets = [0, 0], sizes = [2, 32], strides = [1, 1]} : vector<2x128xf32> to vector<2x32xf32>
    %74 = arith.negf %73 : vector<2x32xf32>
    %75 = math.exp %74 : vector<2x32xf32>
    %cst_19 = arith.constant 1.000000e+00 : f32
    %76 = vector.broadcast %cst_19 : f32 to vector<2x32xf32>
    %77 = arith.addf %76, %75 : vector<2x32xf32>
    %78 = arith.divf %76, %77 : vector<2x32xf32>
    %79 = vector.extract_strided_slice %72 {offsets = [0, 32], sizes = [2, 32], strides = [1, 1]} : vector<2x128xf32> to vector<2x32xf32>
    %80 = arith.negf %79 : vector<2x32xf32>
    %81 = math.exp %80 : vector<2x32xf32>
    %cst_20 = arith.constant 1.000000e+00 : f32
    %82 = vector.broadcast %cst_20 : f32 to vector<2x32xf32>
    %83 = arith.addf %82, %81 : vector<2x32xf32>
    %84 = arith.divf %82, %83 : vector<2x32xf32>
    %85 = vector.extract_strided_slice %72 {offsets = [0, 64], sizes = [2, 32], strides = [1, 1]} : vector<2x128xf32> to vector<2x32xf32>
    %86 = math.tanh %85 : vector<2x32xf32>
    %87 = vector.extract_strided_slice %72 {offsets = [0, 96], sizes = [2, 32], strides = [1, 1]} : vector<2x128xf32> to vector<2x32xf32>
    %88 = arith.negf %87 : vector<2x32xf32>
    %89 = math.exp %88 : vector<2x32xf32>
    %cst_21 = arith.constant 1.000000e+00 : f32
    %90 = vector.broadcast %cst_21 : f32 to vector<2x32xf32>
    %91 = arith.addf %90, %89 : vector<2x32xf32>
    %92 = arith.divf %90, %91 : vector<2x32xf32>
    %93 = arith.mulf %84, %66 : vector<2x32xf32>
    %94 = arith.mulf %78, %86 : vector<2x32xf32>
    %95 = arith.addf %93, %94 : vector<2x32xf32>
    %96 = math.tanh %95 : vector<2x32xf32>
    %97 = arith.mulf %92, %96 : vector<2x32xf32>
    %98 = vector.extract_strided_slice %7 {offsets = [3, 0, 0], sizes = [1, 2, 128], strides = [1, 1, 1]} : vector<8x2x128xf32> to vector<1x2x128xf32>
    %99 = vector.shape_cast %98 : vector<1x2x128xf32> to vector<2x128xf32>
    %cst_22 = arith.constant dense<0.000000e+00> : vector<2x128xf32>
    %100 = tpu.matmul %97, %8, %cst_22 {dimension_numbers = #tpu.dot_dimension_numbers<[1], [0], [0], [1], [0, 0, 1, 1], [], []>} : vector<2x32xf32>, vector<32x128xf32>, vector<2x128xf32> -> vector<2x128xf32>
    %101 = arith.addf %99, %100 : vector<2x128xf32>
    %102 = vector.extract_strided_slice %101 {offsets = [0, 0], sizes = [2, 32], strides = [1, 1]} : vector<2x128xf32> to vector<2x32xf32>
    %103 = arith.negf %102 : vector<2x32xf32>
    %104 = math.exp %103 : vector<2x32xf32>
    %cst_23 = arith.constant 1.000000e+00 : f32
    %105 = vector.broadcast %cst_23 : f32 to vector<2x32xf32>
    %106 = arith.addf %105, %104 : vector<2x32xf32>
    %107 = arith.divf %105, %106 : vector<2x32xf32>
    %108 = vector.extract_strided_slice %101 {offsets = [0, 32], sizes = [2, 32], strides = [1, 1]} : vector<2x128xf32> to vector<2x32xf32>
    %109 = arith.negf %108 : vector<2x32xf32>
    %110 = math.exp %109 : vector<2x32xf32>
    %cst_24 = arith.constant 1.000000e+00 : f32
    %111 = vector.broadcast %cst_24 : f32 to vector<2x32xf32>
    %112 = arith.addf %111, %110 : vector<2x32xf32>
    %113 = arith.divf %111, %112 : vector<2x32xf32>
    %114 = vector.extract_strided_slice %101 {offsets = [0, 64], sizes = [2, 32], strides = [1, 1]} : vector<2x128xf32> to vector<2x32xf32>
    %115 = math.tanh %114 : vector<2x32xf32>
    %116 = vector.extract_strided_slice %101 {offsets = [0, 96], sizes = [2, 32], strides = [1, 1]} : vector<2x128xf32> to vector<2x32xf32>
    %117 = arith.negf %116 : vector<2x32xf32>
    %118 = math.exp %117 : vector<2x32xf32>
    %cst_25 = arith.constant 1.000000e+00 : f32
    %119 = vector.broadcast %cst_25 : f32 to vector<2x32xf32>
    %120 = arith.addf %119, %118 : vector<2x32xf32>
    %121 = arith.divf %119, %120 : vector<2x32xf32>
    %122 = arith.mulf %113, %95 : vector<2x32xf32>
    %123 = arith.mulf %107, %115 : vector<2x32xf32>
    %124 = arith.addf %122, %123 : vector<2x32xf32>
    %125 = math.tanh %124 : vector<2x32xf32>
    %126 = arith.mulf %121, %125 : vector<2x32xf32>
    %127 = vector.extract_strided_slice %7 {offsets = [4, 0, 0], sizes = [1, 2, 128], strides = [1, 1, 1]} : vector<8x2x128xf32> to vector<1x2x128xf32>
    %128 = vector.shape_cast %127 : vector<1x2x128xf32> to vector<2x128xf32>
    %cst_26 = arith.constant dense<0.000000e+00> : vector<2x128xf32>
    %129 = tpu.matmul %126, %8, %cst_26 {dimension_numbers = #tpu.dot_dimension_numbers<[1], [0], [0], [1], [0, 0, 1, 1], [], []>} : vector<2x32xf32>, vector<32x128xf32>, vector<2x128xf32> -> vector<2x128xf32>
    %130 = arith.addf %128, %129 : vector<2x128xf32>
    %131 = vector.extract_strided_slice %130 {offsets = [0, 0], sizes = [2, 32], strides = [1, 1]} : vector<2x128xf32> to vector<2x32xf32>
    %132 = arith.negf %131 : vector<2x32xf32>
    %133 = math.exp %132 : vector<2x32xf32>
    %cst_27 = arith.constant 1.000000e+00 : f32
    %134 = vector.broadcast %cst_27 : f32 to vector<2x32xf32>
    %135 = arith.addf %134, %133 : vector<2x32xf32>
    %136 = arith.divf %134, %135 : vector<2x32xf32>
    %137 = vector.extract_strided_slice %130 {offsets = [0, 32], sizes = [2, 32], strides = [1, 1]} : vector<2x128xf32> to vector<2x32xf32>
    %138 = arith.negf %137 : vector<2x32xf32>
    %139 = math.exp %138 : vector<2x32xf32>
    %cst_28 = arith.constant 1.000000e+00 : f32
    %140 = vector.broadcast %cst_28 : f32 to vector<2x32xf32>
    %141 = arith.addf %140, %139 : vector<2x32xf32>
    %142 = arith.divf %140, %141 : vector<2x32xf32>
    %143 = vector.extract_strided_slice %130 {offsets = [0, 64], sizes = [2, 32], strides = [1, 1]} : vector<2x128xf32> to vector<2x32xf32>
    %144 = math.tanh %143 : vector<2x32xf32>
    %145 = vector.extract_strided_slice %130 {offsets = [0, 96], sizes = [2, 32], strides = [1, 1]} : vector<2x128xf32> to vector<2x32xf32>
    %146 = arith.negf %145 : vector<2x32xf32>
    %147 = math.exp %146 : vector<2x32xf32>
    %cst_29 = arith.constant 1.000000e+00 : f32
    %148 = vector.broadcast %cst_29 : f32 to vector<2x32xf32>
    %149 = arith.addf %148, %147 : vector<2x32xf32>
    %150 = arith.divf %148, %149 : vector<2x32xf32>
    %151 = arith.mulf %142, %124 : vector<2x32xf32>
    %152 = arith.mulf %136, %144 : vector<2x32xf32>
    %153 = arith.addf %151, %152 : vector<2x32xf32>
    %154 = math.tanh %153 : vector<2x32xf32>
    %155 = arith.mulf %150, %154 : vector<2x32xf32>
    %156 = vector.extract_strided_slice %7 {offsets = [5, 0, 0], sizes = [1, 2, 128], strides = [1, 1, 1]} : vector<8x2x128xf32> to vector<1x2x128xf32>
    %157 = vector.shape_cast %156 : vector<1x2x128xf32> to vector<2x128xf32>
    %cst_30 = arith.constant dense<0.000000e+00> : vector<2x128xf32>
    %158 = tpu.matmul %155, %8, %cst_30 {dimension_numbers = #tpu.dot_dimension_numbers<[1], [0], [0], [1], [0, 0, 1, 1], [], []>} : vector<2x32xf32>, vector<32x128xf32>, vector<2x128xf32> -> vector<2x128xf32>
    %159 = arith.addf %157, %158 : vector<2x128xf32>
    %160 = vector.extract_strided_slice %159 {offsets = [0, 0], sizes = [2, 32], strides = [1, 1]} : vector<2x128xf32> to vector<2x32xf32>
    %161 = arith.negf %160 : vector<2x32xf32>
    %162 = math.exp %161 : vector<2x32xf32>
    %cst_31 = arith.constant 1.000000e+00 : f32
    %163 = vector.broadcast %cst_31 : f32 to vector<2x32xf32>
    %164 = arith.addf %163, %162 : vector<2x32xf32>
    %165 = arith.divf %163, %164 : vector<2x32xf32>
    %166 = vector.extract_strided_slice %159 {offsets = [0, 32], sizes = [2, 32], strides = [1, 1]} : vector<2x128xf32> to vector<2x32xf32>
    %167 = arith.negf %166 : vector<2x32xf32>
    %168 = math.exp %167 : vector<2x32xf32>
    %cst_32 = arith.constant 1.000000e+00 : f32
    %169 = vector.broadcast %cst_32 : f32 to vector<2x32xf32>
    %170 = arith.addf %169, %168 : vector<2x32xf32>
    %171 = arith.divf %169, %170 : vector<2x32xf32>
    %172 = vector.extract_strided_slice %159 {offsets = [0, 64], sizes = [2, 32], strides = [1, 1]} : vector<2x128xf32> to vector<2x32xf32>
    %173 = math.tanh %172 : vector<2x32xf32>
    %174 = vector.extract_strided_slice %159 {offsets = [0, 96], sizes = [2, 32], strides = [1, 1]} : vector<2x128xf32> to vector<2x32xf32>
    %175 = arith.negf %174 : vector<2x32xf32>
    %176 = math.exp %175 : vector<2x32xf32>
    %cst_33 = arith.constant 1.000000e+00 : f32
    %177 = vector.broadcast %cst_33 : f32 to vector<2x32xf32>
    %178 = arith.addf %177, %176 : vector<2x32xf32>
    %179 = arith.divf %177, %178 : vector<2x32xf32>
    %180 = arith.mulf %171, %153 : vector<2x32xf32>
    %181 = arith.mulf %165, %173 : vector<2x32xf32>
    %182 = arith.addf %180, %181 : vector<2x32xf32>
    %183 = math.tanh %182 : vector<2x32xf32>
    %184 = arith.mulf %179, %183 : vector<2x32xf32>
    %185 = vector.extract_strided_slice %7 {offsets = [6, 0, 0], sizes = [1, 2, 128], strides = [1, 1, 1]} : vector<8x2x128xf32> to vector<1x2x128xf32>
    %186 = vector.shape_cast %185 : vector<1x2x128xf32> to vector<2x128xf32>
    %cst_34 = arith.constant dense<0.000000e+00> : vector<2x128xf32>
    %187 = tpu.matmul %184, %8, %cst_34 {dimension_numbers = #tpu.dot_dimension_numbers<[1], [0], [0], [1], [0, 0, 1, 1], [], []>} : vector<2x32xf32>, vector<32x128xf32>, vector<2x128xf32> -> vector<2x128xf32>
    %188 = arith.addf %186, %187 : vector<2x128xf32>
    %189 = vector.extract_strided_slice %188 {offsets = [0, 0], sizes = [2, 32], strides = [1, 1]} : vector<2x128xf32> to vector<2x32xf32>
    %190 = arith.negf %189 : vector<2x32xf32>
    %191 = math.exp %190 : vector<2x32xf32>
    %cst_35 = arith.constant 1.000000e+00 : f32
    %192 = vector.broadcast %cst_35 : f32 to vector<2x32xf32>
    %193 = arith.addf %192, %191 : vector<2x32xf32>
    %194 = arith.divf %192, %193 : vector<2x32xf32>
    %195 = vector.extract_strided_slice %188 {offsets = [0, 32], sizes = [2, 32], strides = [1, 1]} : vector<2x128xf32> to vector<2x32xf32>
    %196 = arith.negf %195 : vector<2x32xf32>
    %197 = math.exp %196 : vector<2x32xf32>
    %cst_36 = arith.constant 1.000000e+00 : f32
    %198 = vector.broadcast %cst_36 : f32 to vector<2x32xf32>
    %199 = arith.addf %198, %197 : vector<2x32xf32>
    %200 = arith.divf %198, %199 : vector<2x32xf32>
    %201 = vector.extract_strided_slice %188 {offsets = [0, 64], sizes = [2, 32], strides = [1, 1]} : vector<2x128xf32> to vector<2x32xf32>
    %202 = math.tanh %201 : vector<2x32xf32>
    %203 = vector.extract_strided_slice %188 {offsets = [0, 96], sizes = [2, 32], strides = [1, 1]} : vector<2x128xf32> to vector<2x32xf32>
    %204 = arith.negf %203 : vector<2x32xf32>
    %205 = math.exp %204 : vector<2x32xf32>
    %cst_37 = arith.constant 1.000000e+00 : f32
    %206 = vector.broadcast %cst_37 : f32 to vector<2x32xf32>
    %207 = arith.addf %206, %205 : vector<2x32xf32>
    %208 = arith.divf %206, %207 : vector<2x32xf32>
    %209 = arith.mulf %200, %182 : vector<2x32xf32>
    %210 = arith.mulf %194, %202 : vector<2x32xf32>
    %211 = arith.addf %209, %210 : vector<2x32xf32>
    %212 = math.tanh %211 : vector<2x32xf32>
    %213 = arith.mulf %208, %212 : vector<2x32xf32>
    %214 = vector.extract_strided_slice %7 {offsets = [7, 0, 0], sizes = [1, 2, 128], strides = [1, 1, 1]} : vector<8x2x128xf32> to vector<1x2x128xf32>
    %215 = vector.shape_cast %214 : vector<1x2x128xf32> to vector<2x128xf32>
    %cst_38 = arith.constant dense<0.000000e+00> : vector<2x128xf32>
    %216 = tpu.matmul %213, %8, %cst_38 {dimension_numbers = #tpu.dot_dimension_numbers<[1], [0], [0], [1], [0, 0, 1, 1], [], []>} : vector<2x32xf32>, vector<32x128xf32>, vector<2x128xf32> -> vector<2x128xf32>
    %217 = arith.addf %215, %216 : vector<2x128xf32>
    %218 = vector.extract_strided_slice %217 {offsets = [0, 0], sizes = [2, 32], strides = [1, 1]} : vector<2x128xf32> to vector<2x32xf32>
    %219 = arith.negf %218 : vector<2x32xf32>
    %220 = math.exp %219 : vector<2x32xf32>
    %cst_39 = arith.constant 1.000000e+00 : f32
    %221 = vector.broadcast %cst_39 : f32 to vector<2x32xf32>
    %222 = arith.addf %221, %220 : vector<2x32xf32>
    %223 = arith.divf %221, %222 : vector<2x32xf32>
    %224 = vector.extract_strided_slice %217 {offsets = [0, 32], sizes = [2, 32], strides = [1, 1]} : vector<2x128xf32> to vector<2x32xf32>
    %225 = arith.negf %224 : vector<2x32xf32>
    %226 = math.exp %225 : vector<2x32xf32>
    %cst_40 = arith.constant 1.000000e+00 : f32
    %227 = vector.broadcast %cst_40 : f32 to vector<2x32xf32>
    %228 = arith.addf %227, %226 : vector<2x32xf32>
    %229 = arith.divf %227, %228 : vector<2x32xf32>
    %230 = vector.extract_strided_slice %217 {offsets = [0, 64], sizes = [2, 32], strides = [1, 1]} : vector<2x128xf32> to vector<2x32xf32>
    %231 = math.tanh %230 : vector<2x32xf32>
    %232 = vector.extract_strided_slice %217 {offsets = [0, 96], sizes = [2, 32], strides = [1, 1]} : vector<2x128xf32> to vector<2x32xf32>
    %233 = arith.negf %232 : vector<2x32xf32>
    %234 = math.exp %233 : vector<2x32xf32>
    %cst_41 = arith.constant 1.000000e+00 : f32
    %235 = vector.broadcast %cst_41 : f32 to vector<2x32xf32>
    %236 = arith.addf %235, %234 : vector<2x32xf32>
    %237 = arith.divf %235, %236 : vector<2x32xf32>
    %238 = arith.mulf %229, %211 : vector<2x32xf32>
    %239 = arith.mulf %223, %231 : vector<2x32xf32>
    %240 = arith.addf %238, %239 : vector<2x32xf32>
    %241 = math.tanh %240 : vector<2x32xf32>
    %242 = arith.mulf %237, %241 : vector<2x32xf32>
    %243 = tpu.concatenate %39, %68, %97, %126, %155, %184, %213, %242 in 0 : vector<2x32xf32>, vector<2x32xf32>, vector<2x32xf32>, vector<2x32xf32>, vector<2x32xf32>, vector<2x32xf32>, vector<2x32xf32>, vector<2x32xf32> -> vector<16x32xf32>
    %c0_42 = arith.constant 0 : index
    %c0_43 = arith.constant 0 : index
    %244 = vector.load %arg4[%c0_42, %c0_43] : memref<32x128xf32, #tpu.memory_space<vmem>>, vector<32x128xf32>
    %cst_44 = arith.constant dense<0.000000e+00> : vector<16x128xf32>
    %245 = tpu.matmul %243, %244, %cst_44 {dimension_numbers = #tpu.dot_dimension_numbers<[1], [0], [0], [1], [0, 0, 1, 1], [], []>} : vector<16x32xf32>, vector<32x128xf32>, vector<16x128xf32> -> vector<16x128xf32>
    %c0_45 = arith.constant 0 : index
    %c0_46 = arith.constant 0 : index
    %246 = vector.load %arg6[%c0_45, %c0_46] : memref<1x128xf32, #tpu.memory_space<vmem>>, vector<1x128xf32>
    %247 = vector.broadcast %246 : vector<1x128xf32> to vector<16x128xf32>
    %248 = arith.addf %245, %247 : vector<16x128xf32>
    %249 = vector.shape_cast %248 : vector<16x128xf32> to vector<8x2x128xf32>
    %c0_47 = arith.constant 0 : index
    %c0_48 = arith.constant 0 : index
    %250 = vector.load %arg5[%c0_47, %c0_48] : memref<32x128xf32, #tpu.memory_space<vmem>>, vector<32x128xf32>
    %cst_49 = arith.constant 0.000000e+00 : f32
    %251 = vector.broadcast %cst_49 : f32 to vector<2x32xf32>
    %cst_50 = arith.constant 0.000000e+00 : f32
    %252 = vector.broadcast %cst_50 : f32 to vector<2x32xf32>
    %253 = vector.extract_strided_slice %249 {offsets = [0, 0, 0], sizes = [1, 2, 128], strides = [1, 1, 1]} : vector<8x2x128xf32> to vector<1x2x128xf32>
    %254 = vector.shape_cast %253 : vector<1x2x128xf32> to vector<2x128xf32>
    %cst_51 = arith.constant dense<0.000000e+00> : vector<2x128xf32>
    %255 = tpu.matmul %251, %250, %cst_51 {dimension_numbers = #tpu.dot_dimension_numbers<[1], [0], [0], [1], [0, 0, 1, 1], [], []>} : vector<2x32xf32>, vector<32x128xf32>, vector<2x128xf32> -> vector<2x128xf32>
    %256 = arith.addf %254, %255 : vector<2x128xf32>
    %257 = vector.extract_strided_slice %256 {offsets = [0, 0], sizes = [2, 32], strides = [1, 1]} : vector<2x128xf32> to vector<2x32xf32>
    %258 = arith.negf %257 : vector<2x32xf32>
    %259 = math.exp %258 : vector<2x32xf32>
    %cst_52 = arith.constant 1.000000e+00 : f32
    %260 = vector.broadcast %cst_52 : f32 to vector<2x32xf32>
    %261 = arith.addf %260, %259 : vector<2x32xf32>
    %262 = arith.divf %260, %261 : vector<2x32xf32>
    %263 = vector.extract_strided_slice %256 {offsets = [0, 32], sizes = [2, 32], strides = [1, 1]} : vector<2x128xf32> to vector<2x32xf32>
    %264 = arith.negf %263 : vector<2x32xf32>
    %265 = math.exp %264 : vector<2x32xf32>
    %cst_53 = arith.constant 1.000000e+00 : f32
    %266 = vector.broadcast %cst_53 : f32 to vector<2x32xf32>
    %267 = arith.addf %266, %265 : vector<2x32xf32>
    %268 = arith.divf %266, %267 : vector<2x32xf32>
    %269 = vector.extract_strided_slice %256 {offsets = [0, 64], sizes = [2, 32], strides = [1, 1]} : vector<2x128xf32> to vector<2x32xf32>
    %270 = math.tanh %269 : vector<2x32xf32>
    %271 = vector.extract_strided_slice %256 {offsets = [0, 96], sizes = [2, 32], strides = [1, 1]} : vector<2x128xf32> to vector<2x32xf32>
    %272 = arith.negf %271 : vector<2x32xf32>
    %273 = math.exp %272 : vector<2x32xf32>
    %cst_54 = arith.constant 1.000000e+00 : f32
    %274 = vector.broadcast %cst_54 : f32 to vector<2x32xf32>
    %275 = arith.addf %274, %273 : vector<2x32xf32>
    %276 = arith.divf %274, %275 : vector<2x32xf32>
    %277 = arith.mulf %268, %252 : vector<2x32xf32>
    %278 = arith.mulf %262, %270 : vector<2x32xf32>
    %279 = arith.addf %277, %278 : vector<2x32xf32>
    %280 = math.tanh %279 : vector<2x32xf32>
    %281 = arith.mulf %276, %280 : vector<2x32xf32>
    %282 = vector.extract_strided_slice %249 {offsets = [1, 0, 0], sizes = [1, 2, 128], strides = [1, 1, 1]} : vector<8x2x128xf32> to vector<1x2x128xf32>
    %283 = vector.shape_cast %282 : vector<1x2x128xf32> to vector<2x128xf32>
    %cst_55 = arith.constant dense<0.000000e+00> : vector<2x128xf32>
    %284 = tpu.matmul %281, %250, %cst_55 {dimension_numbers = #tpu.dot_dimension_numbers<[1], [0], [0], [1], [0, 0, 1, 1], [], []>} : vector<2x32xf32>, vector<32x128xf32>, vector<2x128xf32> -> vector<2x128xf32>
    %285 = arith.addf %283, %284 : vector<2x128xf32>
    %286 = vector.extract_strided_slice %285 {offsets = [0, 0], sizes = [2, 32], strides = [1, 1]} : vector<2x128xf32> to vector<2x32xf32>
    %287 = arith.negf %286 : vector<2x32xf32>
    %288 = math.exp %287 : vector<2x32xf32>
    %cst_56 = arith.constant 1.000000e+00 : f32
    %289 = vector.broadcast %cst_56 : f32 to vector<2x32xf32>
    %290 = arith.addf %289, %288 : vector<2x32xf32>
    %291 = arith.divf %289, %290 : vector<2x32xf32>
    %292 = vector.extract_strided_slice %285 {offsets = [0, 32], sizes = [2, 32], strides = [1, 1]} : vector<2x128xf32> to vector<2x32xf32>
    %293 = arith.negf %292 : vector<2x32xf32>
    %294 = math.exp %293 : vector<2x32xf32>
    %cst_57 = arith.constant 1.000000e+00 : f32
    %295 = vector.broadcast %cst_57 : f32 to vector<2x32xf32>
    %296 = arith.addf %295, %294 : vector<2x32xf32>
    %297 = arith.divf %295, %296 : vector<2x32xf32>
    %298 = vector.extract_strided_slice %285 {offsets = [0, 64], sizes = [2, 32], strides = [1, 1]} : vector<2x128xf32> to vector<2x32xf32>
    %299 = math.tanh %298 : vector<2x32xf32>
    %300 = vector.extract_strided_slice %285 {offsets = [0, 96], sizes = [2, 32], strides = [1, 1]} : vector<2x128xf32> to vector<2x32xf32>
    %301 = arith.negf %300 : vector<2x32xf32>
    %302 = math.exp %301 : vector<2x32xf32>
    %cst_58 = arith.constant 1.000000e+00 : f32
    %303 = vector.broadcast %cst_58 : f32 to vector<2x32xf32>
    %304 = arith.addf %303, %302 : vector<2x32xf32>
    %305 = arith.divf %303, %304 : vector<2x32xf32>
    %306 = arith.mulf %297, %279 : vector<2x32xf32>
    %307 = arith.mulf %291, %299 : vector<2x32xf32>
    %308 = arith.addf %306, %307 : vector<2x32xf32>
    %309 = math.tanh %308 : vector<2x32xf32>
    %310 = arith.mulf %305, %309 : vector<2x32xf32>
    %311 = vector.extract_strided_slice %249 {offsets = [2, 0, 0], sizes = [1, 2, 128], strides = [1, 1, 1]} : vector<8x2x128xf32> to vector<1x2x128xf32>
    %312 = vector.shape_cast %311 : vector<1x2x128xf32> to vector<2x128xf32>
    %cst_59 = arith.constant dense<0.000000e+00> : vector<2x128xf32>
    %313 = tpu.matmul %310, %250, %cst_59 {dimension_numbers = #tpu.dot_dimension_numbers<[1], [0], [0], [1], [0, 0, 1, 1], [], []>} : vector<2x32xf32>, vector<32x128xf32>, vector<2x128xf32> -> vector<2x128xf32>
    %314 = arith.addf %312, %313 : vector<2x128xf32>
    %315 = vector.extract_strided_slice %314 {offsets = [0, 0], sizes = [2, 32], strides = [1, 1]} : vector<2x128xf32> to vector<2x32xf32>
    %316 = arith.negf %315 : vector<2x32xf32>
    %317 = math.exp %316 : vector<2x32xf32>
    %cst_60 = arith.constant 1.000000e+00 : f32
    %318 = vector.broadcast %cst_60 : f32 to vector<2x32xf32>
    %319 = arith.addf %318, %317 : vector<2x32xf32>
    %320 = arith.divf %318, %319 : vector<2x32xf32>
    %321 = vector.extract_strided_slice %314 {offsets = [0, 32], sizes = [2, 32], strides = [1, 1]} : vector<2x128xf32> to vector<2x32xf32>
    %322 = arith.negf %321 : vector<2x32xf32>
    %323 = math.exp %322 : vector<2x32xf32>
    %cst_61 = arith.constant 1.000000e+00 : f32
    %324 = vector.broadcast %cst_61 : f32 to vector<2x32xf32>
    %325 = arith.addf %324, %323 : vector<2x32xf32>
    %326 = arith.divf %324, %325 : vector<2x32xf32>
    %327 = vector.extract_strided_slice %314 {offsets = [0, 64], sizes = [2, 32], strides = [1, 1]} : vector<2x128xf32> to vector<2x32xf32>
    %328 = math.tanh %327 : vector<2x32xf32>
    %329 = vector.extract_strided_slice %314 {offsets = [0, 96], sizes = [2, 32], strides = [1, 1]} : vector<2x128xf32> to vector<2x32xf32>
    %330 = arith.negf %329 : vector<2x32xf32>
    %331 = math.exp %330 : vector<2x32xf32>
    %cst_62 = arith.constant 1.000000e+00 : f32
    %332 = vector.broadcast %cst_62 : f32 to vector<2x32xf32>
    %333 = arith.addf %332, %331 : vector<2x32xf32>
    %334 = arith.divf %332, %333 : vector<2x32xf32>
    %335 = arith.mulf %326, %308 : vector<2x32xf32>
    %336 = arith.mulf %320, %328 : vector<2x32xf32>
    %337 = arith.addf %335, %336 : vector<2x32xf32>
    %338 = math.tanh %337 : vector<2x32xf32>
    %339 = arith.mulf %334, %338 : vector<2x32xf32>
    %340 = vector.extract_strided_slice %249 {offsets = [3, 0, 0], sizes = [1, 2, 128], strides = [1, 1, 1]} : vector<8x2x128xf32> to vector<1x2x128xf32>
    %341 = vector.shape_cast %340 : vector<1x2x128xf32> to vector<2x128xf32>
    %cst_63 = arith.constant dense<0.000000e+00> : vector<2x128xf32>
    %342 = tpu.matmul %339, %250, %cst_63 {dimension_numbers = #tpu.dot_dimension_numbers<[1], [0], [0], [1], [0, 0, 1, 1], [], []>} : vector<2x32xf32>, vector<32x128xf32>, vector<2x128xf32> -> vector<2x128xf32>
    %343 = arith.addf %341, %342 : vector<2x128xf32>
    %344 = vector.extract_strided_slice %343 {offsets = [0, 0], sizes = [2, 32], strides = [1, 1]} : vector<2x128xf32> to vector<2x32xf32>
    %345 = arith.negf %344 : vector<2x32xf32>
    %346 = math.exp %345 : vector<2x32xf32>
    %cst_64 = arith.constant 1.000000e+00 : f32
    %347 = vector.broadcast %cst_64 : f32 to vector<2x32xf32>
    %348 = arith.addf %347, %346 : vector<2x32xf32>
    %349 = arith.divf %347, %348 : vector<2x32xf32>
    %350 = vector.extract_strided_slice %343 {offsets = [0, 32], sizes = [2, 32], strides = [1, 1]} : vector<2x128xf32> to vector<2x32xf32>
    %351 = arith.negf %350 : vector<2x32xf32>
    %352 = math.exp %351 : vector<2x32xf32>
    %cst_65 = arith.constant 1.000000e+00 : f32
    %353 = vector.broadcast %cst_65 : f32 to vector<2x32xf32>
    %354 = arith.addf %353, %352 : vector<2x32xf32>
    %355 = arith.divf %353, %354 : vector<2x32xf32>
    %356 = vector.extract_strided_slice %343 {offsets = [0, 64], sizes = [2, 32], strides = [1, 1]} : vector<2x128xf32> to vector<2x32xf32>
    %357 = math.tanh %356 : vector<2x32xf32>
    %358 = vector.extract_strided_slice %343 {offsets = [0, 96], sizes = [2, 32], strides = [1, 1]} : vector<2x128xf32> to vector<2x32xf32>
    %359 = arith.negf %358 : vector<2x32xf32>
    %360 = math.exp %359 : vector<2x32xf32>
    %cst_66 = arith.constant 1.000000e+00 : f32
    %361 = vector.broadcast %cst_66 : f32 to vector<2x32xf32>
    %362 = arith.addf %361, %360 : vector<2x32xf32>
    %363 = arith.divf %361, %362 : vector<2x32xf32>
    %364 = arith.mulf %355, %337 : vector<2x32xf32>
    %365 = arith.mulf %349, %357 : vector<2x32xf32>
    %366 = arith.addf %364, %365 : vector<2x32xf32>
    %367 = math.tanh %366 : vector<2x32xf32>
    %368 = arith.mulf %363, %367 : vector<2x32xf32>
    %369 = vector.extract_strided_slice %249 {offsets = [4, 0, 0], sizes = [1, 2, 128], strides = [1, 1, 1]} : vector<8x2x128xf32> to vector<1x2x128xf32>
    %370 = vector.shape_cast %369 : vector<1x2x128xf32> to vector<2x128xf32>
    %cst_67 = arith.constant dense<0.000000e+00> : vector<2x128xf32>
    %371 = tpu.matmul %368, %250, %cst_67 {dimension_numbers = #tpu.dot_dimension_numbers<[1], [0], [0], [1], [0, 0, 1, 1], [], []>} : vector<2x32xf32>, vector<32x128xf32>, vector<2x128xf32> -> vector<2x128xf32>
    %372 = arith.addf %370, %371 : vector<2x128xf32>
    %373 = vector.extract_strided_slice %372 {offsets = [0, 0], sizes = [2, 32], strides = [1, 1]} : vector<2x128xf32> to vector<2x32xf32>
    %374 = arith.negf %373 : vector<2x32xf32>
    %375 = math.exp %374 : vector<2x32xf32>
    %cst_68 = arith.constant 1.000000e+00 : f32
    %376 = vector.broadcast %cst_68 : f32 to vector<2x32xf32>
    %377 = arith.addf %376, %375 : vector<2x32xf32>
    %378 = arith.divf %376, %377 : vector<2x32xf32>
    %379 = vector.extract_strided_slice %372 {offsets = [0, 32], sizes = [2, 32], strides = [1, 1]} : vector<2x128xf32> to vector<2x32xf32>
    %380 = arith.negf %379 : vector<2x32xf32>
    %381 = math.exp %380 : vector<2x32xf32>
    %cst_69 = arith.constant 1.000000e+00 : f32
    %382 = vector.broadcast %cst_69 : f32 to vector<2x32xf32>
    %383 = arith.addf %382, %381 : vector<2x32xf32>
    %384 = arith.divf %382, %383 : vector<2x32xf32>
    %385 = vector.extract_strided_slice %372 {offsets = [0, 64], sizes = [2, 32], strides = [1, 1]} : vector<2x128xf32> to vector<2x32xf32>
    %386 = math.tanh %385 : vector<2x32xf32>
    %387 = vector.extract_strided_slice %372 {offsets = [0, 96], sizes = [2, 32], strides = [1, 1]} : vector<2x128xf32> to vector<2x32xf32>
    %388 = arith.negf %387 : vector<2x32xf32>
    %389 = math.exp %388 : vector<2x32xf32>
    %cst_70 = arith.constant 1.000000e+00 : f32
    %390 = vector.broadcast %cst_70 : f32 to vector<2x32xf32>
    %391 = arith.addf %390, %389 : vector<2x32xf32>
    %392 = arith.divf %390, %391 : vector<2x32xf32>
    %393 = arith.mulf %384, %366 : vector<2x32xf32>
    %394 = arith.mulf %378, %386 : vector<2x32xf32>
    %395 = arith.addf %393, %394 : vector<2x32xf32>
    %396 = math.tanh %395 : vector<2x32xf32>
    %397 = arith.mulf %392, %396 : vector<2x32xf32>
    %398 = vector.extract_strided_slice %249 {offsets = [5, 0, 0], sizes = [1, 2, 128], strides = [1, 1, 1]} : vector<8x2x128xf32> to vector<1x2x128xf32>
    %399 = vector.shape_cast %398 : vector<1x2x128xf32> to vector<2x128xf32>
    %cst_71 = arith.constant dense<0.000000e+00> : vector<2x128xf32>
    %400 = tpu.matmul %397, %250, %cst_71 {dimension_numbers = #tpu.dot_dimension_numbers<[1], [0], [0], [1], [0, 0, 1, 1], [], []>} : vector<2x32xf32>, vector<32x128xf32>, vector<2x128xf32> -> vector<2x128xf32>
    %401 = arith.addf %399, %400 : vector<2x128xf32>
    %402 = vector.extract_strided_slice %401 {offsets = [0, 0], sizes = [2, 32], strides = [1, 1]} : vector<2x128xf32> to vector<2x32xf32>
    %403 = arith.negf %402 : vector<2x32xf32>
    %404 = math.exp %403 : vector<2x32xf32>
    %cst_72 = arith.constant 1.000000e+00 : f32
    %405 = vector.broadcast %cst_72 : f32 to vector<2x32xf32>
    %406 = arith.addf %405, %404 : vector<2x32xf32>
    %407 = arith.divf %405, %406 : vector<2x32xf32>
    %408 = vector.extract_strided_slice %401 {offsets = [0, 32], sizes = [2, 32], strides = [1, 1]} : vector<2x128xf32> to vector<2x32xf32>
    %409 = arith.negf %408 : vector<2x32xf32>
    %410 = math.exp %409 : vector<2x32xf32>
    %cst_73 = arith.constant 1.000000e+00 : f32
    %411 = vector.broadcast %cst_73 : f32 to vector<2x32xf32>
    %412 = arith.addf %411, %410 : vector<2x32xf32>
    %413 = arith.divf %411, %412 : vector<2x32xf32>
    %414 = vector.extract_strided_slice %401 {offsets = [0, 64], sizes = [2, 32], strides = [1, 1]} : vector<2x128xf32> to vector<2x32xf32>
    %415 = math.tanh %414 : vector<2x32xf32>
    %416 = vector.extract_strided_slice %401 {offsets = [0, 96], sizes = [2, 32], strides = [1, 1]} : vector<2x128xf32> to vector<2x32xf32>
    %417 = arith.negf %416 : vector<2x32xf32>
    %418 = math.exp %417 : vector<2x32xf32>
    %cst_74 = arith.constant 1.000000e+00 : f32
    %419 = vector.broadcast %cst_74 : f32 to vector<2x32xf32>
    %420 = arith.addf %419, %418 : vector<2x32xf32>
    %421 = arith.divf %419, %420 : vector<2x32xf32>
    %422 = arith.mulf %413, %395 : vector<2x32xf32>
    %423 = arith.mulf %407, %415 : vector<2x32xf32>
    %424 = arith.addf %422, %423 : vector<2x32xf32>
    %425 = math.tanh %424 : vector<2x32xf32>
    %426 = arith.mulf %421, %425 : vector<2x32xf32>
    %427 = vector.extract_strided_slice %249 {offsets = [6, 0, 0], sizes = [1, 2, 128], strides = [1, 1, 1]} : vector<8x2x128xf32> to vector<1x2x128xf32>
    %428 = vector.shape_cast %427 : vector<1x2x128xf32> to vector<2x128xf32>
    %cst_75 = arith.constant dense<0.000000e+00> : vector<2x128xf32>
    %429 = tpu.matmul %426, %250, %cst_75 {dimension_numbers = #tpu.dot_dimension_numbers<[1], [0], [0], [1], [0, 0, 1, 1], [], []>} : vector<2x32xf32>, vector<32x128xf32>, vector<2x128xf32> -> vector<2x128xf32>
    %430 = arith.addf %428, %429 : vector<2x128xf32>
    %431 = vector.extract_strided_slice %430 {offsets = [0, 0], sizes = [2, 32], strides = [1, 1]} : vector<2x128xf32> to vector<2x32xf32>
    %432 = arith.negf %431 : vector<2x32xf32>
    %433 = math.exp %432 : vector<2x32xf32>
    %cst_76 = arith.constant 1.000000e+00 : f32
    %434 = vector.broadcast %cst_76 : f32 to vector<2x32xf32>
    %435 = arith.addf %434, %433 : vector<2x32xf32>
    %436 = arith.divf %434, %435 : vector<2x32xf32>
    %437 = vector.extract_strided_slice %430 {offsets = [0, 32], sizes = [2, 32], strides = [1, 1]} : vector<2x128xf32> to vector<2x32xf32>
    %438 = arith.negf %437 : vector<2x32xf32>
    %439 = math.exp %438 : vector<2x32xf32>
    %cst_77 = arith.constant 1.000000e+00 : f32
    %440 = vector.broadcast %cst_77 : f32 to vector<2x32xf32>
    %441 = arith.addf %440, %439 : vector<2x32xf32>
    %442 = arith.divf %440, %441 : vector<2x32xf32>
    %443 = vector.extract_strided_slice %430 {offsets = [0, 64], sizes = [2, 32], strides = [1, 1]} : vector<2x128xf32> to vector<2x32xf32>
    %444 = math.tanh %443 : vector<2x32xf32>
    %445 = vector.extract_strided_slice %430 {offsets = [0, 96], sizes = [2, 32], strides = [1, 1]} : vector<2x128xf32> to vector<2x32xf32>
    %446 = arith.negf %445 : vector<2x32xf32>
    %447 = math.exp %446 : vector<2x32xf32>
    %cst_78 = arith.constant 1.000000e+00 : f32
    %448 = vector.broadcast %cst_78 : f32 to vector<2x32xf32>
    %449 = arith.addf %448, %447 : vector<2x32xf32>
    %450 = arith.divf %448, %449 : vector<2x32xf32>
    %451 = arith.mulf %442, %424 : vector<2x32xf32>
    %452 = arith.mulf %436, %444 : vector<2x32xf32>
    %453 = arith.addf %451, %452 : vector<2x32xf32>
    %454 = math.tanh %453 : vector<2x32xf32>
    %455 = arith.mulf %450, %454 : vector<2x32xf32>
    %456 = vector.extract_strided_slice %249 {offsets = [7, 0, 0], sizes = [1, 2, 128], strides = [1, 1, 1]} : vector<8x2x128xf32> to vector<1x2x128xf32>
    %457 = vector.shape_cast %456 : vector<1x2x128xf32> to vector<2x128xf32>
    %cst_79 = arith.constant dense<0.000000e+00> : vector<2x128xf32>
    %458 = tpu.matmul %455, %250, %cst_79 {dimension_numbers = #tpu.dot_dimension_numbers<[1], [0], [0], [1], [0, 0, 1, 1], [], []>} : vector<2x32xf32>, vector<32x128xf32>, vector<2x128xf32> -> vector<2x128xf32>
    %459 = arith.addf %457, %458 : vector<2x128xf32>
    %460 = vector.extract_strided_slice %459 {offsets = [0, 0], sizes = [2, 32], strides = [1, 1]} : vector<2x128xf32> to vector<2x32xf32>
    %461 = arith.negf %460 : vector<2x32xf32>
    %462 = math.exp %461 : vector<2x32xf32>
    %cst_80 = arith.constant 1.000000e+00 : f32
    %463 = vector.broadcast %cst_80 : f32 to vector<2x32xf32>
    %464 = arith.addf %463, %462 : vector<2x32xf32>
    %465 = arith.divf %463, %464 : vector<2x32xf32>
    %466 = vector.extract_strided_slice %459 {offsets = [0, 32], sizes = [2, 32], strides = [1, 1]} : vector<2x128xf32> to vector<2x32xf32>
    %467 = arith.negf %466 : vector<2x32xf32>
    %468 = math.exp %467 : vector<2x32xf32>
    %cst_81 = arith.constant 1.000000e+00 : f32
    %469 = vector.broadcast %cst_81 : f32 to vector<2x32xf32>
    %470 = arith.addf %469, %468 : vector<2x32xf32>
    %471 = arith.divf %469, %470 : vector<2x32xf32>
    %472 = vector.extract_strided_slice %459 {offsets = [0, 64], sizes = [2, 32], strides = [1, 1]} : vector<2x128xf32> to vector<2x32xf32>
    %473 = math.tanh %472 : vector<2x32xf32>
    %474 = vector.extract_strided_slice %459 {offsets = [0, 96], sizes = [2, 32], strides = [1, 1]} : vector<2x128xf32> to vector<2x32xf32>
    %475 = arith.negf %474 : vector<2x32xf32>
    %476 = math.exp %475 : vector<2x32xf32>
    %cst_82 = arith.constant 1.000000e+00 : f32
    %477 = vector.broadcast %cst_82 : f32 to vector<2x32xf32>
    %478 = arith.addf %477, %476 : vector<2x32xf32>
    %479 = arith.divf %477, %478 : vector<2x32xf32>
    %480 = arith.mulf %471, %453 : vector<2x32xf32>
    %481 = arith.mulf %465, %473 : vector<2x32xf32>
    %482 = arith.addf %480, %481 : vector<2x32xf32>
    %483 = math.tanh %482 : vector<2x32xf32>
    %484 = arith.mulf %479, %483 : vector<2x32xf32>
    %485 = vector.shape_cast %281 : vector<2x32xf32> to vector<2x1x32xf32>
    %486 = vector.shape_cast %310 : vector<2x32xf32> to vector<2x1x32xf32>
    %487 = vector.shape_cast %339 : vector<2x32xf32> to vector<2x1x32xf32>
    %488 = vector.shape_cast %368 : vector<2x32xf32> to vector<2x1x32xf32>
    %489 = vector.shape_cast %397 : vector<2x32xf32> to vector<2x1x32xf32>
    %490 = vector.shape_cast %426 : vector<2x32xf32> to vector<2x1x32xf32>
    %491 = vector.shape_cast %455 : vector<2x32xf32> to vector<2x1x32xf32>
    %492 = vector.shape_cast %484 : vector<2x32xf32> to vector<2x1x32xf32>
    %493 = tpu.concatenate %485, %486, %487, %488, %489, %490, %491, %492 in 1 : vector<2x1x32xf32>, vector<2x1x32xf32>, vector<2x1x32xf32>, vector<2x1x32xf32>, vector<2x1x32xf32>, vector<2x1x32xf32>, vector<2x1x32xf32>, vector<2x1x32xf32> -> vector<2x8x32xf32>
    %c0_83 = arith.constant 0 : index
    %c0_84 = arith.constant 0 : index
    %c0_85 = arith.constant 0 : index
    %494 = vector.load %arg9[%c0_83, %c0_84, %c0_85] : memref<2x8x32xf32, #tpu.memory_space<vmem>>, vector<2x8x32xf32>
    tpu.vector_store %arg9[%c0_83, %c0_84, %c0_85], %493 {strides = array<i32>} : memref<2x8x32xf32, #tpu.memory_space<vmem>>, vector<2x8x32xf32>,
    %495 = vector.shape_cast %493 : vector<2x8x32xf32> to vector<16x32xf32>
    %c0_86 = arith.constant 0 : index
    %c0_87 = arith.constant 0 : index
    %496 = vector.load %arg7[%c0_86, %c0_87] : memref<32x32xf32, #tpu.memory_space<vmem>>, vector<32x32xf32>
    %cst_88 = arith.constant dense<0.000000e+00> : vector<16x32xf32>
    %497 = tpu.matmul %495, %496, %cst_88 {dimension_numbers = #tpu.dot_dimension_numbers<[1], [0], [0], [1], [0, 0, 1, 1], [], []>} : vector<16x32xf32>, vector<32x32xf32>, vector<16x32xf32> -> vector<16x32xf32>
    %c0_89 = arith.constant 0 : index
    %c0_90 = arith.constant 0 : index
    %498 = vector.load %arg8[%c0_89, %c0_90] : memref<1x32xf32, #tpu.memory_space<vmem>>, vector<1x32xf32>
    %499 = vector.broadcast %498 : vector<1x32xf32> to vector<16x32xf32>
    %500 = arith.addf %497, %499 : vector<16x32xf32>
    %501 = vector.shape_cast %500 : vector<16x32xf32> to vector<2x8x32xf32>
    %c0_91 = arith.constant 0 : index
    %c0_92 = arith.constant 0 : index
    %c0_93 = arith.constant 0 : index
    %502 = vector.load %arg10[%c0_91, %c0_92, %c0_93] : memref<2x8x32xf32, #tpu.memory_space<vmem>>, vector<2x8x32xf32>
    tpu.vector_store %arg10[%c0_91, %c0_92, %c0_93], %501 {strides = array<i32>} : memref<2x8x32xf32, #tpu.memory_space<vmem>>, vector<2x8x32xf32>,
    %c0_94 = arith.constant 0 : index
    %c0_95 = arith.constant 0 : index
    %c0_96 = arith.constant 0 : index
    %503 = vector.load %arg11[%c0_94, %c0_95, %c0_96] : memref<2x2x32xf32, #tpu.memory_space<vmem>>, vector<1x2x32xf32>
    %504 = vector.shape_cast %503 : vector<1x2x32xf32> to vector<2x32xf32>
    %505 = vector.shape_cast %242 : vector<2x32xf32> to vector<1x2x32xf32>
    tpu.vector_store %arg11[%c0_94, %c0_95, %c0_96], %505 {strides = array<i32>} : memref<2x2x32xf32, #tpu.memory_space<vmem>>, vector<1x2x32xf32>,
    %c1 = arith.constant 1 : index
    %c0_97 = arith.constant 0 : index
    %c0_98 = arith.constant 0 : index
    %506 = vector.load %arg11[%c1, %c0_97, %c0_98] : memref<2x2x32xf32, #tpu.memory_space<vmem>>, vector<1x2x32xf32>
    %507 = vector.shape_cast %506 : vector<1x2x32xf32> to vector<2x32xf32>
    %508 = vector.shape_cast %484 : vector<2x32xf32> to vector<1x2x32xf32>
    tpu.vector_store %arg11[%c1, %c0_97, %c0_98], %508 {strides = array<i32>} : memref<2x2x32xf32, #tpu.memory_space<vmem>>, vector<1x2x32xf32>,
    %c0_99 = arith.constant 0 : index
    %c0_100 = arith.constant 0 : index
    %c0_101 = arith.constant 0 : index
    %509 = vector.load %arg12[%c0_99, %c0_100, %c0_101] : memref<2x2x32xf32, #tpu.memory_space<vmem>>, vector<1x2x32xf32>
    %510 = vector.shape_cast %509 : vector<1x2x32xf32> to vector<2x32xf32>
    %511 = vector.shape_cast %240 : vector<2x32xf32> to vector<1x2x32xf32>
    tpu.vector_store %arg12[%c0_99, %c0_100, %c0_101], %511 {strides = array<i32>} : memref<2x2x32xf32, #tpu.memory_space<vmem>>, vector<1x2x32xf32>,
    %c1_102 = arith.constant 1 : index
    %c0_103 = arith.constant 0 : index
    %c0_104 = arith.constant 0 : index
    %512 = vector.load %arg12[%c1_102, %c0_103, %c0_104] : memref<2x2x32xf32, #tpu.memory_space<vmem>>, vector<1x2x32xf32>
    %513 = vector.shape_cast %512 : vector<1x2x32xf32> to vector<2x32xf32>
    %514 = vector.shape_cast %482 : vector<2x32xf32> to vector<1x2x32xf32>
    tpu.vector_store %arg12[%c1_102, %c0_103, %c0_104], %514 {strides = array<i32>} : memref<2x2x32xf32, #tpu.memory_space<vmem>>, vector<1x2x32xf32>,
    return
  }
}

</mosaic_0001>

<llo_original>
// kernel: seq2seq_forward.3
$region0: #{seq2seq_forward.3}
  #allocation0 [shape = 'u32[]', space=smem, size = 0x4, offset = 0x4, fixed_abs, tag = 'smem constant byte address 0x4 - core index']
  #allocation1 [shape = 'u32[72,128]{1,0:T(1,128)}', space=vmem, size = 0x9000, scoped, tag = 'internal scratch']
  %s0 = inlined_call_operand.vmem [shape: s32[6,2], index: 0, kind: input, shape index: {}]
  %s1 = inlined_call_operand.vmem [shape: s32[5], index: 1, kind: input, shape index: {}]
  %s2 = inlined_call_operand.vmem [shape: f32[2,2,32], index: 2, kind: input, shape index: {}]
  %s3 = inlined_call_operand.vmem [shape: f32[2,2,32], index: 3, kind: input, shape index: {}]
  %s4 = inlined_call_operand.vmem [shape: f32[2,8,32], index: 4, kind: input, shape index: {}]
  %s5 = inlined_call_operand.vmem [shape: f32[2,8,32], index: 5, kind: input, shape index: {}]
  %s6 = inlined_call_operand.hbm [shape: f32[32,32], index: 6, kind: input, shape index: {}]
  %s7 = inlined_call_operand.vmem [shape: f32[1,32], index: 7, kind: input, shape index: {}]
  %s8 = inlined_call_operand.vmem [shape: f32[128,32], index: 8, kind: input, shape index: {}]
  %s9 = inlined_call_operand.vmem [shape: f32[96,128], index: 9, kind: input, shape index: {}]
  %s10 = inlined_call_operand.vmem [shape: f32[1,128], index: 10, kind: input, shape index: {}]
  %s11 = inlined_call_operand.vmem [shape: f32[64,128], index: 11, kind: input, shape index: {}]
  %s12 = inlined_call_operand.vmem [shape: f32[1,128], index: 12, kind: input, shape index: {}]
  %s13 = inlined_call_operand.vmem [shape: f32[96,128], index: 13, kind: input, shape index: {}]
  %s14 = inlined_call_operand.vmem [shape: f32[1,128], index: 14, kind: input, shape index: {}]
  %s15 = inlined_call_operand.vmem [shape: f32[5,2,128], index: 15, kind: output, shape index: {}]
  %s16 = sld [smem:[#allocation0]]
  $region82: #{seq2seq_forward.3} parent=0
    _
  %s18 = ssub.s32 1, %s16
  %s19 = scalar_select 0, %s18, %s16
  $region1: #{seq2seq_forward.3} parent=0
    #allocation2 [shape = 'u8[4096]{0}', space=smem, size = 0x1000, scoped, tag = 'input window, operand 0, single buffered']
    #allocation3 [shape = 's32[1]{0}', space=sflag, size = 0x4, scoped, tag = 'scoped memory for seq2seq_forward.3']
    #allocation4 [shape = 's32[1]{0}', space=sflag, size = 0x4, scoped, tag = 'scoped memory for seq2seq_forward.3']
    #allocation5 [shape = 'u8[512]{0}', space=smem, size = 0x200, scoped, tag = 'input window, operand 1, single buffered']
    #allocation6 [shape = 's32[1]{0}', space=sflag, size = 0x4, scoped, tag = 'scoped memory for seq2seq_forward.3']
    #allocation7 [shape = 'u8[16384]{0}', space=vmem, size = 0x4000, scoped, tag = 'input window, operand 6, single buffered']
    %20 = vsyncpa [#allocation4], 0
    %21 = vsyncpa [#allocation6], 0
    %22 = vsyncpa [#allocation3], 0
    // Predicated region
    $region2: #{seq2seq_forward.3} parent=1 // pred_check
      _
    $region3: #{seq2seq_forward.3} parent=1 // pred_check_branch
      %24 = sbr.rel (0) target = $region5
    $region4: #{seq2seq_forward.3} parent=1 // pred_region
      %26 = vsyncadd [#allocation4], 0
      %s28 = sshll.u32 %s0, 4
      %s29 = int_to_ptr.vmem [resolvable:$true] %s28
      %31 = dma.vmem_to_smem %s29, 128, [#allocation2], [#allocation4]
    $region5: #{seq2seq_forward.3} parent=1 // pred_fallthru
      _
    // Predicated region
    $region6: #{seq2seq_forward.3} parent=1 // pred_check
      _
    $region7: #{seq2seq_forward.3} parent=1 // pred_check_branch
      %33 = sbr.rel (0) target = $region9
    $region8: #{seq2seq_forward.3} parent=1 // pred_region
      %35 = vsyncadd [#allocation6], 0
      %s37 = sshll.u32 %s1, 4
      %s38 = int_to_ptr.vmem [resolvable:$true] %s37
      %40 = dma.vmem_to_smem %s38, 16, [#allocation5], [#allocation6]
    $region9: #{seq2seq_forward.3} parent=1 // pred_fallthru
      _
    // Predicated region
    $region10: #{seq2seq_forward.3} parent=1 // pred_check
      _
    $region11: #{seq2seq_forward.3} parent=1 // pred_check_branch
      %42 = sbr.rel (0) target = $region13
    $region12: #{seq2seq_forward.3} parent=1 // pred_region
      _
    $region13: #{seq2seq_forward.3} parent=1 // pred_fallthru
      _
    // Predicated region
    $region14: #{seq2seq_forward.3} parent=1 // pred_check
      _
    $region15: #{seq2seq_forward.3} parent=1 // pred_check_branch
      %44 = sbr.rel (0) target = $region17
    $region16: #{seq2seq_forward.3} parent=1 // pred_region
      _
    $region17: #{seq2seq_forward.3} parent=1 // pred_fallthru
      _
    // Predicated region
    $region18: #{seq2seq_forward.3} parent=1 // pred_check
      _
    $region19: #{seq2seq_forward.3} parent=1 // pred_check_branch
      %46 = sbr.rel (0) target = $region21
    $region20: #{seq2seq_forward.3} parent=1 // pred_region
      _
    $region21: #{seq2seq_forward.3} parent=1 // pred_fallthru
      _
    // Predicated region
    $region22: #{seq2seq_forward.3} parent=1 // pred_check
      _
    $region23: #{seq2seq_forward.3} parent=1 // pred_check_branch
      %48 = sbr.rel (0) target = $region25
    $region24: #{seq2seq_forward.3} parent=1 // pred_region
      _
    $region25: #{seq2seq_forward.3} parent=1 // pred_fallthru
      _
    // Predicated region
    $region26: #{seq2seq_forward.3} parent=1 // pred_check
      _
    $region27: #{seq2seq_forward.3} parent=1 // pred_check_branch
      %50 = sbr.rel (0) target = $region29
    $region28: #{seq2seq_forward.3} parent=1 // pred_region
      %52 = vsyncadd [#allocation3], 0
      %s53 = sshll.u32 %s6, 4
      %s54 = int_to_ptr.hbm [resolvable:$true] %s53
      %s55 = sshll.u32 [#allocation7], 4
      %s56 = int_to_ptr.vmem [resolvable:$true] %s55
      %61 = dma.hbm_to_vmem [thread:$0]  %s54, 512, %s56, [#allocation3], 128, 128, 8
    $region29: #{seq2seq_forward.3} parent=1 // pred_fallthru
      _
    // Predicated region
    $region30: #{seq2seq_forward.3} parent=1 // pred_check
      _
    $region31: #{seq2seq_forward.3} parent=1 // pred_check_branch
      %63 = sbr.rel (0) target = $region33
    $region32: #{seq2seq_forward.3} parent=1 // pred_region
      _
    $region33: #{seq2seq_forward.3} parent=1 // pred_fallthru
      _
    // Predicated region
    $region34: #{seq2seq_forward.3} parent=1 // pred_check
      _
    $region35: #{seq2seq_forward.3} parent=1 // pred_check_branch
      %65 = sbr.rel (0) target = $region37
    $region36: #{seq2seq_forward.3} parent=1 // pred_region
      _
    $region37: #{seq2seq_forward.3} parent=1 // pred_fallthru
      _
    // Predicated region
    $region38: #{seq2seq_forward.3} parent=1 // pred_check
      _
    $region39: #{seq2seq_forward.3} parent=1 // pred_check_branch
      %67 = sbr.rel (0) target = $region41
    $region40: #{seq2seq_forward.3} parent=1 // pred_region
      _
    $region41: #{seq2seq_forward.3} parent=1 // pred_fallthru
      _
    // Predicated region
    $region42: #{seq2seq_forward.3} parent=1 // pred_check
      _
    $region43: #{seq2seq_forward.3} parent=1 // pred_check_branch
      %69 = sbr.rel (0) target = $region45
    $region44: #{seq2seq_forward.3} parent=1 // pred_region
      _
    $region45: #{seq2seq_forward.3} parent=1 // pred_fallthru
      _
    // Predicated region
    $region46: #{seq2seq_forward.3} parent=1 // pred_check
      _
    $region47: #{seq2seq_forward.3} parent=1 // pred_check_branch
      %71 = sbr.rel (0) target = $region49
    $region48: #{seq2seq_forward.3} parent=1 // pred_region
      _
    $region49: #{seq2seq_forward.3} parent=1 // pred_fallthru
      _
    // Predicated region
    $region50: #{seq2seq_forward.3} parent=1 // pred_check
      _
    $region51: #{seq2seq_forward.3} parent=1 // pred_check_branch
      %73 = sbr.rel (0) target = $region53
    $region52: #{seq2seq_forward.3} parent=1 // pred_region
      _
    $region53: #{seq2seq_forward.3} parent=1 // pred_fallthru
      _
    // Predicated region
    $region54: #{seq2seq_forward.3} parent=1 // pred_check
      _
    $region55: #{seq2seq_forward.3} parent=1 // pred_check_branch
      %75 = sbr.rel (0) target = $region57
    $region56: #{seq2seq_forward.3} parent=1 // pred_region
      _
    $region57: #{seq2seq_forward.3} parent=1 // pred_fallthru
      _
    // Predicated region
    $region58: #{seq2seq_forward.3} parent=1 // pred_check
      _
    $region59: #{seq2seq_forward.3} parent=1 // pred_check_branch
      %77 = sbr.rel (0) target = $region61
    $region60: #{seq2seq_forward.3} parent=1 // pred_region
      _
    $region61: #{seq2seq_forward.3} parent=1 // pred_fallthru
      _
    // Predicated region
    $region62: #{seq2seq_forward.3} parent=1 // pred_check
      _
    $region63: #{seq2seq_forward.3} parent=1 // pred_check_branch
      %79 = sbr.rel (0) target = $region65
    $region64: #{seq2seq_forward.3} parent=1 // pred_region
      %81 = dma.done [#allocation4], 128
    $region65: #{seq2seq_forward.3} parent=1 // pred_fallthru
      _
    // Predicated region
    $region66: #{seq2seq_forward.3} parent=1 // pred_check
      _
    $region67: #{seq2seq_forward.3} parent=1 // pred_check_branch
      %83 = sbr.rel (0) target = $region69
    $region68: #{seq2seq_forward.3} parent=1 // pred_region
      %85 = dma.done [#allocation6], 16
    $region69: #{seq2seq_forward.3} parent=1 // pred_fallthru
      _
    // Predicated region
    $region70: #{seq2seq_forward.3} parent=1 // pred_check
      _
    $region71: #{seq2seq_forward.3} parent=1 // pred_check_branch
      %87 = sbr.rel (0) target = $region73
    $region72: #{seq2seq_forward.3} parent=1 // pred_region
      %89 = dma.done [#allocation3], 512
    $region73: #{seq2seq_forward.3} parent=1 // pred_fallthru
      _
    %90 = sfence
    %v91 = vld [vmem:[%s4] sm:$0xff]
    %v92 = vld [vmem:[%s4 + $0x8] sm:$0xff]
    %v93 = vld [vmem:[%s5] sm:$0xff]
    %v94 = vld [vmem:[%s5 + $0x8] sm:$0xff]
    %v95 = vld [vmem:[#allocation7] sm:$0xff]
    %v96 = vld [vmem:[#allocation7 + $0x8] sm:$0xff]
    %v97 = vld [vmem:[#allocation7 + $0x10] sm:$0xff]
    %v98 = vld [vmem:[#allocation7 + $0x18] sm:$0xff]
    %v99 = vld [vmem:[%s7] sm:$0x1]
    %v100 = vld [vmem:[%s8] sm:$0xff]
    %v101 = vld [vmem:[%s8 + $0x8] sm:$0xff]
    %v102 = vld [vmem:[%s8 + $0x10] sm:$0xff]
    %v103 = vld [vmem:[%s8 + $0x18] sm:$0xff]
    %v104 = vld [vmem:[%s8 + $0x20] sm:$0xff]
    %v105 = vld [vmem:[%s8 + $0x28] sm:$0xff]
    %v106 = vld [vmem:[%s8 + $0x30] sm:$0xff]
    %v107 = vld [vmem:[%s8 + $0x38] sm:$0xff]
    %v108 = vld [vmem:[%s8 + $0x40] sm:$0xff]
    %v109 = vld [vmem:[%s8 + $0x48] sm:$0xff]
    %v110 = vld [vmem:[%s8 + $0x50] sm:$0xff]
    %v111 = vld [vmem:[%s8 + $0x58] sm:$0xff]
    %v112 = vld [vmem:[%s8 + $0x60] sm:$0xff]
    %v113 = vld [vmem:[%s8 + $0x68] sm:$0xff]
    %v114 = vld [vmem:[%s8 + $0x70] sm:$0xff]
    %v115 = vld [vmem:[%s8 + $0x78] sm:$0xff]
    %v116 = vld [vmem:[%s9] sm:$0xff]
    %v117 = vld [vmem:[%s9 + $0x8] sm:$0xff]
    %v118 = vld [vmem:[%s9 + $0x10] sm:$0xff]
    %v119 = vld [vmem:[%s9 + $0x18] sm:$0xff]
    %v120 = vld [vmem:[%s9 + $0x20] sm:$0xff]
    %v121 = vld [vmem:[%s9 + $0x28] sm:$0xff]
    %v122 = vld [vmem:[%s9 + $0x30] sm:$0xff]
    %v123 = vld [vmem:[%s9 + $0x38] sm:$0xff]
    %v124 = vld [vmem:[%s9 + $0x40] sm:$0xff]
    %v125 = vld [vmem:[%s9 + $0x48] sm:$0xff]
    %v126 = vld [vmem:[%s9 + $0x50] sm:$0xff]
    %v127 = vld [vmem:[%s9 + $0x58] sm:$0xff]
    %v128 = vld [vmem:[%s10] sm:$0x1]
    %v129 = vld [vmem:[%s11] sm:$0xff]
    %v130 = vld [vmem:[%s11 + $0x8] sm:$0xff]
    %v131 = vld [vmem:[%s11 + $0x10] sm:$0xff]
    %v132 = vld [vmem:[%s11 + $0x18] sm:$0xff]
    %v133 = vld [vmem:[%s11 + $0x20] sm:$0xff]
    %v134 = vld [vmem:[%s11 + $0x28] sm:$0xff]
    %v135 = vld [vmem:[%s11 + $0x30] sm:$0xff]
    %v136 = vld [vmem:[%s11 + $0x38] sm:$0xff]
    %v137 = vld [vmem:[%s12] sm:$0x1]
    %v138 = vld [vmem:[%s13] sm:$0xff]
    %v139 = vld [vmem:[%s13 + $0x8] sm:$0xff]
    %v140 = vld [vmem:[%s13 + $0x10] sm:$0xff]
    %v141 = vld [vmem:[%s13 + $0x18] sm:$0xff]
    %v142 = vld [vmem:[%s13 + $0x20] sm:$0xff]
    %v143 = vld [vmem:[%s13 + $0x28] sm:$0xff]
    %v144 = vld [vmem:[%s13 + $0x30] sm:$0xff]
    %v145 = vld [vmem:[%s13 + $0x38] sm:$0xff]
    %v146 = vld [vmem:[%s13 + $0x40] sm:$0xff]
    %v147 = vld [vmem:[%s13 + $0x48] sm:$0xff]
    %v148 = vld [vmem:[%s13 + $0x50] sm:$0xff]
    %v149 = vld [vmem:[%s13 + $0x58] sm:$0xff]
    %v150 = vld [vmem:[%s14] sm:$0x1]
    %v151 = vlaneseq
    %v152 = vand.u32 %v151, 127
    %v153 = vld [vmem:[%s2] sm:$0x3]
    %s154 = scalar_lea.vmem %s2, 2
    %v155 = vld [vmem:[%s154] sm:$0x3]
    %v156 = vld [vmem:[%s3] sm:$0x3]
    %s157 = scalar_lea.vmem %s3, 2
    %v158 = vld [vmem:[%s157] sm:$0x3]
    %s159 = sld [smem:[#allocation2]]
    %v160 = vstv %s159
    %vm161 = vcmp.eq.s32.totalorder %v152, %v160
    %v162 = vsel %vm161, 1, 0
    %v163 = vcvt.s32.f32 %v162
    %s164 = sld [smem:[#allocation2 + $0x1]]
    %v165 = vstv %s164
    %vm166 = vcmp.eq.s32.totalorder %v152, %v165
    %v167 = vsel %vm166, 1, 0
    %v168 = vcvt.s32.f32 %v167
    %vm169 = vcmask 1040384
    %v170 = vsel %vm169, %v163, %v168
    %171 = vmatpush.msra.mxu0 %v115
    %172 = vmatpush.msra.mxu0 %v114
    %173 = vmatpush.msra.mxu0 %v113
    %174 = vmatpush.msra.mxu0 %v112
    %175 = vmatpush.msra.mxu0 %v111
    %176 = vmatpush.msra.mxu0 %v110
    %177 = vmatpush.msra.mxu0 %v109
    %178 = vmatpush.msra.mxu0 %v108
    %179 = vmatpush.msra.mxu0 %v107
    %180 = vmatpush.msra.mxu0 %v106
    %181 = vmatpush.msra.mxu0 %v105
    %182 = vmatpush.msra.mxu0 %v104
    %183 = vmatpush.msra.mxu0 %v103
    %184 = vmatpush.msra.mxu0 %v102
    %185 = vmatpush.msra.mxu0 %v101
    %186 = vmatpush.msra.mxu0 %v100
    %187 = vmatmul.f32.gmra.mxu0 %v170
    %v188 = vpop.f32.mrf.mxu0
    %v189 = vadd.f32 0.0, %v188
    %190 = vdwg.mxu0
    %vm191 = vcmask 261120
    %v193 = vsel %vm191, %v155, 0
    %195 = vmatpush.msra.mxu0 0.0
    %196 = vmatpush.msra.mxu0 0.0
    %197 = vmatpush.msra.mxu0 0.0
    %198 = vmatpush.msra.mxu0 0.0
    %199 = vmatpush.msra.mxu0 0.0
    %200 = vmatpush.msra.mxu0 0.0
    %201 = vmatpush.msra.mxu0 0.0
    %202 = vmatpush.msra.mxu0 0.0
    %203 = vmatpush.msra.mxu0 0.0
    %204 = vmatpush.msra.mxu0 0.0
    %205 = vmatpush.msra.mxu0 0.0
    %206 = vmatpush.msra.mxu0 0.0
    %207 = vmatpush.msra.mxu0 %v98
    %208 = vmatpush.msra.mxu0 %v97
    %209 = vmatpush.msra.mxu0 %v96
    %210 = vmatpush.msra.mxu0 %v95
    %211 = vmatmul.f32.gmra.mxu0 %v193
    %v212 = vpop.f32.mrf.mxu0
    %v213 = vadd.f32 0.0, %v212
    %214 = vdwg.mxu0
    %v216 = vrot.slane %v213, 1
    %v217 = vperm.slane %v213, 0
    %v218 = vperm.slane %v216, 0
    %v221 = vadd.f32 %v217, %v93
    %v222 = vadd.f32 %v218, %v94
    %v223 = vtanh.pop %v221
    %v224 = vtanh.pop %v222
    %v226 = vperm.slane %v99, 0
    %v228 = vmul.f32 %v223, %v226
    %v229 = vmul.f32 %v224, %v226
    %v230 = vsel %vm191, %v228, 0.0
    %231 = vadd.xlane.f32.xlu0 %v230
    %v232 = vpop.xlane.xlu0 %231
    %v233 = vsel %vm191, %v229, 0.0
    %234 = vadd.xlane.f32.xlu0 %v233
    %v235 = vpop.xlane.xlu0 %234
    %v238 = vperm.slane %v232, %v152
    %v239 = vperm.slane %v235, %v152
    %vm240 = vcmask 1041409
    %v241 = vsel %vm240, %v239, %v238
    %vm243 = vcmask 58368
    %v244 = vsel %vm243, %v241, -inf
    %245 = vmax.xlane.f32.xlu0 %v244
    %v246 = vpop.xlane.xlu0 %245
    %v248 = vperm.slane %v246, 0
    %v249 = vperm.slane %v246, 1
    %v252 = vsub.f32 %v232, %v248
    %v253 = vsub.f32 %v235, %v249
    %v254 = vmul.f32 %v252, 1.442695
    %v255 = vpow.pop %v254
    %v256 = vmul.f32 %v253, 1.442695
    %v257 = vpow.pop %v256
    %260 = vset.pattern.permute.xlu0 0
    %261 = vperm.xlu0 %260, %v255
    %v262 = vpop.permute.xlu0 %261
    %263 = vset.pattern.permute.xlu0 0
    %264 = vperm.xlu0 %263, %v257
    %v265 = vpop.permute.xlu0 %264
    %v266 = vperm.slane %v262, %v152
    %v267 = vperm.slane %v265, %v152
    %v268 = vsel %vm240, %v267, %v266
    %v270 = vsel %vm243, %v268, 0.0
    %271 = vadd.xlane.f32.xlu0 %v270
    %v272 = vpop.xlane.xlu0 %271
    %v273 = vrcp.pop %v272
    %v275 = vperm.slane %v273, 0
    %v276 = vperm.slane %v273, 1
    %v279 = vmul.f32 %v255, %v275
    %v280 = vmul.f32 %v257, %v276
    %282 = vset.pattern.permute.xlu0 0
    %283 = vperm.xlu0 %282, %v279
    %v284 = vpop.permute.xlu0 %283
    %v285 = vperm.slane %v284, %v152
    %vm286 = vcmask 64512
    %v287 = vsel %vm286, %v285, 0
    %289 = vmatpush.msra.mxu0 0.0
    %290 = vmatpush.msra.mxu0 0.0
    %291 = vmatpush.msra.mxu0 0.0
    %292 = vmatpush.msra.mxu0 0.0
    %293 = vmatpush.msra.mxu0 0.0
    %294 = vmatpush.msra.mxu0 0.0
    %295 = vmatpush.msra.mxu0 0.0
    %296 = vmatpush.msra.mxu0 0.0
    %297 = vmatpush.msra.mxu0 0.0
    %298 = vmatpush.msra.mxu0 0.0
    %299 = vmatpush.msra.mxu0 0.0
    %300 = vmatpush.msra.mxu0 0.0
    %301 = vmatpush.msra.mxu0 0.0
    %302 = vmatpush.msra.mxu0 0.0
    %303 = vmatpush.msra.mxu0 0.0
    %304 = vmatpush.msra.mxu0 %v91
    %305 = vmatmul.f32.gmra.mxu0 %v287
    %v306 = vpop.f32.mrf.mxu0
    %v307 = vadd.f32 0.0, %v306
    %308 = vdwg.mxu0
    %310 = vset.pattern.permute.xlu0 0
    %311 = vperm.xlu0 %310, %v280
    %v312 = vpop.permute.xlu0 %311
    %v313 = vperm.slane %v312, %v152
    %v314 = vsel %vm286, %v313, 0
    %316 = vmatpush.msra.mxu0 0.0
    %317 = vmatpush.msra.mxu0 0.0
    %318 = vmatpush.msra.mxu0 0.0
    %319 = vmatpush.msra.mxu0 0.0
    %320 = vmatpush.msra.mxu0 0.0
    %321 = vmatpush.msra.mxu0 0.0
    %322 = vmatpush.msra.mxu0 0.0
    %323 = vmatpush.msra.mxu0 0.0
    %324 = vmatpush.msra.mxu0 0.0
    %325 = vmatpush.msra.mxu0 0.0
    %326 = vmatpush.msra.mxu0 0.0
    %327 = vmatpush.msra.mxu0 0.0
    %328 = vmatpush.msra.mxu0 0.0
    %329 = vmatpush.msra.mxu0 0.0
    %330 = vmatpush.msra.mxu0 0.0
    %331 = vmatpush.msra.mxu0 %v92
    %332 = vmatmul.f32.gmra.mxu0 %v314
    %v333 = vpop.f32.mrf.mxu0
    %v334 = vadd.f32 0.0, %v333
    %335 = vdwg.mxu0
    %v338 = vrot.slane %v334, 7
    %v339 = vsel %vm240, %v338, %v307
    %340 = vrot.lane.b32.xlu0 %v339, 32
    %v341 = vpop.permute.xlu0 %340
    %v343 = vsel %vm191, %v189, %v341
    %345 = vrot.lane.b32.xlu0 %v153, 64
    %v346 = vpop.permute.xlu0 %345
    %vm348 = vcmask 523264
    %v349 = vsel %vm348, %v343, %v346
    %v351 = vperm.slane %v128, 0
    %vm353 = vcmask 785408
    %v355 = vsel %vm353, %v349, 0
    %357 = vmatpush.msra.mxu0 0.0
    %358 = vmatpush.msra.mxu0 0.0
    %359 = vmatpush.msra.mxu0 0.0
    %360 = vmatpush.msra.mxu0 0.0
    %361 = vmatpush.msra.mxu0 %v127
    %362 = vmatpush.msra.mxu0 %v126
    %363 = vmatpush.msra.mxu0 %v125
    %364 = vmatpush.msra.mxu0 %v124
    %365 = vmatpush.msra.mxu0 %v123
    %366 = vmatpush.msra.mxu0 %v122
    %367 = vmatpush.msra.mxu0 %v121
    %368 = vmatpush.msra.mxu0 %v120
    %369 = vmatpush.msra.mxu0 %v119
    %370 = vmatpush.msra.mxu0 %v118
    %371 = vmatpush.msra.mxu0 %v117
    %372 = vmatpush.msra.mxu0 %v116
    %373 = vmatmul.f32.gmra.mxu0 %v355
    %v374 = vpop.f32.mrf.mxu0
    %v375 = vadd.f32 %v351, %v374
    %376 = vdwg.mxu0
    %v377 = vxor.u32 %v375, 2147483648
    %v378 = vmul.f32 %v377, 1.442695
    %v379 = vpow.pop %v378
    %v380 = vadd.f32 %v379, 1.0
    %v381 = vrcp.pop %v380
    %v382 = vmul.f32 %v380, %v381
    %v383 = vsub.f32 1.0, %v382
    %v384 = vmul.f32 %v381, %v383
    %v385 = vadd.f32 %v381, %v384
    %vm386 = vweird.f32 %v380
    %vm387 = vweird.f32 %v381
    %vm388 = vmor %vm386, %vm387
    %v389 = vsel %vm388, %v381, %v385
    %v390 = vand.u32 2147483647, %v380
    %vm391 = vcmp.eq.f32.partialorder %v390, 8.507059e+37
    %v392 = vand.u32 %v380, 2147483648
    %v393 = vor.u32 1.1754944e-38, %v392
    %v394 = vsel %vm391, %v393, %v389
    %v395 = vmul.f32 1.0, %v394
    %v396 = vtanh.pop %v375
    %398 = vrot.lane.b32.xlu0 %v156, 32
    %v399 = vpop.permute.xlu0 %398
    %v401 = vmul.f32 %v395, %v399
    %403 = vrot.lane.b32.xlu0 %v396, 64
    %v404 = vpop.permute.xlu0 %403
    %v406 = vmul.f32 %v395, %v404
    %408 = vrot.lane.b32.xlu0 %v406, 32
    %v409 = vpop.permute.xlu0 %408
    %v411 = vadd.f32 %v401, %v409
    %v412 = vtanh.pop %v411
    %414 = vrot.lane.b32.xlu0 %v412, 64
    %v415 = vpop.permute.xlu0 %414
    %v417 = vmul.f32 %v395, %v415
    %419 = vrot.lane.b32.xlu0 %v417, 32
    %v420 = vpop.permute.xlu0 %419
    %422 = vrot.lane.b32.xlu0 %v155, 32
    %v423 = vpop.permute.xlu0 %422
    %v425 = vsel %vm191, %v420, %v423
    %v427 = vperm.slane %v137, 0
    %v430 = vsel %vm348, %v425, 0
    %432 = vmatpush.msra.mxu0 0.0
    %433 = vmatpush.msra.mxu0 0.0
    %434 = vmatpush.msra.mxu0 0.0
    %435 = vmatpush.msra.mxu0 0.0
    %436 = vmatpush.msra.mxu0 0.0
    %437 = vmatpush.msra.mxu0 0.0
    %438 = vmatpush.msra.mxu0 0.0
    %439 = vmatpush.msra.mxu0 0.0
    %440 = vmatpush.msra.mxu0 %v136
    %441 = vmatpush.msra.mxu0 %v135
    %442 = vmatpush.msra.mxu0 %v134
    %443 = vmatpush.msra.mxu0 %v133
    %444 = vmatpush.msra.mxu0 %v132
    %445 = vmatpush.msra.mxu0 %v131
    %446 = vmatpush.msra.mxu0 %v130
    %447 = vmatpush.msra.mxu0 %v129
    %448 = vmatmul.f32.gmra.mxu0 %v430
    %v449 = vpop.f32.mrf.mxu0
    %v450 = vadd.f32 %v427, %v449
    %451 = vdwg.mxu0
    %v452 = vxor.u32 %v450, 2147483648
    %v453 = vmul.f32 %v452, 1.442695
    %v454 = vpow.pop %v453
    %v455 = vadd.f32 %v454, 1.0
    %v456 = vrcp.pop %v455
    %v457 = vmul.f32 %v455, %v456
    %v458 = vsub.f32 1.0, %v457
    %v459 = vmul.f32 %v456, %v458
    %v460 = vadd.f32 %v456, %v459
    %vm461 = vweird.f32 %v455
    %vm462 = vweird.f32 %v456
    %vm463 = vmor %vm461, %vm462
    %v464 = vsel %vm463, %v456, %v460
    %v465 = vand.u32 2147483647, %v455
    %vm466 = vcmp.eq.f32.partialorder %v465, 8.507059e+37
    %v467 = vand.u32 %v455, 2147483648
    %v468 = vor.u32 1.1754944e-38, %v467
    %v469 = vsel %vm466, %v468, %v464
    %v470 = vmul.f32 1.0, %v469
    %v471 = vtanh.pop %v450
    %473 = vrot.lane.b32.xlu0 %v158, 32
    %v474 = vpop.permute.xlu0 %473
    %v476 = vmul.f32 %v470, %v474
    %478 = vrot.lane.b32.xlu0 %v471, 64
    %v479 = vpop.permute.xlu0 %478
    %v481 = vmul.f32 %v470, %v479
    %483 = vrot.lane.b32.xlu0 %v481, 32
    %v484 = vpop.permute.xlu0 %483
    %v486 = vadd.f32 %v476, %v484
    %v487 = vtanh.pop %v486
    %489 = vrot.lane.b32.xlu0 %v487, 64
    %v490 = vpop.permute.xlu0 %489
    %v492 = vmul.f32 %v470, %v490
    %494 = vrot.lane.b32.xlu0 %v492, 96
    %v495 = vpop.permute.xlu0 %494
    %v497 = vsel %vm348, %v343, %v495
    %v499 = vperm.slane %v150, 0
    %v502 = vsel %vm353, %v497, 0
    %504 = vmatpush.msra.mxu0 0.0
    %505 = vmatpush.msra.mxu0 0.0
    %506 = vmatpush.msra.mxu0 0.0
    %507 = vmatpush.msra.mxu0 0.0
    %508 = vmatpush.msra.mxu0 %v149
    %509 = vmatpush.msra.mxu0 %v148
    %510 = vmatpush.msra.mxu0 %v147
    %511 = vmatpush.msra.mxu0 %v146
    %512 = vmatpush.msra.mxu0 %v145
    %513 = vmatpush.msra.mxu0 %v144
    %514 = vmatpush.msra.mxu0 %v143
    %515 = vmatpush.msra.mxu0 %v142
    %516 = vmatpush.msra.mxu0 %v141
    %517 = vmatpush.msra.mxu0 %v140
    %518 = vmatpush.msra.mxu0 %v139
    %519 = vmatpush.msra.mxu0 %v138
    %520 = vmatmul.f32.gmra.mxu0 %v502
    %v521 = vpop.f32.mrf.mxu0
    %v522 = vadd.f32 %v499, %v521
    %523 = vdwg.mxu0
    %524 = vst [vmem:[%s15] sm:$0x3] %v522
    %vm525 = vcmask 1041408
    %v526 = vsel %vm525, %v522, -inf
    %527 = vmax.xlane.f32.xlu0 %v526
    %v528 = vpop.xlane.xlu0 %527
    %vm529 = vcmp.eq.f32.partialorder %v522, %v528
    %v530 = vsel %vm529, %v152, 128
    %v531 = vsel %vm525, %v530, 2147483647
    %v532 = vand.u32 %v531, 65535
    %v533 = vshra.s32 %v531, 16
    %v534 = vcvt.s32.f32 %v532
    %v535 = vcvt.s32.f32 %v533
    %536 = vmin.xlane.f32.xlu0 %v535
    %v537 = vpop.xlane.xlu0 %536
    %vm538 = vcmp.eq.f32.partialorder %v535, %v537
    %v539 = vsel %vm538, %v534, inf
    %540 = vmin.xlane.f32.xlu0 %v539
    %v541 = vpop.xlane.xlu0 %540
    %v542 = vcvt.f32.s32 %v541
    %v543 = vcvt.f32.s32 %v537
    %v544 = vshll.u32 %v543, 16
    %v545 = vadd.s32 %v544, %v542
    %vm546 = vcmp.eq.s32.totalorder %v152, %v545
    %v547 = vsel %vm546, 1, 0
    %v548 = vcvt.s32.f32 %v547
    %s549 = sld [smem:[#allocation5]]
    %s550 = scvt.s32.f32 %s549
    %s551 = sld [smem:[#allocation2 + $0x80]]
    %v552 = vstv %s551
    %vm553 = vcmp.eq.s32.totalorder %v152, %v552
    %v554 = vsel %vm553, 1, 0
    %v555 = vcvt.s32.f32 %v554
    %s556 = sld [smem:[#allocation2 + $0x81]]
    %v557 = vstv %s556
    %vm558 = vcmp.eq.s32.totalorder %v152, %v557
    %v559 = vsel %vm558, 1, 0
    %v560 = vcvt.s32.f32 %v559
    %v561 = vsel %vm169, %v555, %v560
    %v562 = vstv %s550
    %v563 = vmul.f32 %v562, %v561
    %s564 = ssub.f32 1.0, %s550
    %v565 = vstv %s564
    %v566 = vmul.f32 %v565, %v548
    %v567 = vadd.f32 %v563, %v566
    %568 = vmatpush.msra.mxu0 %v115
    %569 = vmatpush.msra.mxu0 %v114
    %570 = vmatpush.msra.mxu0 %v113
    %571 = vmatpush.msra.mxu0 %v112
    %572 = vmatpush.msra.mxu0 %v111
    %573 = vmatpush.msra.mxu0 %v110
    %574 = vmatpush.msra.mxu0 %v109
    %575 = vmatpush.msra.mxu0 %v108
    %576 = vmatpush.msra.mxu0 %v107
    %577 = vmatpush.msra.mxu0 %v106
    %578 = vmatpush.msra.mxu0 %v105
    %579 = vmatpush.msra.mxu0 %v104
    %580 = vmatpush.msra.mxu0 %v103
    %581 = vmatpush.msra.mxu0 %v102
    %582 = vmatpush.msra.mxu0 %v101
    %583 = vmatpush.msra.mxu0 %v100
    %584 = vmatmul.f32.gmra.mxu0 %v567
    %v585 = vpop.f32.mrf.mxu0
    %v586 = vadd.f32 0.0, %v585
    %587 = vdwg.mxu0
    %588 = vrot.lane.b32.xlu0 %v492, 32
    %v589 = vpop.permute.xlu0 %588
    %v590 = vsel %vm191, %v589, 0
    %592 = vmatpush.msra.mxu0 0.0
    %593 = vmatpush.msra.mxu0 0.0
    %594 = vmatpush.msra.mxu0 0.0
    %595 = vmatpush.msra.mxu0 0.0
    %596 = vmatpush.msra.mxu0 0.0
    %597 = vmatpush.msra.mxu0 0.0
    %598 = vmatpush.msra.mxu0 0.0
    %599 = vmatpush.msra.mxu0 0.0
    %600 = vmatpush.msra.mxu0 0.0
    %601 = vmatpush.msra.mxu0 0.0
    %602 = vmatpush.msra.mxu0 0.0
    %603 = vmatpush.msra.mxu0 0.0
    %604 = vmatpush.msra.mxu0 %v98
    %605 = vmatpush.msra.mxu0 %v97
    %606 = vmatpush.msra.mxu0 %v96
    %607 = vmatpush.msra.mxu0 %v95
    %608 = vmatmul.f32.gmra.mxu0 %v590
    %v609 = vpop.f32.mrf.mxu0
    %v610 = vadd.f32 0.0, %v609
    %611 = vdwg.mxu0
    %v613 = vrot.slane %v610, 1
    %v614 = vperm.slane %v610, 0
    %v615 = vperm.slane %v613, 0
    %v618 = vadd.f32 %v614, %v93
    %v619 = vadd.f32 %v615, %v94
    %v620 = vtanh.pop %v618
    %v621 = vtanh.pop %v619
    %v622 = vmul.f32 %v620, %v226
    %v623 = vmul.f32 %v621, %v226
    %v624 = vsel %vm191, %v622, 0.0
    %625 = vadd.xlane.f32.xlu0 %v624
    %v626 = vpop.xlane.xlu0 %625
    %v627 = vsel %vm191, %v623, 0.0
    %628 = vadd.xlane.f32.xlu0 %v627
    %v629 = vpop.xlane.xlu0 %628
    %v632 = vperm.slane %v626, %v152
    %v633 = vperm.slane %v629, %v152
    %v634 = vsel %vm240, %v633, %v632
    %v636 = vsel %vm243, %v634, -inf
    %637 = vmax.xlane.f32.xlu0 %v636
    %v638 = vpop.xlane.xlu0 %637
    %v640 = vperm.slane %v638, 0
    %v641 = vperm.slane %v638, 1
    %v644 = vsub.f32 %v626, %v640
    %v645 = vsub.f32 %v629, %v641
    %v646 = vmul.f32 %v644, 1.442695
    %v647 = vpow.pop %v646
    %v648 = vmul.f32 %v645, 1.442695
    %v649 = vpow.pop %v648
    %652 = vset.pattern.permute.xlu0 0
    %653 = vperm.xlu0 %652, %v647
    %v654 = vpop.permute.xlu0 %653
    %655 = vset.pattern.permute.xlu0 0
    %656 = vperm.xlu0 %655, %v649
    %v657 = vpop.permute.xlu0 %656
    %v658 = vperm.slane %v654, %v152
    %v659 = vperm.slane %v657, %v152
    %v660 = vsel %vm240, %v659, %v658
    %v662 = vsel %vm243, %v660, 0.0
    %663 = vadd.xlane.f32.xlu0 %v662
    %v664 = vpop.xlane.xlu0 %663
    %v665 = vrcp.pop %v664
    %v667 = vperm.slane %v665, 0
    %v668 = vperm.slane %v665, 1
    %v671 = vmul.f32 %v647, %v667
    %v672 = vmul.f32 %v649, %v668
    %674 = vset.pattern.permute.xlu0 0
    %675 = vperm.xlu0 %674, %v671
    %v676 = vpop.permute.xlu0 %675
    %v677 = vperm.slane %v676, %v152
    %v678 = vsel %vm286, %v677, 0
    %680 = vmatpush.msra.mxu0 0.0
    %681 = vmatpush.msra.mxu0 0.0
    %682 = vmatpush.msra.mxu0 0.0
    %683 = vmatpush.msra.mxu0 0.0
    %684 = vmatpush.msra.mxu0 0.0
    %685 = vmatpush.msra.mxu0 0.0
    %686 = vmatpush.msra.mxu0 0.0
    %687 = vmatpush.msra.mxu0 0.0
    %688 = vmatpush.msra.mxu0 0.0
    %689 = vmatpush.msra.mxu0 0.0
    %690 = vmatpush.msra.mxu0 0.0
    %691 = vmatpush.msra.mxu0 0.0
    %692 = vmatpush.msra.mxu0 0.0
    %693 = vmatpush.msra.mxu0 0.0
    %694 = vmatpush.msra.mxu0 0.0
    %695 = vmatpush.msra.mxu0 %v91
    %696 = vmatmul.f32.gmra.mxu0 %v678
    %v697 = vpop.f32.mrf.mxu0
    %v698 = vadd.f32 0.0, %v697
    %699 = vdwg.mxu0
    %701 = vset.pattern.permute.xlu0 0
    %702 = vperm.xlu0 %701, %v672
    %v703 = vpop.permute.xlu0 %702
    %v704 = vperm.slane %v703, %v152
    %v705 = vsel %vm286, %v704, 0
    %707 = vmatpush.msra.mxu0 0.0
    %708 = vmatpush.msra.mxu0 0.0
    %709 = vmatpush.msra.mxu0 0.0
    %710 = vmatpush.msra.mxu0 0.0
    %711 = vmatpush.msra.mxu0 0.0
    %712 = vmatpush.msra.mxu0 0.0
    %713 = vmatpush.msra.mxu0 0.0
    %714 = vmatpush.msra.mxu0 0.0
    %715 = vmatpush.msra.mxu0 0.0
    %716 = vmatpush.msra.mxu0 0.0
    %717 = vmatpush.msra.mxu0 0.0
    %718 = vmatpush.msra.mxu0 0.0
    %719 = vmatpush.msra.mxu0 0.0
    %720 = vmatpush.msra.mxu0 0.0
    %721 = vmatpush.msra.mxu0 0.0
    %722 = vmatpush.msra.mxu0 %v92
    %723 = vmatmul.f32.gmra.mxu0 %v705
    %v724 = vpop.f32.mrf.mxu0
    %v725 = vadd.f32 0.0, %v724
    %726 = vdwg.mxu0
    %v729 = vrot.slane %v725, 7
    %v730 = vsel %vm240, %v729, %v698
    %731 = vrot.lane.b32.xlu0 %v730, 32
    %v732 = vpop.permute.xlu0 %731
    %v734 = vsel %vm191, %v586, %v732
    %735 = vrot.lane.b32.xlu0 %v417, 96
    %v736 = vpop.permute.xlu0 %735
    %v738 = vsel %vm348, %v734, %v736
    %v740 = vsel %vm353, %v738, 0
    %742 = vmatpush.msra.mxu0 0.0
    %743 = vmatpush.msra.mxu0 0.0
    %744 = vmatpush.msra.mxu0 0.0
    %745 = vmatpush.msra.mxu0 0.0
    %746 = vmatpush.msra.mxu0 %v127
    %747 = vmatpush.msra.mxu0 %v126
    %748 = vmatpush.msra.mxu0 %v125
    %749 = vmatpush.msra.mxu0 %v124
    %750 = vmatpush.msra.mxu0 %v123
    %751 = vmatpush.msra.mxu0 %v122
    %752 = vmatpush.msra.mxu0 %v121
    %753 = vmatpush.msra.mxu0 %v120
    %754 = vmatpush.msra.mxu0 %v119
    %755 = vmatpush.msra.mxu0 %v118
    %756 = vmatpush.msra.mxu0 %v117
    %757 = vmatpush.msra.mxu0 %v116
    %758 = vmatmul.f32.gmra.mxu0 %v740
    %v759 = vpop.f32.mrf.mxu0
    %v760 = vadd.f32 %v351, %v759
    %761 = vdwg.mxu0
    %v762 = vxor.u32 %v760, 2147483648
    %v763 = vmul.f32 %v762, 1.442695
    %v764 = vpow.pop %v763
    %v765 = vadd.f32 %v764, 1.0
    %v766 = vrcp.pop %v765
    %v767 = vmul.f32 %v765, %v766
    %v768 = vsub.f32 1.0, %v767
    %v769 = vmul.f32 %v766, %v768
    %v770 = vadd.f32 %v766, %v769
    %vm771 = vweird.f32 %v765
    %vm772 = vweird.f32 %v766
    %vm773 = vmor %vm771, %vm772
    %v774 = vsel %vm773, %v766, %v770
    %v775 = vand.u32 2147483647, %v765
    %vm776 = vcmp.eq.f32.partialorder %v775, 8.507059e+37
    %v777 = vand.u32 %v765, 2147483648
    %v778 = vor.u32 1.1754944e-38, %v777
    %v779 = vsel %vm776, %v778, %v774
    %v780 = vmul.f32 1.0, %v779
    %v781 = vtanh.pop %v760
    %v782 = vmul.f32 %v780, %v411
    %784 = vrot.lane.b32.xlu0 %v781, 64
    %v785 = vpop.permute.xlu0 %784
    %v787 = vmul.f32 %v780, %v785
    %789 = vrot.lane.b32.xlu0 %v787, 32
    %v790 = vpop.permute.xlu0 %789
    %v792 = vadd.f32 %v782, %v790
    %v793 = vtanh.pop %v792
    %795 = vrot.lane.b32.xlu0 %v793, 64
    %v796 = vpop.permute.xlu0 %795
    %v798 = vmul.f32 %v780, %v796
    %800 = vrot.lane.b32.xlu0 %v798, 32
    %v801 = vpop.permute.xlu0 %800
    %803 = vrot.lane.b32.xlu0 %v492, 64
    %v804 = vpop.permute.xlu0 %803
    %v806 = vsel %vm191, %v801, %v804
    %v808 = vsel %vm348, %v806, 0
    %810 = vmatpush.msra.mxu0 0.0
    %811 = vmatpush.msra.mxu0 0.0
    %812 = vmatpush.msra.mxu0 0.0
    %813 = vmatpush.msra.mxu0 0.0
    %814 = vmatpush.msra.mxu0 0.0
    %815 = vmatpush.msra.mxu0 0.0
    %816 = vmatpush.msra.mxu0 0.0
    %817 = vmatpush.msra.mxu0 0.0
    %818 = vmatpush.msra.mxu0 %v136
    %819 = vmatpush.msra.mxu0 %v135
    %820 = vmatpush.msra.mxu0 %v134
    %821 = vmatpush.msra.mxu0 %v133
    %822 = vmatpush.msra.mxu0 %v132
    %823 = vmatpush.msra.mxu0 %v131
    %824 = vmatpush.msra.mxu0 %v130
    %825 = vmatpush.msra.mxu0 %v129
    %826 = vmatmul.f32.gmra.mxu0 %v808
    %v827 = vpop.f32.mrf.mxu0
    %v828 = vadd.f32 %v427, %v827
    %829 = vdwg.mxu0
    %v830 = vxor.u32 %v828, 2147483648
    %v831 = vmul.f32 %v830, 1.442695
    %v832 = vpow.pop %v831
    %v833 = vadd.f32 %v832, 1.0
    %v834 = vrcp.pop %v833
    %v835 = vmul.f32 %v833, %v834
    %v836 = vsub.f32 1.0, %v835
    %v837 = vmul.f32 %v834, %v836
    %v838 = vadd.f32 %v834, %v837
    %vm839 = vweird.f32 %v833
    %vm840 = vweird.f32 %v834
    %vm841 = vmor %vm839, %vm840
    %v842 = vsel %vm841, %v834, %v838
    %v843 = vand.u32 2147483647, %v833
    %vm844 = vcmp.eq.f32.partialorder %v843, 8.507059e+37
    %v845 = vand.u32 %v833, 2147483648
    %v846 = vor.u32 1.1754944e-38, %v845
    %v847 = vsel %vm844, %v846, %v842
    %v848 = vmul.f32 1.0, %v847
    %v849 = vtanh.pop %v828
    %v850 = vmul.f32 %v848, %v486
    %852 = vrot.lane.b32.xlu0 %v849, 64
    %v853 = vpop.permute.xlu0 %852
    %v855 = vmul.f32 %v848, %v853
    %857 = vrot.lane.b32.xlu0 %v855, 32
    %v858 = vpop.permute.xlu0 %857
    %v860 = vadd.f32 %v850, %v858
    %v861 = vtanh.pop %v860
    %863 = vrot.lane.b32.xlu0 %v861, 64
    %v864 = vpop.permute.xlu0 %863
    %v866 = vmul.f32 %v848, %v864
    %868 = vrot.lane.b32.xlu0 %v866, 96
    %v869 = vpop.permute.xlu0 %868
    %v871 = vsel %vm348, %v734, %v869
    %v873 = vsel %vm353, %v871, 0
    %875 = vmatpush.msra.mxu0 0.0
    %876 = vmatpush.msra.mxu0 0.0
    %877 = vmatpush.msra.mxu0 0.0
    %878 = vmatpush.msra.mxu0 0.0
    %879 = vmatpush.msra.mxu0 %v149
    %880 = vmatpush.msra.mxu0 %v148
    %881 = vmatpush.msra.mxu0 %v147
    %882 = vmatpush.msra.mxu0 %v146
    %883 = vmatpush.msra.mxu0 %v145
    %884 = vmatpush.msra.mxu0 %v144
    %885 = vmatpush.msra.mxu0 %v143
    %886 = vmatpush.msra.mxu0 %v142
    %887 = vmatpush.msra.mxu0 %v141
    %888 = vmatpush.msra.mxu0 %v140
    %889 = vmatpush.msra.mxu0 %v139
    %890 = vmatpush.msra.mxu0 %v138
    %891 = vmatmul.f32.gmra.mxu0 %v873
    %v892 = vpop.f32.mrf.mxu0
    %v893 = vadd.f32 %v499, %v892
    %894 = vdwg.mxu0
    %s895 = scalar_lea.vmem %s15, 2
    %896 = vst [vmem:[%s895] sm:$0x3] %v893
    %v897 = vsel %vm525, %v893, -inf
    %898 = vmax.xlane.f32.xlu0 %v897
    %v899 = vpop.xlane.xlu0 %898
    %vm900 = vcmp.eq.f32.partialorder %v893, %v899
    %v901 = vsel %vm900, %v152, 128
    %v902 = vsel %vm525, %v901, 2147483647
    %v903 = vand.u32 %v902, 65535
    %v904 = vshra.s32 %v902, 16
    %v905 = vcvt.s32.f32 %v903
    %v906 = vcvt.s32.f32 %v904
    %907 = vmin.xlane.f32.xlu0 %v906
    %v908 = vpop.xlane.xlu0 %907
    %vm909 = vcmp.eq.f32.partialorder %v906, %v908
    %v910 = vsel %vm909, %v905, inf
    %911 = vmin.xlane.f32.xlu0 %v910
    %v912 = vpop.xlane.xlu0 %911
    %v913 = vcvt.f32.s32 %v912
    %v914 = vcvt.f32.s32 %v908
    %v915 = vshll.u32 %v914, 16
    %v916 = vadd.s32 %v915, %v913
    %vm917 = vcmp.eq.s32.totalorder %v152, %v916
    %v918 = vsel %vm917, 1, 0
    %v919 = vcvt.s32.f32 %v918
    %s920 = sld [smem:[#allocation5 + $0x1]]
    %s921 = scvt.s32.f32 %s920
    %s922 = sld [smem:[#allocation2 + $0x100]]
    %v923 = vstv %s922
    %vm924 = vcmp.eq.s32.totalorder %v152, %v923
    %v925 = vsel %vm924, 1, 0
    %v926 = vcvt.s32.f32 %v925
    %s927 = sld [smem:[#allocation2 + $0x101]]
    %v928 = vstv %s927
    %vm929 = vcmp.eq.s32.totalorder %v152, %v928
    %v930 = vsel %vm929, 1, 0
    %v931 = vcvt.s32.f32 %v930
    %v932 = vsel %vm169, %v926, %v931
    %v933 = vstv %s921
    %v934 = vmul.f32 %v933, %v932
    %s935 = ssub.f32 1.0, %s921
    %v936 = vstv %s935
    %v937 = vmul.f32 %v936, %v919
    %v938 = vadd.f32 %v934, %v937
    %939 = vmatpush.msra.mxu0 %v115
    %940 = vmatpush.msra.mxu0 %v114
    %941 = vmatpush.msra.mxu0 %v113
    %942 = vmatpush.msra.mxu0 %v112
    %943 = vmatpush.msra.mxu0 %v111
    %944 = vmatpush.msra.mxu0 %v110
    %945 = vmatpush.msra.mxu0 %v109
    %946 = vmatpush.msra.mxu0 %v108
    %947 = vmatpush.msra.mxu0 %v107
    %948 = vmatpush.msra.mxu0 %v106
    %949 = vmatpush.msra.mxu0 %v105
    %950 = vmatpush.msra.mxu0 %v104
    %951 = vmatpush.msra.mxu0 %v103
    %952 = vmatpush.msra.mxu0 %v102
    %953 = vmatpush.msra.mxu0 %v101
    %954 = vmatpush.msra.mxu0 %v100
    %955 = vmatmul.f32.gmra.mxu0 %v938
    %v956 = vpop.f32.mrf.mxu0
    %v957 = vadd.f32 0.0, %v956
    %958 = vdwg.mxu0
    %959 = vrot.lane.b32.xlu0 %v866, 32
    %v960 = vpop.permute.xlu0 %959
    %v961 = vsel %vm191, %v960, 0
    %963 = vmatpush.msra.mxu0 0.0
    %964 = vmatpush.msra.mxu0 0.0
    %965 = vmatpush.msra.mxu0 0.0
    %966 = vmatpush.msra.mxu0 0.0
    %967 = vmatpush.msra.mxu0 0.0
    %968 = vmatpush.msra.mxu0 0.0
    %969 = vmatpush.msra.mxu0 0.0
    %970 = vmatpush.msra.mxu0 0.0
    %971 = vmatpush.msra.mxu0 0.0
    %972 = vmatpush.msra.mxu0 0.0
    %973 = vmatpush.msra.mxu0 0.0
    %974 = vmatpush.msra.mxu0 0.0
    %975 = vmatpush.msra.mxu0 %v98
    %976 = vmatpush.msra.mxu0 %v97
    %977 = vmatpush.msra.mxu0 %v96
    %978 = vmatpush.msra.mxu0 %v95
    %979 = vmatmul.f32.gmra.mxu0 %v961
    %v980 = vpop.f32.mrf.mxu0
    %v981 = vadd.f32 0.0, %v980
    %982 = vdwg.mxu0
    %v984 = vrot.slane %v981, 1
    %v985 = vperm.slane %v981, 0
    %v986 = vperm.slane %v984, 0
    %v989 = vadd.f32 %v985, %v93
    %v990 = vadd.f32 %v986, %v94
    %v991 = vtanh.pop %v989
    %v992 = vtanh.pop %v990
    %v993 = vmul.f32 %v991, %v226
    %v994 = vmul.f32 %v992, %v226
    %v995 = vsel %vm191, %v993, 0.0
    %996 = vadd.xlane.f32.xlu0 %v995
    %v997 = vpop.xlane.xlu0 %996
    %v998 = vsel %vm191, %v994, 0.0
    %999 = vadd.xlane.f32.xlu0 %v998
    %v1000 = vpop.xlane.xlu0 %999
    %v1003 = vperm.slane %v997, %v152
    %v1004 = vperm.slane %v1000, %v152
    %v1005 = vsel %vm240, %v1004, %v1003
    %v1007 = vsel %vm243, %v1005, -inf
    %1008 = vmax.xlane.f32.xlu0 %v1007
    %v1009 = vpop.xlane.xlu0 %1008
    %v1011 = vperm.slane %v1009, 0
    %v1012 = vperm.slane %v1009, 1
    %v1015 = vsub.f32 %v997, %v1011
    %v1016 = vsub.f32 %v1000, %v1012
    %v1017 = vmul.f32 %v1015, 1.442695
    %v1018 = vpow.pop %v1017
    %v1019 = vmul.f32 %v1016, 1.442695
    %v1020 = vpow.pop %v1019
    %1023 = vset.pattern.permute.xlu0 0
    %1024 = vperm.xlu0 %1023, %v1018
    %v1025 = vpop.permute.xlu0 %1024
    %1026 = vset.pattern.permute.xlu0 0
    %1027 = vperm.xlu0 %1026, %v1020
    %v1028 = vpop.permute.xlu0 %1027
    %v1029 = vperm.slane %v1025, %v152
    %v1030 = vperm.slane %v1028, %v152
    %v1031 = vsel %vm240, %v1030, %v1029
    %v1033 = vsel %vm243, %v1031, 0.0
    %1034 = vadd.xlane.f32.xlu0 %v1033
    %v1035 = vpop.xlane.xlu0 %1034
    %v1036 = vrcp.pop %v1035
    %v1038 = vperm.slane %v1036, 0
    %v1039 = vperm.slane %v1036, 1
    %v1042 = vmul.f32 %v1018, %v1038
    %v1043 = vmul.f32 %v1020, %v1039
    %1045 = vset.pattern.permute.xlu0 0
    %1046 = vperm.xlu0 %1045, %v1042
    %v1047 = vpop.permute.xlu0 %1046
    %v1048 = vperm.slane %v1047, %v152
    %v1049 = vsel %vm286, %v1048, 0
    %1051 = vmatpush.msra.mxu0 0.0
    %1052 = vmatpush.msra.mxu0 0.0
    %1053 = vmatpush.msra.mxu0 0.0
    %1054 = vmatpush.msra.mxu0 0.0
    %1055 = vmatpush.msra.mxu0 0.0
    %1056 = vmatpush.msra.mxu0 0.0
    %1057 = vmatpush.msra.mxu0 0.0
    %1058 = vmatpush.msra.mxu0 0.0
    %1059 = vmatpush.msra.mxu0 0.0
    %1060 = vmatpush.msra.mxu0 0.0
    %1061 = vmatpush.msra.mxu0 0.0
    %1062 = vmatpush.msra.mxu0 0.0
    %1063 = vmatpush.msra.mxu0 0.0
    %1064 = vmatpush.msra.mxu0 0.0
    %1065 = vmatpush.msra.mxu0 0.0
    %1066 = vmatpush.msra.mxu0 %v91
    %1067 = vmatmul.f32.gmra.mxu0 %v1049
    %v1068 = vpop.f32.mrf.mxu0
    %v1069 = vadd.f32 0.0, %v1068
    %1070 = vdwg.mxu0
    %1072 = vset.pattern.permute.xlu0 0
    %1073 = vperm.xlu0 %1072, %v1043
    %v1074 = vpop.permute.xlu0 %1073
    %v1075 = vperm.slane %v1074, %v152
    %v1076 = vsel %vm286, %v1075, 0
    %1078 = vmatpush.msra.mxu0 0.0
    %1079 = vmatpush.msra.mxu0 0.0
    %1080 = vmatpush.msra.mxu0 0.0
    %1081 = vmatpush.msra.mxu0 0.0
    %1082 = vmatpush.msra.mxu0 0.0
    %1083 = vmatpush.msra.mxu0 0.0
    %1084 = vmatpush.msra.mxu0 0.0
    %1085 = vmatpush.msra.mxu0 0.0
    %1086 = vmatpush.msra.mxu0 0.0
    %1087 = vmatpush.msra.mxu0 0.0
    %1088 = vmatpush.msra.mxu0 0.0
    %1089 = vmatpush.msra.mxu0 0.0
    %1090 = vmatpush.msra.mxu0 0.0
    %1091 = vmatpush.msra.mxu0 0.0
    %1092 = vmatpush.msra.mxu0 0.0
    %1093 = vmatpush.msra.mxu0 %v92
    %1094 = vmatmul.f32.gmra.mxu0 %v1076
    %v1095 = vpop.f32.mrf.mxu0
    %v1096 = vadd.f32 0.0, %v1095
    %1097 = vdwg.mxu0
    %v1100 = vrot.slane %v1096, 7
    %v1101 = vsel %vm240, %v1100, %v1069
    %1102 = vrot.lane.b32.xlu0 %v1101, 32
    %v1103 = vpop.permute.xlu0 %1102
    %v1105 = vsel %vm191, %v957, %v1103
    %1106 = vrot.lane.b32.xlu0 %v798, 96
    %v1107 = vpop.permute.xlu0 %1106
    %v1109 = vsel %vm348, %v1105, %v1107
    %v1111 = vsel %vm353, %v1109, 0
    %1113 = vmatpush.msra.mxu0 0.0
    %1114 = vmatpush.msra.mxu0 0.0
    %1115 = vmatpush.msra.mxu0 0.0
    %1116 = vmatpush.msra.mxu0 0.0
    %1117 = vmatpush.msra.mxu0 %v127
    %1118 = vmatpush.msra.mxu0 %v126
    %1119 = vmatpush.msra.mxu0 %v125
    %1120 = vmatpush.msra.mxu0 %v124
    %1121 = vmatpush.msra.mxu0 %v123
    %1122 = vmatpush.msra.mxu0 %v122
    %1123 = vmatpush.msra.mxu0 %v121
    %1124 = vmatpush.msra.mxu0 %v120
    %1125 = vmatpush.msra.mxu0 %v119
    %1126 = vmatpush.msra.mxu0 %v118
    %1127 = vmatpush.msra.mxu0 %v117
    %1128 = vmatpush.msra.mxu0 %v116
    %1129 = vmatmul.f32.gmra.mxu0 %v1111
    %v1130 = vpop.f32.mrf.mxu0
    %v1131 = vadd.f32 %v351, %v1130
    %1132 = vdwg.mxu0
    %v1133 = vxor.u32 %v1131, 2147483648
    %v1134 = vmul.f32 %v1133, 1.442695
    %v1135 = vpow.pop %v1134
    %v1136 = vadd.f32 %v1135, 1.0
    %v1137 = vrcp.pop %v1136
    %v1138 = vmul.f32 %v1136, %v1137
    %v1139 = vsub.f32 1.0, %v1138
    %v1140 = vmul.f32 %v1137, %v1139
    %v1141 = vadd.f32 %v1137, %v1140
    %vm1142 = vweird.f32 %v1136
    %vm1143 = vweird.f32 %v1137
    %vm1144 = vmor %vm1142, %vm1143
    %v1145 = vsel %vm1144, %v1137, %v1141
    %v1146 = vand.u32 2147483647, %v1136
    %vm1147 = vcmp.eq.f32.partialorder %v1146, 8.507059e+37
    %v1148 = vand.u32 %v1136, 2147483648
    %v1149 = vor.u32 1.1754944e-38, %v1148
    %v1150 = vsel %vm1147, %v1149, %v1145
    %v1151 = vmul.f32 1.0, %v1150
    %v1152 = vtanh.pop %v1131
    %v1153 = vmul.f32 %v1151, %v792
    %1155 = vrot.lane.b32.xlu0 %v1152, 64
    %v1156 = vpop.permute.xlu0 %1155
    %v1158 = vmul.f32 %v1151, %v1156
    %1160 = vrot.lane.b32.xlu0 %v1158, 32
    %v1161 = vpop.permute.xlu0 %1160
    %v1163 = vadd.f32 %v1153, %v1161
    %v1164 = vtanh.pop %v1163
    %1166 = vrot.lane.b32.xlu0 %v1164, 64
    %v1167 = vpop.permute.xlu0 %1166
    %v1169 = vmul.f32 %v1151, %v1167
    %1171 = vrot.lane.b32.xlu0 %v1169, 32
    %v1172 = vpop.permute.xlu0 %1171
    %1174 = vrot.lane.b32.xlu0 %v866, 64
    %v1175 = vpop.permute.xlu0 %1174
    %v1177 = vsel %vm191, %v1172, %v1175
    %v1179 = vsel %vm348, %v1177, 0
    %1181 = vmatpush.msra.mxu0 0.0
    %1182 = vmatpush.msra.mxu0 0.0
    %1183 = vmatpush.msra.mxu0 0.0
    %1184 = vmatpush.msra.mxu0 0.0
    %1185 = vmatpush.msra.mxu0 0.0
    %1186 = vmatpush.msra.mxu0 0.0
    %1187 = vmatpush.msra.mxu0 0.0
    %1188 = vmatpush.msra.mxu0 0.0
    %1189 = vmatpush.msra.mxu0 %v136
    %1190 = vmatpush.msra.mxu0 %v135
    %1191 = vmatpush.msra.mxu0 %v134
    %1192 = vmatpush.msra.mxu0 %v133
    %1193 = vmatpush.msra.mxu0 %v132
    %1194 = vmatpush.msra.mxu0 %v131
    %1195 = vmatpush.msra.mxu0 %v130
    %1196 = vmatpush.msra.mxu0 %v129
    %1197 = vmatmul.f32.gmra.mxu0 %v1179
    %v1198 = vpop.f32.mrf.mxu0
    %v1199 = vadd.f32 %v427, %v1198
    %1200 = vdwg.mxu0
    %v1201 = vxor.u32 %v1199, 2147483648
    %v1202 = vmul.f32 %v1201, 1.442695
    %v1203 = vpow.pop %v1202
    %v1204 = vadd.f32 %v1203, 1.0
    %v1205 = vrcp.pop %v1204
    %v1206 = vmul.f32 %v1204, %v1205
    %v1207 = vsub.f32 1.0, %v1206
    %v1208 = vmul.f32 %v1205, %v1207
    %v1209 = vadd.f32 %v1205, %v1208
    %vm1210 = vweird.f32 %v1204
    %vm1211 = vweird.f32 %v1205
    %vm1212 = vmor %vm1210, %vm1211
    %v1213 = vsel %vm1212, %v1205, %v1209
    %v1214 = vand.u32 2147483647, %v1204
    %vm1215 = vcmp.eq.f32.partialorder %v1214, 8.507059e+37
    %v1216 = vand.u32 %v1204, 2147483648
    %v1217 = vor.u32 1.1754944e-38, %v1216
    %v1218 = vsel %vm1215, %v1217, %v1213
    %v1219 = vmul.f32 1.0, %v1218
    %v1220 = vtanh.pop %v1199
    %v1221 = vmul.f32 %v1219, %v860
    %1223 = vrot.lane.b32.xlu0 %v1220, 64
    %v1224 = vpop.permute.xlu0 %1223
    %v1226 = vmul.f32 %v1219, %v1224
    %1228 = vrot.lane.b32.xlu0 %v1226, 32
    %v1229 = vpop.permute.xlu0 %1228
    %v1231 = vadd.f32 %v1221, %v1229
    %v1232 = vtanh.pop %v1231
    %1234 = vrot.lane.b32.xlu0 %v1232, 64
    %v1235 = vpop.permute.xlu0 %1234
    %v1237 = vmul.f32 %v1219, %v1235
    %1239 = vrot.lane.b32.xlu0 %v1237, 96
    %v1240 = vpop.permute.xlu0 %1239
    %v1242 = vsel %vm348, %v1105, %v1240
    %v1244 = vsel %vm353, %v1242, 0
    %1246 = vmatpush.msra.mxu0 0.0
    %1247 = vmatpush.msra.mxu0 0.0
    %1248 = vmatpush.msra.mxu0 0.0
    %1249 = vmatpush.msra.mxu0 0.0
    %1250 = vmatpush.msra.mxu0 %v149
    %1251 = vmatpush.msra.mxu0 %v148
    %1252 = vmatpush.msra.mxu0 %v147
    %1253 = vmatpush.msra.mxu0 %v146
    %1254 = vmatpush.msra.mxu0 %v145
    %1255 = vmatpush.msra.mxu0 %v144
    %1256 = vmatpush.msra.mxu0 %v143
    %1257 = vmatpush.msra.mxu0 %v142
    %1258 = vmatpush.msra.mxu0 %v141
    %1259 = vmatpush.msra.mxu0 %v140
    %1260 = vmatpush.msra.mxu0 %v139
    %1261 = vmatpush.msra.mxu0 %v138
    %1262 = vmatmul.f32.gmra.mxu0 %v1244
    %v1263 = vpop.f32.mrf.mxu0
    %v1264 = vadd.f32 %v499, %v1263
    %1265 = vdwg.mxu0
    %s1266 = scalar_lea.vmem %s15, 4
    %1267 = vst [vmem:[%s1266] sm:$0x3] %v1264
    %v1268 = vsel %vm525, %v1264, -inf
    %1269 = vmax.xlane.f32.xlu0 %v1268
    %v1270 = vpop.xlane.xlu0 %1269
    %vm1271 = vcmp.eq.f32.partialorder %v1264, %v1270
    %v1272 = vsel %vm1271, %v152, 128
    %v1273 = vsel %vm525, %v1272, 2147483647
    %v1274 = vand.u32 %v1273, 65535
    %v1275 = vshra.s32 %v1273, 16
    %v1276 = vcvt.s32.f32 %v1274
    %v1277 = vcvt.s32.f32 %v1275
    %1278 = vmin.xlane.f32.xlu0 %v1277
    %v1279 = vpop.xlane.xlu0 %1278
    %vm1280 = vcmp.eq.f32.partialorder %v1277, %v1279
    %v1281 = vsel %vm1280, %v1276, inf
    %1282 = vmin.xlane.f32.xlu0 %v1281
    %v1283 = vpop.xlane.xlu0 %1282
    %v1284 = vcvt.f32.s32 %v1283
    %v1285 = vcvt.f32.s32 %v1279
    %v1286 = vshll.u32 %v1285, 16
    %v1287 = vadd.s32 %v1286, %v1284
    %vm1288 = vcmp.eq.s32.totalorder %v152, %v1287
    %v1289 = vsel %vm1288, 1, 0
    %v1290 = vcvt.s32.f32 %v1289
    %s1291 = sld [smem:[#allocation5 + $0x2]]
    %s1292 = scvt.s32.f32 %s1291
    %s1293 = sld [smem:[#allocation2 + $0x180]]
    %v1294 = vstv %s1293
    %vm1295 = vcmp.eq.s32.totalorder %v152, %v1294
    %v1296 = vsel %vm1295, 1, 0
    %v1297 = vcvt.s32.f32 %v1296
    %s1298 = sld [smem:[#allocation2 + $0x181]]
    %v1299 = vstv %s1298
    %vm1300 = vcmp.eq.s32.totalorder %v152, %v1299
    %v1301 = vsel %vm1300, 1, 0
    %v1302 = vcvt.s32.f32 %v1301
    %v1303 = vsel %vm169, %v1297, %v1302
    %v1304 = vstv %s1292
    %v1305 = vmul.f32 %v1304, %v1303
    %s1306 = ssub.f32 1.0, %s1292
    %v1307 = vstv %s1306
    %v1308 = vmul.f32 %v1307, %v1290
    %v1309 = vadd.f32 %v1305, %v1308
    %1310 = vmatpush.msra.mxu0 %v115
    %1311 = vmatpush.msra.mxu0 %v114
    %1312 = vmatpush.msra.mxu0 %v113
    %1313 = vmatpush.msra.mxu0 %v112
    %1314 = vmatpush.msra.mxu0 %v111
    %1315 = vmatpush.msra.mxu0 %v110
    %1316 = vmatpush.msra.mxu0 %v109
    %1317 = vmatpush.msra.mxu0 %v108
    %1318 = vmatpush.msra.mxu0 %v107
    %1319 = vmatpush.msra.mxu0 %v106
    %1320 = vmatpush.msra.mxu0 %v105
    %1321 = vmatpush.msra.mxu0 %v104
    %1322 = vmatpush.msra.mxu0 %v103
    %1323 = vmatpush.msra.mxu0 %v102
    %1324 = vmatpush.msra.mxu0 %v101
    %1325 = vmatpush.msra.mxu0 %v100
    %1326 = vmatmul.f32.gmra.mxu0 %v1309
    %v1327 = vpop.f32.mrf.mxu0
    %v1328 = vadd.f32 0.0, %v1327
    %1329 = vdwg.mxu0
    %1330 = vrot.lane.b32.xlu0 %v1237, 32
    %v1331 = vpop.permute.xlu0 %1330
    %v1332 = vsel %vm191, %v1331, 0
    %1334 = vmatpush.msra.mxu0 0.0
    %1335 = vmatpush.msra.mxu0 0.0
    %1336 = vmatpush.msra.mxu0 0.0
    %1337 = vmatpush.msra.mxu0 0.0
    %1338 = vmatpush.msra.mxu0 0.0
    %1339 = vmatpush.msra.mxu0 0.0
    %1340 = vmatpush.msra.mxu0 0.0
    %1341 = vmatpush.msra.mxu0 0.0
    %1342 = vmatpush.msra.mxu0 0.0
    %1343 = vmatpush.msra.mxu0 0.0
    %1344 = vmatpush.msra.mxu0 0.0
    %1345 = vmatpush.msra.mxu0 0.0
    %1346 = vmatpush.msra.mxu0 %v98
    %1347 = vmatpush.msra.mxu0 %v97
    %1348 = vmatpush.msra.mxu0 %v96
    %1349 = vmatpush.msra.mxu0 %v95
    %1350 = vmatmul.f32.gmra.mxu0 %v1332
    %v1351 = vpop.f32.mrf.mxu0
    %v1352 = vadd.f32 0.0, %v1351
    %1353 = vdwg.mxu0
    %v1355 = vrot.slane %v1352, 1
    %v1356 = vperm.slane %v1352, 0
    %v1357 = vperm.slane %v1355, 0
    %v1360 = vadd.f32 %v1356, %v93
    %v1361 = vadd.f32 %v1357, %v94
    %v1362 = vtanh.pop %v1360
    %v1363 = vtanh.pop %v1361
    %v1364 = vmul.f32 %v1362, %v226
    %v1365 = vmul.f32 %v1363, %v226
    %v1366 = vsel %vm191, %v1364, 0.0
    %1367 = vadd.xlane.f32.xlu0 %v1366
    %v1368 = vpop.xlane.xlu0 %1367
    %v1369 = vsel %vm191, %v1365, 0.0
    %1370 = vadd.xlane.f32.xlu0 %v1369
    %v1371 = vpop.xlane.xlu0 %1370
    %v1374 = vperm.slane %v1368, %v152
    %v1375 = vperm.slane %v1371, %v152
    %v1376 = vsel %vm240, %v1375, %v1374
    %v1378 = vsel %vm243, %v1376, -inf
    %1379 = vmax.xlane.f32.xlu0 %v1378
    %v1380 = vpop.xlane.xlu0 %1379
    %v1382 = vperm.slane %v1380, 0
    %v1383 = vperm.slane %v1380, 1
    %v1386 = vsub.f32 %v1368, %v1382
    %v1387 = vsub.f32 %v1371, %v1383
    %v1388 = vmul.f32 %v1386, 1.442695
    %v1389 = vpow.pop %v1388
    %v1390 = vmul.f32 %v1387, 1.442695
    %v1391 = vpow.pop %v1390
    %1394 = vset.pattern.permute.xlu0 0
    %1395 = vperm.xlu0 %1394, %v1389
    %v1396 = vpop.permute.xlu0 %1395
    %1397 = vset.pattern.permute.xlu0 0
    %1398 = vperm.xlu0 %1397, %v1391
    %v1399 = vpop.permute.xlu0 %1398
    %v1400 = vperm.slane %v1396, %v152
    %v1401 = vperm.slane %v1399, %v152
    %v1402 = vsel %vm240, %v1401, %v1400
    %v1404 = vsel %vm243, %v1402, 0.0
    %1405 = vadd.xlane.f32.xlu0 %v1404
    %v1406 = vpop.xlane.xlu0 %1405
    %v1407 = vrcp.pop %v1406
    %v1409 = vperm.slane %v1407, 0
    %v1410 = vperm.slane %v1407, 1
    %v1413 = vmul.f32 %v1389, %v1409
    %v1414 = vmul.f32 %v1391, %v1410
    %1416 = vset.pattern.permute.xlu0 0
    %1417 = vperm.xlu0 %1416, %v1413
    %v1418 = vpop.permute.xlu0 %1417
    %v1419 = vperm.slane %v1418, %v152
    %v1420 = vsel %vm286, %v1419, 0
    %1422 = vmatpush.msra.mxu0 0.0
    %1423 = vmatpush.msra.mxu0 0.0
    %1424 = vmatpush.msra.mxu0 0.0
    %1425 = vmatpush.msra.mxu0 0.0
    %1426 = vmatpush.msra.mxu0 0.0
    %1427 = vmatpush.msra.mxu0 0.0
    %1428 = vmatpush.msra.mxu0 0.0
    %1429 = vmatpush.msra.mxu0 0.0
    %1430 = vmatpush.msra.mxu0 0.0
    %1431 = vmatpush.msra.mxu0 0.0
    %1432 = vmatpush.msra.mxu0 0.0
    %1433 = vmatpush.msra.mxu0 0.0
    %1434 = vmatpush.msra.mxu0 0.0
    %1435 = vmatpush.msra.mxu0 0.0
    %1436 = vmatpush.msra.mxu0 0.0
    %1437 = vmatpush.msra.mxu0 %v91
    %1438 = vmatmul.f32.gmra.mxu0 %v1420
    %v1439 = vpop.f32.mrf.mxu0
    %v1440 = vadd.f32 0.0, %v1439
    %1441 = vdwg.mxu0
    %1443 = vset.pattern.permute.xlu0 0
    %1444 = vperm.xlu0 %1443, %v1414
    %v1445 = vpop.permute.xlu0 %1444
    %v1446 = vperm.slane %v1445, %v152
    %v1447 = vsel %vm286, %v1446, 0
    %1449 = vmatpush.msra.mxu0 0.0
    %1450 = vmatpush.msra.mxu0 0.0
    %1451 = vmatpush.msra.mxu0 0.0
    %1452 = vmatpush.msra.mxu0 0.0
    %1453 = vmatpush.msra.mxu0 0.0
    %1454 = vmatpush.msra.mxu0 0.0
    %1455 = vmatpush.msra.mxu0 0.0
    %1456 = vmatpush.msra.mxu0 0.0
    %1457 = vmatpush.msra.mxu0 0.0
    %1458 = vmatpush.msra.mxu0 0.0
    %1459 = vmatpush.msra.mxu0 0.0
    %1460 = vmatpush.msra.mxu0 0.0
    %1461 = vmatpush.msra.mxu0 0.0
    %1462 = vmatpush.msra.mxu0 0.0
    %1463 = vmatpush.msra.mxu0 0.0
    %1464 = vmatpush.msra.mxu0 %v92
    %1465 = vmatmul.f32.gmra.mxu0 %v1447
    %v1466 = vpop.f32.mrf.mxu0
    %v1467 = vadd.f32 0.0, %v1466
    %1468 = vdwg.mxu0
    %v1471 = vrot.slane %v1467, 7
    %v1472 = vsel %vm240, %v1471, %v1440
    %1473 = vrot.lane.b32.xlu0 %v1472, 32
    %v1474 = vpop.permute.xlu0 %1473
    %v1476 = vsel %vm191, %v1328, %v1474
    %1477 = vrot.lane.b32.xlu0 %v1169, 96
    %v1478 = vpop.permute.xlu0 %1477
    %v1480 = vsel %vm348, %v1476, %v1478
    %v1482 = vsel %vm353, %v1480, 0
    %1484 = vmatpush.msra.mxu0 0.0
    %1485 = vmatpush.msra.mxu0 0.0
    %1486 = vmatpush.msra.mxu0 0.0
    %1487 = vmatpush.msra.mxu0 0.0
    %1488 = vmatpush.msra.mxu0 %v127
    %1489 = vmatpush.msra.mxu0 %v126
    %1490 = vmatpush.msra.mxu0 %v125
    %1491 = vmatpush.msra.mxu0 %v124
    %1492 = vmatpush.msra.mxu0 %v123
    %1493 = vmatpush.msra.mxu0 %v122
    %1494 = vmatpush.msra.mxu0 %v121
    %1495 = vmatpush.msra.mxu0 %v120
    %1496 = vmatpush.msra.mxu0 %v119
    %1497 = vmatpush.msra.mxu0 %v118
    %1498 = vmatpush.msra.mxu0 %v117
    %1499 = vmatpush.msra.mxu0 %v116
    %1500 = vmatmul.f32.gmra.mxu0 %v1482
    %v1501 = vpop.f32.mrf.mxu0
    %v1502 = vadd.f32 %v351, %v1501
    %1503 = vdwg.mxu0
    %v1504 = vxor.u32 %v1502, 2147483648
    %v1505 = vmul.f32 %v1504, 1.442695
    %v1506 = vpow.pop %v1505
    %v1507 = vadd.f32 %v1506, 1.0
    %v1508 = vrcp.pop %v1507
    %v1509 = vmul.f32 %v1507, %v1508
    %v1510 = vsub.f32 1.0, %v1509
    %v1511 = vmul.f32 %v1508, %v1510
    %v1512 = vadd.f32 %v1508, %v1511
    %vm1513 = vweird.f32 %v1507
    %vm1514 = vweird.f32 %v1508
    %vm1515 = vmor %vm1513, %vm1514
    %v1516 = vsel %vm1515, %v1508, %v1512
    %v1517 = vand.u32 2147483647, %v1507
    %vm1518 = vcmp.eq.f32.partialorder %v1517, 8.507059e+37
    %v1519 = vand.u32 %v1507, 2147483648
    %v1520 = vor.u32 1.1754944e-38, %v1519
    %v1521 = vsel %vm1518, %v1520, %v1516
    %v1522 = vmul.f32 1.0, %v1521
    %v1523 = vtanh.pop %v1502
    %v1524 = vmul.f32 %v1522, %v1163
    %1526 = vrot.lane.b32.xlu0 %v1523, 64
    %v1527 = vpop.permute.xlu0 %1526
    %v1529 = vmul.f32 %v1522, %v1527
    %1531 = vrot.lane.b32.xlu0 %v1529, 32
    %v1532 = vpop.permute.xlu0 %1531
    %v1534 = vadd.f32 %v1524, %v1532
    %v1535 = vtanh.pop %v1534
    %1537 = vrot.lane.b32.xlu0 %v1535, 64
    %v1538 = vpop.permute.xlu0 %1537
    %v1540 = vmul.f32 %v1522, %v1538
    %1542 = vrot.lane.b32.xlu0 %v1540, 32
    %v1543 = vpop.permute.xlu0 %1542
    %1545 = vrot.lane.b32.xlu0 %v1237, 64
    %v1546 = vpop.permute.xlu0 %1545
    %v1548 = vsel %vm191, %v1543, %v1546
    %v1550 = vsel %vm348, %v1548, 0
    %1552 = vmatpush.msra.mxu0 0.0
    %1553 = vmatpush.msra.mxu0 0.0
    %1554 = vmatpush.msra.mxu0 0.0
    %1555 = vmatpush.msra.mxu0 0.0
    %1556 = vmatpush.msra.mxu0 0.0
    %1557 = vmatpush.msra.mxu0 0.0
    %1558 = vmatpush.msra.mxu0 0.0
    %1559 = vmatpush.msra.mxu0 0.0
    %1560 = vmatpush.msra.mxu0 %v136
    %1561 = vmatpush.msra.mxu0 %v135
    %1562 = vmatpush.msra.mxu0 %v134
    %1563 = vmatpush.msra.mxu0 %v133
    %1564 = vmatpush.msra.mxu0 %v132
    %1565 = vmatpush.msra.mxu0 %v131
    %1566 = vmatpush.msra.mxu0 %v130
    %1567 = vmatpush.msra.mxu0 %v129
    %1568 = vmatmul.f32.gmra.mxu0 %v1550
    %v1569 = vpop.f32.mrf.mxu0
    %v1570 = vadd.f32 %v427, %v1569
    %1571 = vdwg.mxu0
    %v1572 = vxor.u32 %v1570, 2147483648
    %v1573 = vmul.f32 %v1572, 1.442695
    %v1574 = vpow.pop %v1573
    %v1575 = vadd.f32 %v1574, 1.0
    %v1576 = vrcp.pop %v1575
    %v1577 = vmul.f32 %v1575, %v1576
    %v1578 = vsub.f32 1.0, %v1577
    %v1579 = vmul.f32 %v1576, %v1578
    %v1580 = vadd.f32 %v1576, %v1579
    %vm1581 = vweird.f32 %v1575
    %vm1582 = vweird.f32 %v1576
    %vm1583 = vmor %vm1581, %vm1582
    %v1584 = vsel %vm1583, %v1576, %v1580
    %v1585 = vand.u32 2147483647, %v1575
    %vm1586 = vcmp.eq.f32.partialorder %v1585, 8.507059e+37
    %v1587 = vand.u32 %v1575, 2147483648
    %v1588 = vor.u32 1.1754944e-38, %v1587
    %v1589 = vsel %vm1586, %v1588, %v1584
    %v1590 = vmul.f32 1.0, %v1589
    %v1591 = vtanh.pop %v1570
    %v1592 = vmul.f32 %v1590, %v1231
    %1594 = vrot.lane.b32.xlu0 %v1591, 64
    %v1595 = vpop.permute.xlu0 %1594
    %v1597 = vmul.f32 %v1590, %v1595
    %1599 = vrot.lane.b32.xlu0 %v1597, 32
    %v1600 = vpop.permute.xlu0 %1599
    %v1602 = vadd.f32 %v1592, %v1600
    %v1603 = vtanh.pop %v1602
    %1605 = vrot.lane.b32.xlu0 %v1603, 64
    %v1606 = vpop.permute.xlu0 %1605
    %v1608 = vmul.f32 %v1590, %v1606
    %1610 = vrot.lane.b32.xlu0 %v1608, 96
    %v1611 = vpop.permute.xlu0 %1610
    %v1613 = vsel %vm348, %v1476, %v1611
    %v1615 = vsel %vm353, %v1613, 0
    %1617 = vmatpush.msra.mxu0 0.0
    %1618 = vmatpush.msra.mxu0 0.0
    %1619 = vmatpush.msra.mxu0 0.0
    %1620 = vmatpush.msra.mxu0 0.0
    %1621 = vmatpush.msra.mxu0 %v149
    %1622 = vmatpush.msra.mxu0 %v148
    %1623 = vmatpush.msra.mxu0 %v147
    %1624 = vmatpush.msra.mxu0 %v146
    %1625 = vmatpush.msra.mxu0 %v145
    %1626 = vmatpush.msra.mxu0 %v144
    %1627 = vmatpush.msra.mxu0 %v143
    %1628 = vmatpush.msra.mxu0 %v142
    %1629 = vmatpush.msra.mxu0 %v141
    %1630 = vmatpush.msra.mxu0 %v140
    %1631 = vmatpush.msra.mxu0 %v139
    %1632 = vmatpush.msra.mxu0 %v138
    %1633 = vmatmul.f32.gmra.mxu0 %v1615
    %v1634 = vpop.f32.mrf.mxu0
    %v1635 = vadd.f32 %v499, %v1634
    %1636 = vdwg.mxu0
    %s1637 = scalar_lea.vmem %s15, 6
    %1638 = vst [vmem:[%s1637] sm:$0x3] %v1635
    %v1639 = vsel %vm525, %v1635, -inf
    %1640 = vmax.xlane.f32.xlu0 %v1639
    %v1641 = vpop.xlane.xlu0 %1640
    %vm1642 = vcmp.eq.f32.partialorder %v1635, %v1641
    %v1643 = vsel %vm1642, %v152, 128
    %v1644 = vsel %vm525, %v1643, 2147483647
    %v1645 = vand.u32 %v1644, 65535
    %v1646 = vshra.s32 %v1644, 16
    %v1647 = vcvt.s32.f32 %v1645
    %v1648 = vcvt.s32.f32 %v1646
    %1649 = vmin.xlane.f32.xlu0 %v1648
    %v1650 = vpop.xlane.xlu0 %1649
    %vm1651 = vcmp.eq.f32.partialorder %v1648, %v1650
    %v1652 = vsel %vm1651, %v1647, inf
    %1653 = vmin.xlane.f32.xlu0 %v1652
    %v1654 = vpop.xlane.xlu0 %1653
    %v1655 = vcvt.f32.s32 %v1654
    %v1656 = vcvt.f32.s32 %v1650
    %v1657 = vshll.u32 %v1656, 16
    %v1658 = vadd.s32 %v1657, %v1655
    %vm1659 = vcmp.eq.s32.totalorder %v152, %v1658
    %v1660 = vsel %vm1659, 1, 0
    %v1661 = vcvt.s32.f32 %v1660
    %s1662 = sld [smem:[#allocation5 + $0x3]]
    %s1663 = scvt.s32.f32 %s1662
    %s1664 = sld [smem:[#allocation2 + $0x200]]
    %v1665 = vstv %s1664
    %vm1666 = vcmp.eq.s32.totalorder %v152, %v1665
    %v1667 = vsel %vm1666, 1, 0
    %v1668 = vcvt.s32.f32 %v1667
    %s1669 = sld [smem:[#allocation2 + $0x201]]
    %v1670 = vstv %s1669
    %vm1671 = vcmp.eq.s32.totalorder %v152, %v1670
    %v1672 = vsel %vm1671, 1, 0
    %v1673 = vcvt.s32.f32 %v1672
    %v1674 = vsel %vm169, %v1668, %v1673
    %v1675 = vstv %s1663
    %v1676 = vmul.f32 %v1675, %v1674
    %s1677 = ssub.f32 1.0, %s1663
    %v1678 = vstv %s1677
    %v1679 = vmul.f32 %v1678, %v1661
    %v1680 = vadd.f32 %v1676, %v1679
    %1681 = vmatpush.msra.mxu0 %v115
    %1682 = vmatpush.msra.mxu0 %v114
    %1683 = vmatpush.msra.mxu0 %v113
    %1684 = vmatpush.msra.mxu0 %v112
    %1685 = vmatpush.msra.mxu0 %v111
    %1686 = vmatpush.msra.mxu0 %v110
    %1687 = vmatpush.msra.mxu0 %v109
    %1688 = vmatpush.msra.mxu0 %v108
    %1689 = vmatpush.msra.mxu0 %v107
    %1690 = vmatpush.msra.mxu0 %v106
    %1691 = vmatpush.msra.mxu0 %v105
    %1692 = vmatpush.msra.mxu0 %v104
    %1693 = vmatpush.msra.mxu0 %v103
    %1694 = vmatpush.msra.mxu0 %v102
    %1695 = vmatpush.msra.mxu0 %v101
    %1696 = vmatpush.msra.mxu0 %v100
    %1697 = vmatmul.f32.gmra.mxu0 %v1680
    %v1698 = vpop.f32.mrf.mxu0
    %v1699 = vadd.f32 0.0, %v1698
    %1700 = vdwg.mxu0
    %1701 = vrot.lane.b32.xlu0 %v1608, 32
    %v1702 = vpop.permute.xlu0 %1701
    %v1703 = vsel %vm191, %v1702, 0
    %1705 = vmatpush.msra.mxu0 0.0
    %1706 = vmatpush.msra.mxu0 0.0
    %1707 = vmatpush.msra.mxu0 0.0
    %1708 = vmatpush.msra.mxu0 0.0
    %1709 = vmatpush.msra.mxu0 0.0
    %1710 = vmatpush.msra.mxu0 0.0
    %1711 = vmatpush.msra.mxu0 0.0
    %1712 = vmatpush.msra.mxu0 0.0
    %1713 = vmatpush.msra.mxu0 0.0
    %1714 = vmatpush.msra.mxu0 0.0
    %1715 = vmatpush.msra.mxu0 0.0
    %1716 = vmatpush.msra.mxu0 0.0
    %1717 = vmatpush.msra.mxu0 %v98
    %1718 = vmatpush.msra.mxu0 %v97
    %1719 = vmatpush.msra.mxu0 %v96
    %1720 = vmatpush.msra.mxu0 %v95
    %1721 = vmatmul.f32.gmra.mxu0 %v1703
    %v1722 = vpop.f32.mrf.mxu0
    %v1723 = vadd.f32 0.0, %v1722
    %1724 = vdwg.mxu0
    %v1726 = vrot.slane %v1723, 1
    %v1727 = vperm.slane %v1723, 0
    %v1728 = vperm.slane %v1726, 0
    %v1731 = vadd.f32 %v1727, %v93
    %v1732 = vadd.f32 %v1728, %v94
    %v1733 = vtanh.pop %v1731
    %v1734 = vtanh.pop %v1732
    %v1735 = vmul.f32 %v1733, %v226
    %v1736 = vmul.f32 %v1734, %v226
    %v1737 = vsel %vm191, %v1735, 0.0
    %1738 = vadd.xlane.f32.xlu0 %v1737
    %v1739 = vpop.xlane.xlu0 %1738
    %v1740 = vsel %vm191, %v1736, 0.0
    %1741 = vadd.xlane.f32.xlu0 %v1740
    %v1742 = vpop.xlane.xlu0 %1741
    %v1745 = vperm.slane %v1739, %v152
    %v1746 = vperm.slane %v1742, %v152
    %v1747 = vsel %vm240, %v1746, %v1745
    %v1749 = vsel %vm243, %v1747, -inf
    %1750 = vmax.xlane.f32.xlu0 %v1749
    %v1751 = vpop.xlane.xlu0 %1750
    %v1753 = vperm.slane %v1751, 0
    %v1754 = vperm.slane %v1751, 1
    %v1757 = vsub.f32 %v1739, %v1753
    %v1758 = vsub.f32 %v1742, %v1754
    %v1759 = vmul.f32 %v1757, 1.442695
    %v1760 = vpow.pop %v1759
    %v1761 = vmul.f32 %v1758, 1.442695
    %v1762 = vpow.pop %v1761
    %1765 = vset.pattern.permute.xlu0 0
    %1766 = vperm.xlu0 %1765, %v1760
    %v1767 = vpop.permute.xlu0 %1766
    %1768 = vset.pattern.permute.xlu0 0
    %1769 = vperm.xlu0 %1768, %v1762
    %v1770 = vpop.permute.xlu0 %1769
    %v1771 = vperm.slane %v1767, %v152
    %v1772 = vperm.slane %v1770, %v152
    %v1773 = vsel %vm240, %v1772, %v1771
    %v1775 = vsel %vm243, %v1773, 0.0
    %1776 = vadd.xlane.f32.xlu0 %v1775
    %v1777 = vpop.xlane.xlu0 %1776
    %v1778 = vrcp.pop %v1777
    %v1780 = vperm.slane %v1778, 0
    %v1781 = vperm.slane %v1778, 1
    %v1784 = vmul.f32 %v1760, %v1780
    %v1785 = vmul.f32 %v1762, %v1781
    %1787 = vset.pattern.permute.xlu0 0
    %1788 = vperm.xlu0 %1787, %v1784
    %v1789 = vpop.permute.xlu0 %1788
    %v1790 = vperm.slane %v1789, %v152
    %v1791 = vsel %vm286, %v1790, 0
    %1793 = vmatpush.msra.mxu0 0.0
    %1794 = vmatpush.msra.mxu0 0.0
    %1795 = vmatpush.msra.mxu0 0.0
    %1796 = vmatpush.msra.mxu0 0.0
    %1797 = vmatpush.msra.mxu0 0.0
    %1798 = vmatpush.msra.mxu0 0.0
    %1799 = vmatpush.msra.mxu0 0.0
    %1800 = vmatpush.msra.mxu0 0.0
    %1801 = vmatpush.msra.mxu0 0.0
    %1802 = vmatpush.msra.mxu0 0.0
    %1803 = vmatpush.msra.mxu0 0.0
    %1804 = vmatpush.msra.mxu0 0.0
    %1805 = vmatpush.msra.mxu0 0.0
    %1806 = vmatpush.msra.mxu0 0.0
    %1807 = vmatpush.msra.mxu0 0.0
    %1808 = vmatpush.msra.mxu0 %v91
    %1809 = vmatmul.f32.gmra.mxu0 %v1791
    %v1810 = vpop.f32.mrf.mxu0
    %v1811 = vadd.f32 0.0, %v1810
    %1812 = vdwg.mxu0
    %1814 = vset.pattern.permute.xlu0 0
    %1815 = vperm.xlu0 %1814, %v1785
    %v1816 = vpop.permute.xlu0 %1815
    %v1817 = vperm.slane %v1816, %v152
    %v1818 = vsel %vm286, %v1817, 0
    %1820 = vmatpush.msra.mxu0 0.0
    %1821 = vmatpush.msra.mxu0 0.0
    %1822 = vmatpush.msra.mxu0 0.0
    %1823 = vmatpush.msra.mxu0 0.0
    %1824 = vmatpush.msra.mxu0 0.0
    %1825 = vmatpush.msra.mxu0 0.0
    %1826 = vmatpush.msra.mxu0 0.0
    %1827 = vmatpush.msra.mxu0 0.0
    %1828 = vmatpush.msra.mxu0 0.0
    %1829 = vmatpush.msra.mxu0 0.0
    %1830 = vmatpush.msra.mxu0 0.0
    %1831 = vmatpush.msra.mxu0 0.0
    %1832 = vmatpush.msra.mxu0 0.0
    %1833 = vmatpush.msra.mxu0 0.0
    %1834 = vmatpush.msra.mxu0 0.0
    %1835 = vmatpush.msra.mxu0 %v92
    %1836 = vmatmul.f32.gmra.mxu0 %v1818
    %v1837 = vpop.f32.mrf.mxu0
    %v1838 = vadd.f32 0.0, %v1837
    %1839 = vdwg.mxu0
    %v1842 = vrot.slane %v1838, 7
    %v1843 = vsel %vm240, %v1842, %v1811
    %1844 = vrot.lane.b32.xlu0 %v1843, 32
    %v1845 = vpop.permute.xlu0 %1844
    %v1847 = vsel %vm191, %v1699, %v1845
    %1848 = vrot.lane.b32.xlu0 %v1540, 96
    %v1849 = vpop.permute.xlu0 %1848
    %v1851 = vsel %vm348, %v1847, %v1849
    %v1853 = vsel %vm353, %v1851, 0
    %1855 = vmatpush.msra.mxu0 0.0
    %1856 = vmatpush.msra.mxu0 0.0
    %1857 = vmatpush.msra.mxu0 0.0
    %1858 = vmatpush.msra.mxu0 0.0
    %1859 = vmatpush.msra.mxu0 %v127
    %1860 = vmatpush.msra.mxu0 %v126
    %1861 = vmatpush.msra.mxu0 %v125
    %1862 = vmatpush.msra.mxu0 %v124
    %1863 = vmatpush.msra.mxu0 %v123
    %1864 = vmatpush.msra.mxu0 %v122
    %1865 = vmatpush.msra.mxu0 %v121
    %1866 = vmatpush.msra.mxu0 %v120
    %1867 = vmatpush.msra.mxu0 %v119
    %1868 = vmatpush.msra.mxu0 %v118
    %1869 = vmatpush.msra.mxu0 %v117
    %1870 = vmatpush.msra.mxu0 %v116
    %1871 = vmatmul.f32.gmra.mxu0 %v1853
    %v1872 = vpop.f32.mrf.mxu0
    %v1873 = vadd.f32 %v351, %v1872
    %1874 = vdwg.mxu0
    %v1875 = vxor.u32 %v1873, 2147483648
    %v1876 = vmul.f32 %v1875, 1.442695
    %v1877 = vpow.pop %v1876
    %v1878 = vadd.f32 %v1877, 1.0
    %v1879 = vrcp.pop %v1878
    %v1880 = vmul.f32 %v1878, %v1879
    %v1881 = vsub.f32 1.0, %v1880
    %v1882 = vmul.f32 %v1879, %v1881
    %v1883 = vadd.f32 %v1879, %v1882
    %vm1884 = vweird.f32 %v1878
    %vm1885 = vweird.f32 %v1879
    %vm1886 = vmor %vm1884, %vm1885
    %v1887 = vsel %vm1886, %v1879, %v1883
    %v1888 = vand.u32 2147483647, %v1878
    %vm1889 = vcmp.eq.f32.partialorder %v1888, 8.507059e+37
    %v1890 = vand.u32 %v1878, 2147483648
    %v1891 = vor.u32 1.1754944e-38, %v1890
    %v1892 = vsel %vm1889, %v1891, %v1887
    %v1893 = vmul.f32 1.0, %v1892
    %v1894 = vtanh.pop %v1873
    %v1895 = vmul.f32 %v1893, %v1534
    %1897 = vrot.lane.b32.xlu0 %v1894, 64
    %v1898 = vpop.permute.xlu0 %1897
    %v1900 = vmul.f32 %v1893, %v1898
    %1902 = vrot.lane.b32.xlu0 %v1900, 32
    %v1903 = vpop.permute.xlu0 %1902
    %v1905 = vadd.f32 %v1895, %v1903
    %v1906 = vtanh.pop %v1905
    %1908 = vrot.lane.b32.xlu0 %v1906, 64
    %v1909 = vpop.permute.xlu0 %1908
    %v1911 = vmul.f32 %v1893, %v1909
    %1913 = vrot.lane.b32.xlu0 %v1911, 32
    %v1914 = vpop.permute.xlu0 %1913
    %1916 = vrot.lane.b32.xlu0 %v1608, 64
    %v1917 = vpop.permute.xlu0 %1916
    %v1919 = vsel %vm191, %v1914, %v1917
    %v1921 = vsel %vm348, %v1919, 0
    %1923 = vmatpush.msra.mxu0 0.0
    %1924 = vmatpush.msra.mxu0 0.0
    %1925 = vmatpush.msra.mxu0 0.0
    %1926 = vmatpush.msra.mxu0 0.0
    %1927 = vmatpush.msra.mxu0 0.0
    %1928 = vmatpush.msra.mxu0 0.0
    %1929 = vmatpush.msra.mxu0 0.0
    %1930 = vmatpush.msra.mxu0 0.0
    %1931 = vmatpush.msra.mxu0 %v136
    %1932 = vmatpush.msra.mxu0 %v135
    %1933 = vmatpush.msra.mxu0 %v134
    %1934 = vmatpush.msra.mxu0 %v133
    %1935 = vmatpush.msra.mxu0 %v132
    %1936 = vmatpush.msra.mxu0 %v131
    %1937 = vmatpush.msra.mxu0 %v130
    %1938 = vmatpush.msra.mxu0 %v129
    %1939 = vmatmul.f32.gmra.mxu0 %v1921
    %v1940 = vpop.f32.mrf.mxu0
    %v1941 = vadd.f32 %v427, %v1940
    %1942 = vdwg.mxu0
    %v1943 = vxor.u32 %v1941, 2147483648
    %v1944 = vmul.f32 %v1943, 1.442695
    %v1945 = vpow.pop %v1944
    %v1946 = vadd.f32 %v1945, 1.0
    %v1947 = vrcp.pop %v1946
    %v1948 = vmul.f32 %v1946, %v1947
    %v1949 = vsub.f32 1.0, %v1948
    %v1950 = vmul.f32 %v1947, %v1949
    %v1951 = vadd.f32 %v1947, %v1950
    %vm1952 = vweird.f32 %v1946
    %vm1953 = vweird.f32 %v1947
    %vm1954 = vmor %vm1952, %vm1953
    %v1955 = vsel %vm1954, %v1947, %v1951
    %v1956 = vand.u32 2147483647, %v1946
    %vm1957 = vcmp.eq.f32.partialorder %v1956, 8.507059e+37
    %v1958 = vand.u32 %v1946, 2147483648
    %v1959 = vor.u32 1.1754944e-38, %v1958
    %v1960 = vsel %vm1957, %v1959, %v1955
    %v1961 = vmul.f32 1.0, %v1960
    %v1962 = vtanh.pop %v1941
    %v1963 = vmul.f32 %v1961, %v1602
    %1965 = vrot.lane.b32.xlu0 %v1962, 64
    %v1966 = vpop.permute.xlu0 %1965
    %v1968 = vmul.f32 %v1961, %v1966
    %1970 = vrot.lane.b32.xlu0 %v1968, 32
    %v1971 = vpop.permute.xlu0 %1970
    %v1973 = vadd.f32 %v1963, %v1971
    %v1974 = vtanh.pop %v1973
    %1976 = vrot.lane.b32.xlu0 %v1974, 64
    %v1977 = vpop.permute.xlu0 %1976
    %v1979 = vmul.f32 %v1961, %v1977
    %1981 = vrot.lane.b32.xlu0 %v1979, 96
    %v1982 = vpop.permute.xlu0 %1981
    %v1984 = vsel %vm348, %v1847, %v1982
    %v1986 = vsel %vm353, %v1984, 0
    %1988 = vmatpush.msra.mxu0 0.0
    %1989 = vmatpush.msra.mxu0 0.0
    %1990 = vmatpush.msra.mxu0 0.0
    %1991 = vmatpush.msra.mxu0 0.0
    %1992 = vmatpush.msra.mxu0 %v149
    %1993 = vmatpush.msra.mxu0 %v148
    %1994 = vmatpush.msra.mxu0 %v147
    %1995 = vmatpush.msra.mxu0 %v146
    %1996 = vmatpush.msra.mxu0 %v145
    %1997 = vmatpush.msra.mxu0 %v144
    %1998 = vmatpush.msra.mxu0 %v143
    %1999 = vmatpush.msra.mxu0 %v142
    %2000 = vmatpush.msra.mxu0 %v141
    %2001 = vmatpush.msra.mxu0 %v140
    %2002 = vmatpush.msra.mxu0 %v139
    %2003 = vmatpush.msra.mxu0 %v138
    %2004 = vmatmul.f32.gmra.mxu0 %v1986
    %v2005 = vpop.f32.mrf.mxu0
    %v2006 = vadd.f32 %v499, %v2005
    %2007 = vdwg.mxu0
    %s2008 = scalar_lea.vmem %s15, 8
    %2009 = vst [vmem:[%s2008] sm:$0x3] %v2006
    // Predicated region
    $region74: #{seq2seq_forward.3} parent=1 // pred_check
      _
    $region75: #{seq2seq_forward.3} parent=1 // pred_check_branch
      %2011 = sbr.rel (0) target = $region77
    $region76: #{seq2seq_forward.3} parent=1 // pred_region
      _
    $region77: #{seq2seq_forward.3} parent=1 // pred_fallthru
      _
    // Predicated region
    $region78: #{seq2seq_forward.3} parent=1 // pred_check
      _
    $region79: #{seq2seq_forward.3} parent=1 // pred_check_branch
      %2013 = sbr.rel (0) target = $region81
    $region80: #{seq2seq_forward.3} parent=1 // pred_region
      _
    $region81: #{seq2seq_forward.3} parent=1 // pred_fallthru
      _
    %2014 = vsyncpa [#allocation3], 1
    %2015 = vsyncpa [#allocation4], 1
    %2016 = vsyncpa [#allocation6], 1

// kernel: seq2seq_forward.2
$region0: #{seq2seq_forward.2}
  #allocation0 [shape = 'u32[]', space=smem, size = 0x4, offset = 0x4, fixed_abs, tag = 'smem constant byte address 0x4 - core index']
  #allocation1 [shape = 'u32[72,128]{1,0:T(1,128)}', space=vmem, size = 0x9000, scoped, tag = 'internal scratch']
  %s0 = inlined_call_operand.vmem [shape: f32[8,2,32], index: 0, kind: input, shape index: {}]
  %s1 = inlined_call_operand.vmem [shape: f32[32,128], index: 1, kind: input, shape index: {}]
  %s2 = inlined_call_operand.vmem [shape: f32[1,128], index: 2, kind: input, shape index: {}]
  %s3 = inlined_call_operand.vmem [shape: f32[32,128], index: 3, kind: input, shape index: {}]
  %s4 = inlined_call_operand.vmem [shape: f32[32,128], index: 4, kind: input, shape index: {}]
  %s5 = inlined_call_operand.hbm [shape: f32[32,128], index: 5, kind: input, shape index: {}]
  %s6 = inlined_call_operand.vmem [shape: f32[1,128], index: 6, kind: input, shape index: {}]
  %s7 = inlined_call_operand.hbm [shape: f32[32,32], index: 7, kind: input, shape index: {}]
  %s8 = inlined_call_operand.vmem [shape: f32[1,32], index: 8, kind: input, shape index: {}]
  %s9 = inlined_call_operand.vmem [shape: f32[2,8,32], index: 9, kind: output, shape index: {0}]
  %s10 = inlined_call_operand.vmem [shape: f32[2,8,32], index: 10, kind: output, shape index: {1}]
  %s11 = inlined_call_operand.vmem [shape: f32[2,2,32], index: 11, kind: output, shape index: {2}]
  %s12 = inlined_call_operand.vmem [shape: f32[2,2,32], index: 12, kind: output, shape index: {3}]
  %13 = xla_tuple %s9, %s10, %s11, %s12
  %s14 = sld [smem:[#allocation0]]
  $region78: #{seq2seq_forward.2} parent=0
    _
  %s16 = ssub.s32 1, %s14
  %s17 = scalar_select 0, %s16, %s14
  $region1: #{seq2seq_forward.2} parent=0
    #allocation2 [shape = 'u8[16384]{0}', space=vmem, size = 0x4000, scoped, tag = 'input window, operand 5, single buffered']
    #allocation3 [shape = 's32[1]{0}', space=sflag, size = 0x4, scoped, tag = 'scoped memory for seq2seq_forward.2']
    #allocation4 [shape = 'u8[16384]{0}', space=vmem, size = 0x4000, scoped, tag = 'input window, operand 7, single buffered']
    #allocation5 [shape = 's32[1]{0}', space=sflag, size = 0x4, scoped, tag = 'scoped memory for seq2seq_forward.2']
    %18 = vsyncpa [#allocation3], 0
    %19 = vsyncpa [#allocation5], 0
    // Predicated region
    $region2: #{seq2seq_forward.2} parent=1 // pred_check
      _
    $region3: #{seq2seq_forward.2} parent=1 // pred_check_branch
      %21 = sbr.rel (0) target = $region5
    $region4: #{seq2seq_forward.2} parent=1 // pred_region
      _
    $region5: #{seq2seq_forward.2} parent=1 // pred_fallthru
      _
    // Predicated region
    $region6: #{seq2seq_forward.2} parent=1 // pred_check
      _
    $region7: #{seq2seq_forward.2} parent=1 // pred_check_branch
      %23 = sbr.rel (0) target = $region9
    $region8: #{seq2seq_forward.2} parent=1 // pred_region
      _
    $region9: #{seq2seq_forward.2} parent=1 // pred_fallthru
      _
    // Predicated region
    $region10: #{seq2seq_forward.2} parent=1 // pred_check
      _
    $region11: #{seq2seq_forward.2} parent=1 // pred_check_branch
      %25 = sbr.rel (0) target = $region13
    $region12: #{seq2seq_forward.2} parent=1 // pred_region
      _
    $region13: #{seq2seq_forward.2} parent=1 // pred_fallthru
      _
    // Predicated region
    $region14: #{seq2seq_forward.2} parent=1 // pred_check
      _
    $region15: #{seq2seq_forward.2} parent=1 // pred_check_branch
      %27 = sbr.rel (0) target = $region17
    $region16: #{seq2seq_forward.2} parent=1 // pred_region
      _
    $region17: #{seq2seq_forward.2} parent=1 // pred_fallthru
      _
    // Predicated region
    $region18: #{seq2seq_forward.2} parent=1 // pred_check
      _
    $region19: #{seq2seq_forward.2} parent=1 // pred_check_branch
      %29 = sbr.rel (0) target = $region21
    $region20: #{seq2seq_forward.2} parent=1 // pred_region
      _
    $region21: #{seq2seq_forward.2} parent=1 // pred_fallthru
      _
    // Predicated region
    $region22: #{seq2seq_forward.2} parent=1 // pred_check
      _
    $region23: #{seq2seq_forward.2} parent=1 // pred_check_branch
      %31 = sbr.rel (0) target = $region25
    $region24: #{seq2seq_forward.2} parent=1 // pred_region
      %33 = vsyncadd [#allocation3], 0
      %s34 = sshll.u32 %s5, 4
      %s35 = int_to_ptr.hbm [resolvable:$true] %s34
      %s36 = sshll.u32 [#allocation2], 4
      %s37 = int_to_ptr.vmem [resolvable:$true] %s36
      %42 = dma.hbm_to_vmem [thread:$0]  %s35, 512, %s37, [#allocation3], 128, 128, 8
    $region25: #{seq2seq_forward.2} parent=1 // pred_fallthru
      _
    // Predicated region
    $region26: #{seq2seq_forward.2} parent=1 // pred_check
      _
    $region27: #{seq2seq_forward.2} parent=1 // pred_check_branch
      %44 = sbr.rel (0) target = $region29
    $region28: #{seq2seq_forward.2} parent=1 // pred_region
      _
    $region29: #{seq2seq_forward.2} parent=1 // pred_fallthru
      _
    // Predicated region
    $region30: #{seq2seq_forward.2} parent=1 // pred_check
      _
    $region31: #{seq2seq_forward.2} parent=1 // pred_check_branch
      %46 = sbr.rel (0) target = $region33
    $region32: #{seq2seq_forward.2} parent=1 // pred_region
      %48 = vsyncadd [#allocation5], 0
      %s49 = sshll.u32 %s7, 4
      %s50 = int_to_ptr.hbm [resolvable:$true] %s49
      %s51 = sshll.u32 [#allocation4], 4
      %s52 = int_to_ptr.vmem [resolvable:$true] %s51
      %57 = dma.hbm_to_vmem [thread:$0]  %s50, 512, %s52, [#allocation5], 128, 128, 8
    $region33: #{seq2seq_forward.2} parent=1 // pred_fallthru
      _
    // Predicated region
    $region34: #{seq2seq_forward.2} parent=1 // pred_check
      _
    $region35: #{seq2seq_forward.2} parent=1 // pred_check_branch
      %59 = sbr.rel (0) target = $region37
    $region36: #{seq2seq_forward.2} parent=1 // pred_region
      _
    $region37: #{seq2seq_forward.2} parent=1 // pred_fallthru
      _
    // Predicated region
    $region38: #{seq2seq_forward.2} parent=1 // pred_check
      _
    $region39: #{seq2seq_forward.2} parent=1 // pred_check_branch
      %61 = sbr.rel (0) target = $region41
    $region40: #{seq2seq_forward.2} parent=1 // pred_region
      %63 = dma.done [#allocation3], 512
    $region41: #{seq2seq_forward.2} parent=1 // pred_fallthru
      _
    // Predicated region
    $region42: #{seq2seq_forward.2} parent=1 // pred_check
      _
    $region43: #{seq2seq_forward.2} parent=1 // pred_check_branch
      %65 = sbr.rel (0) target = $region45
    $region44: #{seq2seq_forward.2} parent=1 // pred_region
      %67 = dma.done [#allocation5], 512
    $region45: #{seq2seq_forward.2} parent=1 // pred_fallthru
      _
    %v68 = vld [vmem:[%s0] sm:$0x3]
    %v69 = vld [vmem:[%s0 + $0x2] sm:$0x3]
    %v70 = vld [vmem:[%s0 + $0x4] sm:$0x3]
    %v71 = vld [vmem:[%s0 + $0x6] sm:$0x3]
    %v72 = vld [vmem:[%s0 + $0x8] sm:$0x3]
    %v73 = vld [vmem:[%s0 + $0xa] sm:$0x3]
    %v74 = vld [vmem:[%s0 + $0xc] sm:$0x3]
    %v75 = vld [vmem:[%s0 + $0xe] sm:$0x3]
    %v76 = vld [vmem:[%s1] sm:$0xff]
    %v77 = vld [vmem:[%s1 + $0x8] sm:$0xff]
    %v78 = vld [vmem:[%s1 + $0x10] sm:$0xff]
    %v79 = vld [vmem:[%s1 + $0x18] sm:$0xff]
    %v80 = vld [vmem:[%s2] sm:$0x1]
    %v82 = vperm.slane %v80, 0
    %92 = vst [vmem:[#allocation1] ss:$4 sm:$0xff] %v68
    %s93 = scalar_lea.vmem [#allocation1], 1
    %94 = vst [vmem:[%s93] ss:$4 sm:$0xff] %v69
    %s95 = scalar_lea.vmem [#allocation1], 2
    %96 = vst [vmem:[%s95] ss:$4 sm:$0xff] %v70
    %s97 = scalar_lea.vmem [#allocation1], 3
    %98 = vst [vmem:[%s97] ss:$4 sm:$0xff] %v71
    %s99 = scalar_lea.vmem [#allocation1], 32
    %100 = vst [vmem:[%s99] ss:$4 sm:$0xff] %v72
    %s101 = scalar_lea.vmem [#allocation1], 33
    %102 = vst [vmem:[%s101] ss:$4 sm:$0xff] %v73
    %s103 = scalar_lea.vmem [#allocation1], 34
    %104 = vst [vmem:[%s103] ss:$4 sm:$0xff] %v74
    %s105 = scalar_lea.vmem [#allocation1], 35
    %106 = vst [vmem:[%s105] ss:$4 sm:$0xff] %v75
    %v107 = vld.sshfl [vmem:[#allocation1] sm:$0xff pattern:$0x73625140]
    %v108 = vld.sshfl [vmem:[#allocation1 + $0x20] sm:$0xff pattern:$0x73625140]
    %vm109 = vcmask 261120
    %v110 = vsel %vm109, %v107, 0
    %v112 = vsel %vm109, %v108, 0
    %114 = vmatpush.msra.mxu0 0.0
    %115 = vmatpush.msra.mxu0 0.0
    %116 = vmatpush.msra.mxu0 0.0
    %117 = vmatpush.msra.mxu0 0.0
    %118 = vmatpush.msra.mxu0 0.0
    %119 = vmatpush.msra.mxu0 0.0
    %120 = vmatpush.msra.mxu0 0.0
    %121 = vmatpush.msra.mxu0 0.0
    %122 = vmatpush.msra.mxu0 0.0
    %123 = vmatpush.msra.mxu0 0.0
    %124 = vmatpush.msra.mxu0 0.0
    %125 = vmatpush.msra.mxu0 0.0
    %126 = vmatpush.msra.mxu0 %v79
    %127 = vmatpush.msra.mxu0 %v78
    %128 = vmatpush.msra.mxu0 %v77
    %129 = vmatpush.msra.mxu0 %v76
    %130 = vmatmul.f32.gmra.mxu0 %v110
    %v131 = vpop.f32.mrf.mxu0
    %v132 = vadd.f32 %v82, %v131
    %133 = vmatmul.f32.gmra.mxu0 %v112
    %v134 = vpop.f32.mrf.mxu0
    %v135 = vadd.f32 %v82, %v134
    %136 = vdwg.mxu0
    %v139 = vrot.slane %v132, 2
    %v140 = vrot.slane %v132, 4
    %v141 = vrot.slane %v132, 6
    %v142 = vrot.slane %v135, 2
    %v143 = vrot.slane %v135, 4
    %v144 = vrot.slane %v135, 6
    %v151 = vld [vmem:[%s3] sm:$0xff]
    %v152 = vld [vmem:[%s3 + $0x8] sm:$0xff]
    %v153 = vld [vmem:[%s3 + $0x10] sm:$0xff]
    %v154 = vld [vmem:[%s3 + $0x18] sm:$0xff]
    %v156 = vsel %vm109, 0.0, 0
    %158 = vmatpush.msra.mxu0 0.0
    %159 = vmatpush.msra.mxu0 0.0
    %160 = vmatpush.msra.mxu0 0.0
    %161 = vmatpush.msra.mxu0 0.0
    %162 = vmatpush.msra.mxu0 0.0
    %163 = vmatpush.msra.mxu0 0.0
    %164 = vmatpush.msra.mxu0 0.0
    %165 = vmatpush.msra.mxu0 0.0
    %166 = vmatpush.msra.mxu0 0.0
    %167 = vmatpush.msra.mxu0 0.0
    %168 = vmatpush.msra.mxu0 0.0
    %169 = vmatpush.msra.mxu0 0.0
    %170 = vmatpush.msra.mxu0 %v154
    %171 = vmatpush.msra.mxu0 %v153
    %172 = vmatpush.msra.mxu0 %v152
    %173 = vmatpush.msra.mxu0 %v151
    %174 = vmatmul.f32.gmra.mxu0 %v156
    %v175 = vpop.f32.mrf.mxu0
    %v176 = vadd.f32 0.0, %v175
    %177 = vdwg.mxu0
    %v178 = vadd.f32 %v132, %v176
    %v179 = vxor.u32 %v178, 2147483648
    %v180 = vmul.f32 %v179, 1.442695
    %v181 = vpow.pop %v180
    %v182 = vadd.f32 %v181, 1.0
    %v183 = vrcp.pop %v182
    %v184 = vmul.f32 %v182, %v183
    %v185 = vsub.f32 1.0, %v184
    %v186 = vmul.f32 %v183, %v185
    %v187 = vadd.f32 %v183, %v186
    %vm188 = vweird.f32 %v182
    %vm189 = vweird.f32 %v183
    %vm190 = vmor %vm188, %vm189
    %v191 = vsel %vm190, %v183, %v187
    %v192 = vand.u32 2147483647, %v182
    %vm193 = vcmp.eq.f32.partialorder %v192, 8.507059e+37
    %v194 = vand.u32 %v182, 2147483648
    %v195 = vor.u32 1.1754944e-38, %v194
    %v196 = vsel %vm193, %v195, %v191
    %v197 = vmul.f32 1.0, %v196
    %v198 = vtanh.pop %v178
    %v199 = vmul.f32 %v197, 0.0
    %201 = vrot.lane.b32.xlu0 %v198, 64
    %v202 = vpop.permute.xlu0 %201
    %v204 = vmul.f32 %v197, %v202
    %206 = vrot.lane.b32.xlu0 %v204, 32
    %v207 = vpop.permute.xlu0 %206
    %v209 = vadd.f32 %v199, %v207
    %v210 = vtanh.pop %v209
    %212 = vrot.lane.b32.xlu0 %v210, 64
    %v213 = vpop.permute.xlu0 %212
    %v215 = vmul.f32 %v197, %v213
    %217 = vst [vmem:[#allocation1] ss:$4 sm:$0xff] %v215
    %v218 = vld.sshfl [vmem:[#allocation1] sm:$0xff pattern:$0x73625140]
    %219 = vrot.lane.b32.xlu0 %v218, 32
    %v220 = vpop.permute.xlu0 %219
    %v221 = vsel %vm109, %v220, 0
    %223 = vmatpush.msra.mxu0 0.0
    %224 = vmatpush.msra.mxu0 0.0
    %225 = vmatpush.msra.mxu0 0.0
    %226 = vmatpush.msra.mxu0 0.0
    %227 = vmatpush.msra.mxu0 0.0
    %228 = vmatpush.msra.mxu0 0.0
    %229 = vmatpush.msra.mxu0 0.0
    %230 = vmatpush.msra.mxu0 0.0
    %231 = vmatpush.msra.mxu0 0.0
    %232 = vmatpush.msra.mxu0 0.0
    %233 = vmatpush.msra.mxu0 0.0
    %234 = vmatpush.msra.mxu0 0.0
    %235 = vmatpush.msra.mxu0 %v154
    %236 = vmatpush.msra.mxu0 %v153
    %237 = vmatpush.msra.mxu0 %v152
    %238 = vmatpush.msra.mxu0 %v151
    %239 = vmatmul.f32.gmra.mxu0 %v221
    %v240 = vpop.f32.mrf.mxu0
    %v241 = vadd.f32 0.0, %v240
    %242 = vdwg.mxu0
    %v243 = vadd.f32 %v139, %v241
    %v244 = vxor.u32 %v243, 2147483648
    %v245 = vmul.f32 %v244, 1.442695
    %v246 = vpow.pop %v245
    %v247 = vadd.f32 %v246, 1.0
    %v248 = vrcp.pop %v247
    %v249 = vmul.f32 %v247, %v248
    %v250 = vsub.f32 1.0, %v249
    %v251 = vmul.f32 %v248, %v250
    %v252 = vadd.f32 %v248, %v251
    %vm253 = vweird.f32 %v247
    %vm254 = vweird.f32 %v248
    %vm255 = vmor %vm253, %vm254
    %v256 = vsel %vm255, %v248, %v252
    %v257 = vand.u32 2147483647, %v247
    %vm258 = vcmp.eq.f32.partialorder %v257, 8.507059e+37
    %v259 = vand.u32 %v247, 2147483648
    %v260 = vor.u32 1.1754944e-38, %v259
    %v261 = vsel %vm258, %v260, %v256
    %v262 = vmul.f32 1.0, %v261
    %v263 = vtanh.pop %v243
    %v264 = vmul.f32 %v262, %v209
    %266 = vrot.lane.b32.xlu0 %v263, 64
    %v267 = vpop.permute.xlu0 %266
    %v269 = vmul.f32 %v262, %v267
    %271 = vrot.lane.b32.xlu0 %v269, 32
    %v272 = vpop.permute.xlu0 %271
    %v274 = vadd.f32 %v264, %v272
    %v275 = vtanh.pop %v274
    %277 = vrot.lane.b32.xlu0 %v275, 64
    %v278 = vpop.permute.xlu0 %277
    %v280 = vmul.f32 %v262, %v278
    %282 = vst [vmem:[#allocation1] ss:$4 sm:$0xff] %v280
    %v283 = vld.sshfl [vmem:[#allocation1] sm:$0xff pattern:$0x73625140]
    %284 = vrot.lane.b32.xlu0 %v283, 32
    %v285 = vpop.permute.xlu0 %284
    %v286 = vsel %vm109, %v285, 0
    %288 = vmatpush.msra.mxu0 0.0
    %289 = vmatpush.msra.mxu0 0.0
    %290 = vmatpush.msra.mxu0 0.0
    %291 = vmatpush.msra.mxu0 0.0
    %292 = vmatpush.msra.mxu0 0.0
    %293 = vmatpush.msra.mxu0 0.0
    %294 = vmatpush.msra.mxu0 0.0
    %295 = vmatpush.msra.mxu0 0.0
    %296 = vmatpush.msra.mxu0 0.0
    %297 = vmatpush.msra.mxu0 0.0
    %298 = vmatpush.msra.mxu0 0.0
    %299 = vmatpush.msra.mxu0 0.0
    %300 = vmatpush.msra.mxu0 %v154
    %301 = vmatpush.msra.mxu0 %v153
    %302 = vmatpush.msra.mxu0 %v152
    %303 = vmatpush.msra.mxu0 %v151
    %304 = vmatmul.f32.gmra.mxu0 %v286
    %v305 = vpop.f32.mrf.mxu0
    %v306 = vadd.f32 0.0, %v305
    %307 = vdwg.mxu0
    %v308 = vadd.f32 %v140, %v306
    %v309 = vxor.u32 %v308, 2147483648
    %v310 = vmul.f32 %v309, 1.442695
    %v311 = vpow.pop %v310
    %v312 = vadd.f32 %v311, 1.0
    %v313 = vrcp.pop %v312
    %v314 = vmul.f32 %v312, %v313
    %v315 = vsub.f32 1.0, %v314
    %v316 = vmul.f32 %v313, %v315
    %v317 = vadd.f32 %v313, %v316
    %vm318 = vweird.f32 %v312
    %vm319 = vweird.f32 %v313
    %vm320 = vmor %vm318, %vm319
    %v321 = vsel %vm320, %v313, %v317
    %v322 = vand.u32 2147483647, %v312
    %vm323 = vcmp.eq.f32.partialorder %v322, 8.507059e+37
    %v324 = vand.u32 %v312, 2147483648
    %v325 = vor.u32 1.1754944e-38, %v324
    %v326 = vsel %vm323, %v325, %v321
    %v327 = vmul.f32 1.0, %v326
    %v328 = vtanh.pop %v308
    %v329 = vmul.f32 %v327, %v274
    %331 = vrot.lane.b32.xlu0 %v328, 64
    %v332 = vpop.permute.xlu0 %331
    %v334 = vmul.f32 %v327, %v332
    %336 = vrot.lane.b32.xlu0 %v334, 32
    %v337 = vpop.permute.xlu0 %336
    %v339 = vadd.f32 %v329, %v337
    %v340 = vtanh.pop %v339
    %342 = vrot.lane.b32.xlu0 %v340, 64
    %v343 = vpop.permute.xlu0 %342
    %v345 = vmul.f32 %v327, %v343
    %347 = vst [vmem:[#allocation1] ss:$4 sm:$0xff] %v345
    %v348 = vld.sshfl [vmem:[#allocation1] sm:$0xff pattern:$0x73625140]
    %349 = vrot.lane.b32.xlu0 %v348, 32
    %v350 = vpop.permute.xlu0 %349
    %v351 = vsel %vm109, %v350, 0
    %353 = vmatpush.msra.mxu0 0.0
    %354 = vmatpush.msra.mxu0 0.0
    %355 = vmatpush.msra.mxu0 0.0
    %356 = vmatpush.msra.mxu0 0.0
    %357 = vmatpush.msra.mxu0 0.0
    %358 = vmatpush.msra.mxu0 0.0
    %359 = vmatpush.msra.mxu0 0.0
    %360 = vmatpush.msra.mxu0 0.0
    %361 = vmatpush.msra.mxu0 0.0
    %362 = vmatpush.msra.mxu0 0.0
    %363 = vmatpush.msra.mxu0 0.0
    %364 = vmatpush.msra.mxu0 0.0
    %365 = vmatpush.msra.mxu0 %v154
    %366 = vmatpush.msra.mxu0 %v153
    %367 = vmatpush.msra.mxu0 %v152
    %368 = vmatpush.msra.mxu0 %v151
    %369 = vmatmul.f32.gmra.mxu0 %v351
    %v370 = vpop.f32.mrf.mxu0
    %v371 = vadd.f32 0.0, %v370
    %372 = vdwg.mxu0
    %v373 = vadd.f32 %v141, %v371
    %v374 = vxor.u32 %v373, 2147483648
    %v375 = vmul.f32 %v374, 1.442695
    %v376 = vpow.pop %v375
    %v377 = vadd.f32 %v376, 1.0
    %v378 = vrcp.pop %v377
    %v379 = vmul.f32 %v377, %v378
    %v380 = vsub.f32 1.0, %v379
    %v381 = vmul.f32 %v378, %v380
    %v382 = vadd.f32 %v378, %v381
    %vm383 = vweird.f32 %v377
    %vm384 = vweird.f32 %v378
    %vm385 = vmor %vm383, %vm384
    %v386 = vsel %vm385, %v378, %v382
    %v387 = vand.u32 2147483647, %v377
    %vm388 = vcmp.eq.f32.partialorder %v387, 8.507059e+37
    %v389 = vand.u32 %v377, 2147483648
    %v390 = vor.u32 1.1754944e-38, %v389
    %v391 = vsel %vm388, %v390, %v386
    %v392 = vmul.f32 1.0, %v391
    %v393 = vtanh.pop %v373
    %v394 = vmul.f32 %v392, %v339
    %396 = vrot.lane.b32.xlu0 %v393, 64
    %v397 = vpop.permute.xlu0 %396
    %v399 = vmul.f32 %v392, %v397
    %401 = vrot.lane.b32.xlu0 %v399, 32
    %v402 = vpop.permute.xlu0 %401
    %v404 = vadd.f32 %v394, %v402
    %v405 = vtanh.pop %v404
    %407 = vrot.lane.b32.xlu0 %v405, 64
    %v408 = vpop.permute.xlu0 %407
    %v410 = vmul.f32 %v392, %v408
    %412 = vst [vmem:[#allocation1] ss:$4 sm:$0xff] %v410
    %v413 = vld.sshfl [vmem:[#allocation1] sm:$0xff pattern:$0x73625140]
    %414 = vrot.lane.b32.xlu0 %v413, 32
    %v415 = vpop.permute.xlu0 %414
    %v416 = vsel %vm109, %v415, 0
    %418 = vmatpush.msra.mxu0 0.0
    %419 = vmatpush.msra.mxu0 0.0
    %420 = vmatpush.msra.mxu0 0.0
    %421 = vmatpush.msra.mxu0 0.0
    %422 = vmatpush.msra.mxu0 0.0
    %423 = vmatpush.msra.mxu0 0.0
    %424 = vmatpush.msra.mxu0 0.0
    %425 = vmatpush.msra.mxu0 0.0
    %426 = vmatpush.msra.mxu0 0.0
    %427 = vmatpush.msra.mxu0 0.0
    %428 = vmatpush.msra.mxu0 0.0
    %429 = vmatpush.msra.mxu0 0.0
    %430 = vmatpush.msra.mxu0 %v154
    %431 = vmatpush.msra.mxu0 %v153
    %432 = vmatpush.msra.mxu0 %v152
    %433 = vmatpush.msra.mxu0 %v151
    %434 = vmatmul.f32.gmra.mxu0 %v416
    %v435 = vpop.f32.mrf.mxu0
    %v436 = vadd.f32 0.0, %v435
    %437 = vdwg.mxu0
    %v438 = vadd.f32 %v135, %v436
    %v439 = vxor.u32 %v438, 2147483648
    %v440 = vmul.f32 %v439, 1.442695
    %v441 = vpow.pop %v440
    %v442 = vadd.f32 %v441, 1.0
    %v443 = vrcp.pop %v442
    %v444 = vmul.f32 %v442, %v443
    %v445 = vsub.f32 1.0, %v444
    %v446 = vmul.f32 %v443, %v445
    %v447 = vadd.f32 %v443, %v446
    %vm448 = vweird.f32 %v442
    %vm449 = vweird.f32 %v443
    %vm450 = vmor %vm448, %vm449
    %v451 = vsel %vm450, %v443, %v447
    %v452 = vand.u32 2147483647, %v442
    %vm453 = vcmp.eq.f32.partialorder %v452, 8.507059e+37
    %v454 = vand.u32 %v442, 2147483648
    %v455 = vor.u32 1.1754944e-38, %v454
    %v456 = vsel %vm453, %v455, %v451
    %v457 = vmul.f32 1.0, %v456
    %v458 = vtanh.pop %v438
    %v459 = vmul.f32 %v457, %v404
    %461 = vrot.lane.b32.xlu0 %v458, 64
    %v462 = vpop.permute.xlu0 %461
    %v464 = vmul.f32 %v457, %v462
    %466 = vrot.lane.b32.xlu0 %v464, 32
    %v467 = vpop.permute.xlu0 %466
    %v469 = vadd.f32 %v459, %v467
    %v470 = vtanh.pop %v469
    %472 = vrot.lane.b32.xlu0 %v470, 64
    %v473 = vpop.permute.xlu0 %472
    %v475 = vmul.f32 %v457, %v473
    %477 = vst [vmem:[#allocation1] ss:$4 sm:$0xff] %v475
    %v478 = vld.sshfl [vmem:[#allocation1] sm:$0xff pattern:$0x73625140]
    %479 = vrot.lane.b32.xlu0 %v478, 32
    %v480 = vpop.permute.xlu0 %479
    %v481 = vsel %vm109, %v480, 0
    %483 = vmatpush.msra.mxu0 0.0
    %484 = vmatpush.msra.mxu0 0.0
    %485 = vmatpush.msra.mxu0 0.0
    %486 = vmatpush.msra.mxu0 0.0
    %487 = vmatpush.msra.mxu0 0.0
    %488 = vmatpush.msra.mxu0 0.0
    %489 = vmatpush.msra.mxu0 0.0
    %490 = vmatpush.msra.mxu0 0.0
    %491 = vmatpush.msra.mxu0 0.0
    %492 = vmatpush.msra.mxu0 0.0
    %493 = vmatpush.msra.mxu0 0.0
    %494 = vmatpush.msra.mxu0 0.0
    %495 = vmatpush.msra.mxu0 %v154
    %496 = vmatpush.msra.mxu0 %v153
    %497 = vmatpush.msra.mxu0 %v152
    %498 = vmatpush.msra.mxu0 %v151
    %499 = vmatmul.f32.gmra.mxu0 %v481
    %v500 = vpop.f32.mrf.mxu0
    %v501 = vadd.f32 0.0, %v500
    %502 = vdwg.mxu0
    %v503 = vadd.f32 %v142, %v501
    %v504 = vxor.u32 %v503, 2147483648
    %v505 = vmul.f32 %v504, 1.442695
    %v506 = vpow.pop %v505
    %v507 = vadd.f32 %v506, 1.0
    %v508 = vrcp.pop %v507
    %v509 = vmul.f32 %v507, %v508
    %v510 = vsub.f32 1.0, %v509
    %v511 = vmul.f32 %v508, %v510
    %v512 = vadd.f32 %v508, %v511
    %vm513 = vweird.f32 %v507
    %vm514 = vweird.f32 %v508
    %vm515 = vmor %vm513, %vm514
    %v516 = vsel %vm515, %v508, %v512
    %v517 = vand.u32 2147483647, %v507
    %vm518 = vcmp.eq.f32.partialorder %v517, 8.507059e+37
    %v519 = vand.u32 %v507, 2147483648
    %v520 = vor.u32 1.1754944e-38, %v519
    %v521 = vsel %vm518, %v520, %v516
    %v522 = vmul.f32 1.0, %v521
    %v523 = vtanh.pop %v503
    %v524 = vmul.f32 %v522, %v469
    %526 = vrot.lane.b32.xlu0 %v523, 64
    %v527 = vpop.permute.xlu0 %526
    %v529 = vmul.f32 %v522, %v527
    %531 = vrot.lane.b32.xlu0 %v529, 32
    %v532 = vpop.permute.xlu0 %531
    %v534 = vadd.f32 %v524, %v532
    %v535 = vtanh.pop %v534
    %537 = vrot.lane.b32.xlu0 %v535, 64
    %v538 = vpop.permute.xlu0 %537
    %v540 = vmul.f32 %v522, %v538
    %542 = vst [vmem:[#allocation1] ss:$4 sm:$0xff] %v540
    %v543 = vld.sshfl [vmem:[#allocation1] sm:$0xff pattern:$0x73625140]
    %544 = vrot.lane.b32.xlu0 %v543, 32
    %v545 = vpop.permute.xlu0 %544
    %v546 = vsel %vm109, %v545, 0
    %548 = vmatpush.msra.mxu0 0.0
    %549 = vmatpush.msra.mxu0 0.0
    %550 = vmatpush.msra.mxu0 0.0
    %551 = vmatpush.msra.mxu0 0.0
    %552 = vmatpush.msra.mxu0 0.0
    %553 = vmatpush.msra.mxu0 0.0
    %554 = vmatpush.msra.mxu0 0.0
    %555 = vmatpush.msra.mxu0 0.0
    %556 = vmatpush.msra.mxu0 0.0
    %557 = vmatpush.msra.mxu0 0.0
    %558 = vmatpush.msra.mxu0 0.0
    %559 = vmatpush.msra.mxu0 0.0
    %560 = vmatpush.msra.mxu0 %v154
    %561 = vmatpush.msra.mxu0 %v153
    %562 = vmatpush.msra.mxu0 %v152
    %563 = vmatpush.msra.mxu0 %v151
    %564 = vmatmul.f32.gmra.mxu0 %v546
    %v565 = vpop.f32.mrf.mxu0
    %v566 = vadd.f32 0.0, %v565
    %567 = vdwg.mxu0
    %v568 = vadd.f32 %v143, %v566
    %v569 = vxor.u32 %v568, 2147483648
    %v570 = vmul.f32 %v569, 1.442695
    %v571 = vpow.pop %v570
    %v572 = vadd.f32 %v571, 1.0
    %v573 = vrcp.pop %v572
    %v574 = vmul.f32 %v572, %v573
    %v575 = vsub.f32 1.0, %v574
    %v576 = vmul.f32 %v573, %v575
    %v577 = vadd.f32 %v573, %v576
    %vm578 = vweird.f32 %v572
    %vm579 = vweird.f32 %v573
    %vm580 = vmor %vm578, %vm579
    %v581 = vsel %vm580, %v573, %v577
    %v582 = vand.u32 2147483647, %v572
    %vm583 = vcmp.eq.f32.partialorder %v582, 8.507059e+37
    %v584 = vand.u32 %v572, 2147483648
    %v585 = vor.u32 1.1754944e-38, %v584
    %v586 = vsel %vm583, %v585, %v581
    %v587 = vmul.f32 1.0, %v586
    %v588 = vtanh.pop %v568
    %v589 = vmul.f32 %v587, %v534
    %591 = vrot.lane.b32.xlu0 %v588, 64
    %v592 = vpop.permute.xlu0 %591
    %v594 = vmul.f32 %v587, %v592
    %596 = vrot.lane.b32.xlu0 %v594, 32
    %v597 = vpop.permute.xlu0 %596
    %v599 = vadd.f32 %v589, %v597
    %v600 = vtanh.pop %v599
    %602 = vrot.lane.b32.xlu0 %v600, 64
    %v603 = vpop.permute.xlu0 %602
    %v605 = vmul.f32 %v587, %v603
    %607 = vst [vmem:[#allocation1] ss:$4 sm:$0xff] %v605
    %v608 = vld.sshfl [vmem:[#allocation1] sm:$0xff pattern:$0x73625140]
    %609 = vrot.lane.b32.xlu0 %v608, 32
    %v610 = vpop.permute.xlu0 %609
    %v611 = vsel %vm109, %v610, 0
    %613 = vmatpush.msra.mxu0 0.0
    %614 = vmatpush.msra.mxu0 0.0
    %615 = vmatpush.msra.mxu0 0.0
    %616 = vmatpush.msra.mxu0 0.0
    %617 = vmatpush.msra.mxu0 0.0
    %618 = vmatpush.msra.mxu0 0.0
    %619 = vmatpush.msra.mxu0 0.0
    %620 = vmatpush.msra.mxu0 0.0
    %621 = vmatpush.msra.mxu0 0.0
    %622 = vmatpush.msra.mxu0 0.0
    %623 = vmatpush.msra.mxu0 0.0
    %624 = vmatpush.msra.mxu0 0.0
    %625 = vmatpush.msra.mxu0 %v154
    %626 = vmatpush.msra.mxu0 %v153
    %627 = vmatpush.msra.mxu0 %v152
    %628 = vmatpush.msra.mxu0 %v151
    %629 = vmatmul.f32.gmra.mxu0 %v611
    %v630 = vpop.f32.mrf.mxu0
    %v631 = vadd.f32 0.0, %v630
    %632 = vdwg.mxu0
    %v633 = vadd.f32 %v144, %v631
    %v634 = vxor.u32 %v633, 2147483648
    %v635 = vmul.f32 %v634, 1.442695
    %v636 = vpow.pop %v635
    %v637 = vadd.f32 %v636, 1.0
    %v638 = vrcp.pop %v637
    %v639 = vmul.f32 %v637, %v638
    %v640 = vsub.f32 1.0, %v639
    %v641 = vmul.f32 %v638, %v640
    %v642 = vadd.f32 %v638, %v641
    %vm643 = vweird.f32 %v637
    %vm644 = vweird.f32 %v638
    %vm645 = vmor %vm643, %vm644
    %v646 = vsel %vm645, %v638, %v642
    %v647 = vand.u32 2147483647, %v637
    %vm648 = vcmp.eq.f32.partialorder %v647, 8.507059e+37
    %v649 = vand.u32 %v637, 2147483648
    %v650 = vor.u32 1.1754944e-38, %v649
    %v651 = vsel %vm648, %v650, %v646
    %v652 = vmul.f32 1.0, %v651
    %v653 = vtanh.pop %v633
    %v654 = vmul.f32 %v652, %v599
    %656 = vrot.lane.b32.xlu0 %v653, 64
    %v657 = vpop.permute.xlu0 %656
    %v659 = vmul.f32 %v652, %v657
    %661 = vrot.lane.b32.xlu0 %v659, 32
    %v662 = vpop.permute.xlu0 %661
    %v664 = vadd.f32 %v654, %v662
    %v665 = vtanh.pop %v664
    %667 = vrot.lane.b32.xlu0 %v665, 64
    %v668 = vpop.permute.xlu0 %667
    %v670 = vmul.f32 %v652, %v668
    %s671 = scalar_lea.vmem [#allocation1], 1
    %672 = vst [vmem:[%s671] ss:$4 sm:$0xff] %v280
    %v673 = vld.sshfl [vmem:[#allocation1] sm:$0xff pattern:$0x73625140]
    %s675 = scalar_lea.vmem [#allocation1], 2
    %676 = vst [vmem:[%s675] ss:$4 sm:$0xff] %v345
    %v677 = vld.sshfl [vmem:[#allocation1] sm:$0xff pattern:$0x73625140]
    %s679 = scalar_lea.vmem [#allocation1], 3
    %680 = vst [vmem:[%s679] ss:$4 sm:$0xff] %v410
    %v681 = vld.sshfl [vmem:[#allocation1] sm:$0xff pattern:$0x73625140]
    %s683 = scalar_lea.vmem [#allocation1], 1
    %684 = vst [vmem:[%s683] ss:$4 sm:$0xff] %v540
    %v685 = vld.sshfl [vmem:[#allocation1] sm:$0xff pattern:$0x73625140]
    %s687 = scalar_lea.vmem [#allocation1], 2
    %688 = vst [vmem:[%s687] ss:$4 sm:$0xff] %v605
    %v689 = vld.sshfl [vmem:[#allocation1] sm:$0xff pattern:$0x73625140]
    %s692 = scalar_lea.vmem [#allocation1], 3
    %693 = vst [vmem:[%s692] ss:$4 sm:$0xff] %v670
    %v694 = vld.sshfl [vmem:[#allocation1] sm:$0xff pattern:$0x73625140]
    %vm696 = vcmask 1041408
    %v697 = vsel %vm696, %v215, %v673
    %vm698 = vcmask 1043456
    %v699 = vsel %vm698, %v697, %v677
    %vm700 = vcmask 1045504
    %v701 = vsel %vm700, %v699, %v681
    %v702 = vsel %vm696, %v475, %v685
    %v703 = vsel %vm698, %v702, %v689
    %v704 = vsel %vm700, %v703, %v694
    %v705 = vld [vmem:[%s4] sm:$0xff]
    %v706 = vld [vmem:[%s4 + $0x8] sm:$0xff]
    %v707 = vld [vmem:[%s4 + $0x10] sm:$0xff]
    %v708 = vld [vmem:[%s4 + $0x18] sm:$0xff]
    %v709 = vld [vmem:[%s6] sm:$0x1]
    %v711 = vperm.slane %v709, 0
    %715 = vrot.lane.b32.xlu0 %v701, 32
    %v716 = vpop.permute.xlu0 %715
    %717 = vrot.lane.b32.xlu0 %v704, 32
    %v718 = vpop.permute.xlu0 %717
    %v719 = vsel %vm109, %v716, 0
    %v721 = vsel %vm109, %v718, 0
    %723 = vmatpush.msra.mxu0 0.0
    %724 = vmatpush.msra.mxu0 0.0
    %725 = vmatpush.msra.mxu0 0.0
    %726 = vmatpush.msra.mxu0 0.0
    %727 = vmatpush.msra.mxu0 0.0
    %728 = vmatpush.msra.mxu0 0.0
    %729 = vmatpush.msra.mxu0 0.0
    %730 = vmatpush.msra.mxu0 0.0
    %731 = vmatpush.msra.mxu0 0.0
    %732 = vmatpush.msra.mxu0 0.0
    %733 = vmatpush.msra.mxu0 0.0
    %734 = vmatpush.msra.mxu0 0.0
    %735 = vmatpush.msra.mxu0 %v708
    %736 = vmatpush.msra.mxu0 %v707
    %737 = vmatpush.msra.mxu0 %v706
    %738 = vmatpush.msra.mxu0 %v705
    %739 = vmatmul.f32.gmra.mxu0 %v719
    %v740 = vpop.f32.mrf.mxu0
    %v741 = vadd.f32 %v711, %v740
    %742 = vmatmul.f32.gmra.mxu0 %v721
    %v743 = vpop.f32.mrf.mxu0
    %v744 = vadd.f32 %v711, %v743
    %745 = vdwg.mxu0
    %v748 = vrot.slane %v741, 2
    %v749 = vrot.slane %v741, 4
    %v750 = vrot.slane %v741, 6
    %v751 = vrot.slane %v744, 2
    %v752 = vrot.slane %v744, 4
    %v753 = vrot.slane %v744, 6
    %v760 = vld [vmem:[#allocation2] sm:$0xff]
    %v761 = vld [vmem:[#allocation2 + $0x8] sm:$0xff]
    %v762 = vld [vmem:[#allocation2 + $0x10] sm:$0xff]
    %v763 = vld [vmem:[#allocation2 + $0x18] sm:$0xff]
    %764 = vmatpush.msra.mxu0 0.0
    %765 = vmatpush.msra.mxu0 0.0
    %766 = vmatpush.msra.mxu0 0.0
    %767 = vmatpush.msra.mxu0 0.0
    %768 = vmatpush.msra.mxu0 0.0
    %769 = vmatpush.msra.mxu0 0.0
    %770 = vmatpush.msra.mxu0 0.0
    %771 = vmatpush.msra.mxu0 0.0
    %772 = vmatpush.msra.mxu0 0.0
    %773 = vmatpush.msra.mxu0 0.0
    %774 = vmatpush.msra.mxu0 0.0
    %775 = vmatpush.msra.mxu0 0.0
    %776 = vmatpush.msra.mxu0 %v763
    %777 = vmatpush.msra.mxu0 %v762
    %778 = vmatpush.msra.mxu0 %v761
    %779 = vmatpush.msra.mxu0 %v760
    %780 = vmatmul.f32.gmra.mxu0 %v156
    %v781 = vpop.f32.mrf.mxu0
    %v782 = vadd.f32 0.0, %v781
    %783 = vdwg.mxu0
    %v784 = vadd.f32 %v741, %v782
    %v785 = vxor.u32 %v784, 2147483648
    %v786 = vmul.f32 %v785, 1.442695
    %v787 = vpow.pop %v786
    %v788 = vadd.f32 %v787, 1.0
    %v789 = vrcp.pop %v788
    %v790 = vmul.f32 %v788, %v789
    %v791 = vsub.f32 1.0, %v790
    %v792 = vmul.f32 %v789, %v791
    %v793 = vadd.f32 %v789, %v792
    %vm794 = vweird.f32 %v788
    %vm795 = vweird.f32 %v789
    %vm796 = vmor %vm794, %vm795
    %v797 = vsel %vm796, %v789, %v793
    %v798 = vand.u32 2147483647, %v788
    %vm799 = vcmp.eq.f32.partialorder %v798, 8.507059e+37
    %v800 = vand.u32 %v788, 2147483648
    %v801 = vor.u32 1.1754944e-38, %v800
    %v802 = vsel %vm799, %v801, %v797
    %v803 = vmul.f32 1.0, %v802
    %v804 = vtanh.pop %v784
    %v805 = vmul.f32 %v803, 0.0
    %807 = vrot.lane.b32.xlu0 %v804, 64
    %v808 = vpop.permute.xlu0 %807
    %v810 = vmul.f32 %v803, %v808
    %812 = vrot.lane.b32.xlu0 %v810, 32
    %v813 = vpop.permute.xlu0 %812
    %v815 = vadd.f32 %v805, %v813
    %v816 = vtanh.pop %v815
    %818 = vrot.lane.b32.xlu0 %v816, 64
    %v819 = vpop.permute.xlu0 %818
    %v821 = vmul.f32 %v803, %v819
    %823 = vst [vmem:[#allocation1] ss:$4 sm:$0xff] %v821
    %v824 = vld.sshfl [vmem:[#allocation1] sm:$0xff pattern:$0x73625140]
    %825 = vrot.lane.b32.xlu0 %v824, 32
    %v826 = vpop.permute.xlu0 %825
    %v827 = vsel %vm109, %v826, 0
    %829 = vmatpush.msra.mxu0 0.0
    %830 = vmatpush.msra.mxu0 0.0
    %831 = vmatpush.msra.mxu0 0.0
    %832 = vmatpush.msra.mxu0 0.0
    %833 = vmatpush.msra.mxu0 0.0
    %834 = vmatpush.msra.mxu0 0.0
    %835 = vmatpush.msra.mxu0 0.0
    %836 = vmatpush.msra.mxu0 0.0
    %837 = vmatpush.msra.mxu0 0.0
    %838 = vmatpush.msra.mxu0 0.0
    %839 = vmatpush.msra.mxu0 0.0
    %840 = vmatpush.msra.mxu0 0.0
    %841 = vmatpush.msra.mxu0 %v763
    %842 = vmatpush.msra.mxu0 %v762
    %843 = vmatpush.msra.mxu0 %v761
    %844 = vmatpush.msra.mxu0 %v760
    %845 = vmatmul.f32.gmra.mxu0 %v827
    %v846 = vpop.f32.mrf.mxu0
    %v847 = vadd.f32 0.0, %v846
    %848 = vdwg.mxu0
    %v849 = vadd.f32 %v748, %v847
    %v850 = vxor.u32 %v849, 2147483648
    %v851 = vmul.f32 %v850, 1.442695
    %v852 = vpow.pop %v851
    %v853 = vadd.f32 %v852, 1.0
    %v854 = vrcp.pop %v853
    %v855 = vmul.f32 %v853, %v854
    %v856 = vsub.f32 1.0, %v855
    %v857 = vmul.f32 %v854, %v856
    %v858 = vadd.f32 %v854, %v857
    %vm859 = vweird.f32 %v853
    %vm860 = vweird.f32 %v854
    %vm861 = vmor %vm859, %vm860
    %v862 = vsel %vm861, %v854, %v858
    %v863 = vand.u32 2147483647, %v853
    %vm864 = vcmp.eq.f32.partialorder %v863, 8.507059e+37
    %v865 = vand.u32 %v853, 2147483648
    %v866 = vor.u32 1.1754944e-38, %v865
    %v867 = vsel %vm864, %v866, %v862
    %v868 = vmul.f32 1.0, %v867
    %v869 = vtanh.pop %v849
    %v870 = vmul.f32 %v868, %v815
    %872 = vrot.lane.b32.xlu0 %v869, 64
    %v873 = vpop.permute.xlu0 %872
    %v875 = vmul.f32 %v868, %v873
    %877 = vrot.lane.b32.xlu0 %v875, 32
    %v878 = vpop.permute.xlu0 %877
    %v880 = vadd.f32 %v870, %v878
    %v881 = vtanh.pop %v880
    %883 = vrot.lane.b32.xlu0 %v881, 64
    %v884 = vpop.permute.xlu0 %883
    %v886 = vmul.f32 %v868, %v884
    %888 = vst [vmem:[#allocation1] ss:$4 sm:$0xff] %v886
    %v889 = vld.sshfl [vmem:[#allocation1] sm:$0xff pattern:$0x73625140]
    %890 = vrot.lane.b32.xlu0 %v889, 32
    %v891 = vpop.permute.xlu0 %890
    %v892 = vsel %vm109, %v891, 0
    %894 = vmatpush.msra.mxu0 0.0
    %895 = vmatpush.msra.mxu0 0.0
    %896 = vmatpush.msra.mxu0 0.0
    %897 = vmatpush.msra.mxu0 0.0
    %898 = vmatpush.msra.mxu0 0.0
    %899 = vmatpush.msra.mxu0 0.0
    %900 = vmatpush.msra.mxu0 0.0
    %901 = vmatpush.msra.mxu0 0.0
    %902 = vmatpush.msra.mxu0 0.0
    %903 = vmatpush.msra.mxu0 0.0
    %904 = vmatpush.msra.mxu0 0.0
    %905 = vmatpush.msra.mxu0 0.0
    %906 = vmatpush.msra.mxu0 %v763
    %907 = vmatpush.msra.mxu0 %v762
    %908 = vmatpush.msra.mxu0 %v761
    %909 = vmatpush.msra.mxu0 %v760
    %910 = vmatmul.f32.gmra.mxu0 %v892
    %v911 = vpop.f32.mrf.mxu0
    %v912 = vadd.f32 0.0, %v911
    %913 = vdwg.mxu0
    %v914 = vadd.f32 %v749, %v912
    %v915 = vxor.u32 %v914, 2147483648
    %v916 = vmul.f32 %v915, 1.442695
    %v917 = vpow.pop %v916
    %v918 = vadd.f32 %v917, 1.0
    %v919 = vrcp.pop %v918
    %v920 = vmul.f32 %v918, %v919
    %v921 = vsub.f32 1.0, %v920
    %v922 = vmul.f32 %v919, %v921
    %v923 = vadd.f32 %v919, %v922
    %vm924 = vweird.f32 %v918
    %vm925 = vweird.f32 %v919
    %vm926 = vmor %vm924, %vm925
    %v927 = vsel %vm926, %v919, %v923
    %v928 = vand.u32 2147483647, %v918
    %vm929 = vcmp.eq.f32.partialorder %v928, 8.507059e+37
    %v930 = vand.u32 %v918, 2147483648
    %v931 = vor.u32 1.1754944e-38, %v930
    %v932 = vsel %vm929, %v931, %v927
    %v933 = vmul.f32 1.0, %v932
    %v934 = vtanh.pop %v914
    %v935 = vmul.f32 %v933, %v880
    %937 = vrot.lane.b32.xlu0 %v934, 64
    %v938 = vpop.permute.xlu0 %937
    %v940 = vmul.f32 %v933, %v938
    %942 = vrot.lane.b32.xlu0 %v940, 32
    %v943 = vpop.permute.xlu0 %942
    %v945 = vadd.f32 %v935, %v943
    %v946 = vtanh.pop %v945
    %948 = vrot.lane.b32.xlu0 %v946, 64
    %v949 = vpop.permute.xlu0 %948
    %v951 = vmul.f32 %v933, %v949
    %953 = vst [vmem:[#allocation1] ss:$4 sm:$0xff] %v951
    %v954 = vld.sshfl [vmem:[#allocation1] sm:$0xff pattern:$0x73625140]
    %955 = vrot.lane.b32.xlu0 %v954, 32
    %v956 = vpop.permute.xlu0 %955
    %v957 = vsel %vm109, %v956, 0
    %959 = vmatpush.msra.mxu0 0.0
    %960 = vmatpush.msra.mxu0 0.0
    %961 = vmatpush.msra.mxu0 0.0
    %962 = vmatpush.msra.mxu0 0.0
    %963 = vmatpush.msra.mxu0 0.0
    %964 = vmatpush.msra.mxu0 0.0
    %965 = vmatpush.msra.mxu0 0.0
    %966 = vmatpush.msra.mxu0 0.0
    %967 = vmatpush.msra.mxu0 0.0
    %968 = vmatpush.msra.mxu0 0.0
    %969 = vmatpush.msra.mxu0 0.0
    %970 = vmatpush.msra.mxu0 0.0
    %971 = vmatpush.msra.mxu0 %v763
    %972 = vmatpush.msra.mxu0 %v762
    %973 = vmatpush.msra.mxu0 %v761
    %974 = vmatpush.msra.mxu0 %v760
    %975 = vmatmul.f32.gmra.mxu0 %v957
    %v976 = vpop.f32.mrf.mxu0
    %v977 = vadd.f32 0.0, %v976
    %978 = vdwg.mxu0
    %v979 = vadd.f32 %v750, %v977
    %v980 = vxor.u32 %v979, 2147483648
    %v981 = vmul.f32 %v980, 1.442695
    %v982 = vpow.pop %v981
    %v983 = vadd.f32 %v982, 1.0
    %v984 = vrcp.pop %v983
    %v985 = vmul.f32 %v983, %v984
    %v986 = vsub.f32 1.0, %v985
    %v987 = vmul.f32 %v984, %v986
    %v988 = vadd.f32 %v984, %v987
    %vm989 = vweird.f32 %v983
    %vm990 = vweird.f32 %v984
    %vm991 = vmor %vm989, %vm990
    %v992 = vsel %vm991, %v984, %v988
    %v993 = vand.u32 2147483647, %v983
    %vm994 = vcmp.eq.f32.partialorder %v993, 8.507059e+37
    %v995 = vand.u32 %v983, 2147483648
    %v996 = vor.u32 1.1754944e-38, %v995
    %v997 = vsel %vm994, %v996, %v992
    %v998 = vmul.f32 1.0, %v997
    %v999 = vtanh.pop %v979
    %v1000 = vmul.f32 %v998, %v945
    %1002 = vrot.lane.b32.xlu0 %v999, 64
    %v1003 = vpop.permute.xlu0 %1002
    %v1005 = vmul.f32 %v998, %v1003
    %1007 = vrot.lane.b32.xlu0 %v1005, 32
    %v1008 = vpop.permute.xlu0 %1007
    %v1010 = vadd.f32 %v1000, %v1008
    %v1011 = vtanh.pop %v1010
    %1013 = vrot.lane.b32.xlu0 %v1011, 64
    %v1014 = vpop.permute.xlu0 %1013
    %v1016 = vmul.f32 %v998, %v1014
    %1018 = vst [vmem:[#allocation1] ss:$4 sm:$0xff] %v1016
    %v1019 = vld.sshfl [vmem:[#allocation1] sm:$0xff pattern:$0x73625140]
    %1020 = vrot.lane.b32.xlu0 %v1019, 32
    %v1021 = vpop.permute.xlu0 %1020
    %v1022 = vsel %vm109, %v1021, 0
    %1024 = vmatpush.msra.mxu0 0.0
    %1025 = vmatpush.msra.mxu0 0.0
    %1026 = vmatpush.msra.mxu0 0.0
    %1027 = vmatpush.msra.mxu0 0.0
    %1028 = vmatpush.msra.mxu0 0.0
    %1029 = vmatpush.msra.mxu0 0.0
    %1030 = vmatpush.msra.mxu0 0.0
    %1031 = vmatpush.msra.mxu0 0.0
    %1032 = vmatpush.msra.mxu0 0.0
    %1033 = vmatpush.msra.mxu0 0.0
    %1034 = vmatpush.msra.mxu0 0.0
    %1035 = vmatpush.msra.mxu0 0.0
    %1036 = vmatpush.msra.mxu0 %v763
    %1037 = vmatpush.msra.mxu0 %v762
    %1038 = vmatpush.msra.mxu0 %v761
    %1039 = vmatpush.msra.mxu0 %v760
    %1040 = vmatmul.f32.gmra.mxu0 %v1022
    %v1041 = vpop.f32.mrf.mxu0
    %v1042 = vadd.f32 0.0, %v1041
    %1043 = vdwg.mxu0
    %v1044 = vadd.f32 %v744, %v1042
    %v1045 = vxor.u32 %v1044, 2147483648
    %v1046 = vmul.f32 %v1045, 1.442695
    %v1047 = vpow.pop %v1046
    %v1048 = vadd.f32 %v1047, 1.0
    %v1049 = vrcp.pop %v1048
    %v1050 = vmul.f32 %v1048, %v1049
    %v1051 = vsub.f32 1.0, %v1050
    %v1052 = vmul.f32 %v1049, %v1051
    %v1053 = vadd.f32 %v1049, %v1052
    %vm1054 = vweird.f32 %v1048
    %vm1055 = vweird.f32 %v1049
    %vm1056 = vmor %vm1054, %vm1055
    %v1057 = vsel %vm1056, %v1049, %v1053
    %v1058 = vand.u32 2147483647, %v1048
    %vm1059 = vcmp.eq.f32.partialorder %v1058, 8.507059e+37
    %v1060 = vand.u32 %v1048, 2147483648
    %v1061 = vor.u32 1.1754944e-38, %v1060
    %v1062 = vsel %vm1059, %v1061, %v1057
    %v1063 = vmul.f32 1.0, %v1062
    %v1064 = vtanh.pop %v1044
    %v1065 = vmul.f32 %v1063, %v1010
    %1067 = vrot.lane.b32.xlu0 %v1064, 64
    %v1068 = vpop.permute.xlu0 %1067
    %v1070 = vmul.f32 %v1063, %v1068
    %1072 = vrot.lane.b32.xlu0 %v1070, 32
    %v1073 = vpop.permute.xlu0 %1072
    %v1075 = vadd.f32 %v1065, %v1073
    %v1076 = vtanh.pop %v1075
    %1078 = vrot.lane.b32.xlu0 %v1076, 64
    %v1079 = vpop.permute.xlu0 %1078
    %v1081 = vmul.f32 %v1063, %v1079
    %1083 = vst [vmem:[#allocation1] ss:$4 sm:$0xff] %v1081
    %v1084 = vld.sshfl [vmem:[#allocation1] sm:$0xff pattern:$0x73625140]
    %1085 = vrot.lane.b32.xlu0 %v1084, 32
    %v1086 = vpop.permute.xlu0 %1085
    %v1087 = vsel %vm109, %v1086, 0
    %1089 = vmatpush.msra.mxu0 0.0
    %1090 = vmatpush.msra.mxu0 0.0
    %1091 = vmatpush.msra.mxu0 0.0
    %1092 = vmatpush.msra.mxu0 0.0
    %1093 = vmatpush.msra.mxu0 0.0
    %1094 = vmatpush.msra.mxu0 0.0
    %1095 = vmatpush.msra.mxu0 0.0
    %1096 = vmatpush.msra.mxu0 0.0
    %1097 = vmatpush.msra.mxu0 0.0
    %1098 = vmatpush.msra.mxu0 0.0
    %1099 = vmatpush.msra.mxu0 0.0
    %1100 = vmatpush.msra.mxu0 0.0
    %1101 = vmatpush.msra.mxu0 %v763
    %1102 = vmatpush.msra.mxu0 %v762
    %1103 = vmatpush.msra.mxu0 %v761
    %1104 = vmatpush.msra.mxu0 %v760
    %1105 = vmatmul.f32.gmra.mxu0 %v1087
    %v1106 = vpop.f32.mrf.mxu0
    %v1107 = vadd.f32 0.0, %v1106
    %1108 = vdwg.mxu0
    %v1109 = vadd.f32 %v751, %v1107
    %v1110 = vxor.u32 %v1109, 2147483648
    %v1111 = vmul.f32 %v1110, 1.442695
    %v1112 = vpow.pop %v1111
    %v1113 = vadd.f32 %v1112, 1.0
    %v1114 = vrcp.pop %v1113
    %v1115 = vmul.f32 %v1113, %v1114
    %v1116 = vsub.f32 1.0, %v1115
    %v1117 = vmul.f32 %v1114, %v1116
    %v1118 = vadd.f32 %v1114, %v1117
    %vm1119 = vweird.f32 %v1113
    %vm1120 = vweird.f32 %v1114
    %vm1121 = vmor %vm1119, %vm1120
    %v1122 = vsel %vm1121, %v1114, %v1118
    %v1123 = vand.u32 2147483647, %v1113
    %vm1124 = vcmp.eq.f32.partialorder %v1123, 8.507059e+37
    %v1125 = vand.u32 %v1113, 2147483648
    %v1126 = vor.u32 1.1754944e-38, %v1125
    %v1127 = vsel %vm1124, %v1126, %v1122
    %v1128 = vmul.f32 1.0, %v1127
    %v1129 = vtanh.pop %v1109
    %v1130 = vmul.f32 %v1128, %v1075
    %1132 = vrot.lane.b32.xlu0 %v1129, 64
    %v1133 = vpop.permute.xlu0 %1132
    %v1135 = vmul.f32 %v1128, %v1133
    %1137 = vrot.lane.b32.xlu0 %v1135, 32
    %v1138 = vpop.permute.xlu0 %1137
    %v1140 = vadd.f32 %v1130, %v1138
    %v1141 = vtanh.pop %v1140
    %1143 = vrot.lane.b32.xlu0 %v1141, 64
    %v1144 = vpop.permute.xlu0 %1143
    %v1146 = vmul.f32 %v1128, %v1144
    %1148 = vst [vmem:[#allocation1] ss:$4 sm:$0xff] %v1146
    %v1149 = vld.sshfl [vmem:[#allocation1] sm:$0xff pattern:$0x73625140]
    %1150 = vrot.lane.b32.xlu0 %v1149, 32
    %v1151 = vpop.permute.xlu0 %1150
    %v1152 = vsel %vm109, %v1151, 0
    %1154 = vmatpush.msra.mxu0 0.0
    %1155 = vmatpush.msra.mxu0 0.0
    %1156 = vmatpush.msra.mxu0 0.0
    %1157 = vmatpush.msra.mxu0 0.0
    %1158 = vmatpush.msra.mxu0 0.0
    %1159 = vmatpush.msra.mxu0 0.0
    %1160 = vmatpush.msra.mxu0 0.0
    %1161 = vmatpush.msra.mxu0 0.0
    %1162 = vmatpush.msra.mxu0 0.0
    %1163 = vmatpush.msra.mxu0 0.0
    %1164 = vmatpush.msra.mxu0 0.0
    %1165 = vmatpush.msra.mxu0 0.0
    %1166 = vmatpush.msra.mxu0 %v763
    %1167 = vmatpush.msra.mxu0 %v762
    %1168 = vmatpush.msra.mxu0 %v761
    %1169 = vmatpush.msra.mxu0 %v760
    %1170 = vmatmul.f32.gmra.mxu0 %v1152
    %v1171 = vpop.f32.mrf.mxu0
    %v1172 = vadd.f32 0.0, %v1171
    %1173 = vdwg.mxu0
    %v1174 = vadd.f32 %v752, %v1172
    %v1175 = vxor.u32 %v1174, 2147483648
    %v1176 = vmul.f32 %v1175, 1.442695
    %v1177 = vpow.pop %v1176
    %v1178 = vadd.f32 %v1177, 1.0
    %v1179 = vrcp.pop %v1178
    %v1180 = vmul.f32 %v1178, %v1179
    %v1181 = vsub.f32 1.0, %v1180
    %v1182 = vmul.f32 %v1179, %v1181
    %v1183 = vadd.f32 %v1179, %v1182
    %vm1184 = vweird.f32 %v1178
    %vm1185 = vweird.f32 %v1179
    %vm1186 = vmor %vm1184, %vm1185
    %v1187 = vsel %vm1186, %v1179, %v1183
    %v1188 = vand.u32 2147483647, %v1178
    %vm1189 = vcmp.eq.f32.partialorder %v1188, 8.507059e+37
    %v1190 = vand.u32 %v1178, 2147483648
    %v1191 = vor.u32 1.1754944e-38, %v1190
    %v1192 = vsel %vm1189, %v1191, %v1187
    %v1193 = vmul.f32 1.0, %v1192
    %v1194 = vtanh.pop %v1174
    %v1195 = vmul.f32 %v1193, %v1140
    %1197 = vrot.lane.b32.xlu0 %v1194, 64
    %v1198 = vpop.permute.xlu0 %1197
    %v1200 = vmul.f32 %v1193, %v1198
    %1202 = vrot.lane.b32.xlu0 %v1200, 32
    %v1203 = vpop.permute.xlu0 %1202
    %v1205 = vadd.f32 %v1195, %v1203
    %v1206 = vtanh.pop %v1205
    %1208 = vrot.lane.b32.xlu0 %v1206, 64
    %v1209 = vpop.permute.xlu0 %1208
    %v1211 = vmul.f32 %v1193, %v1209
    %1213 = vst [vmem:[#allocation1] ss:$4 sm:$0xff] %v1211
    %v1214 = vld.sshfl [vmem:[#allocation1] sm:$0xff pattern:$0x73625140]
    %1215 = vrot.lane.b32.xlu0 %v1214, 32
    %v1216 = vpop.permute.xlu0 %1215
    %v1217 = vsel %vm109, %v1216, 0
    %1219 = vmatpush.msra.mxu0 0.0
    %1220 = vmatpush.msra.mxu0 0.0
    %1221 = vmatpush.msra.mxu0 0.0
    %1222 = vmatpush.msra.mxu0 0.0
    %1223 = vmatpush.msra.mxu0 0.0
    %1224 = vmatpush.msra.mxu0 0.0
    %1225 = vmatpush.msra.mxu0 0.0
    %1226 = vmatpush.msra.mxu0 0.0
    %1227 = vmatpush.msra.mxu0 0.0
    %1228 = vmatpush.msra.mxu0 0.0
    %1229 = vmatpush.msra.mxu0 0.0
    %1230 = vmatpush.msra.mxu0 0.0
    %1231 = vmatpush.msra.mxu0 %v763
    %1232 = vmatpush.msra.mxu0 %v762
    %1233 = vmatpush.msra.mxu0 %v761
    %1234 = vmatpush.msra.mxu0 %v760
    %1235 = vmatmul.f32.gmra.mxu0 %v1217
    %v1236 = vpop.f32.mrf.mxu0
    %v1237 = vadd.f32 0.0, %v1236
    %1238 = vdwg.mxu0
    %v1239 = vadd.f32 %v753, %v1237
    %v1240 = vxor.u32 %v1239, 2147483648
    %v1241 = vmul.f32 %v1240, 1.442695
    %v1242 = vpow.pop %v1241
    %v1243 = vadd.f32 %v1242, 1.0
    %v1244 = vrcp.pop %v1243
    %v1245 = vmul.f32 %v1243, %v1244
    %v1246 = vsub.f32 1.0, %v1245
    %v1247 = vmul.f32 %v1244, %v1246
    %v1248 = vadd.f32 %v1244, %v1247
    %vm1249 = vweird.f32 %v1243
    %vm1250 = vweird.f32 %v1244
    %vm1251 = vmor %vm1249, %vm1250
    %v1252 = vsel %vm1251, %v1244, %v1248
    %v1253 = vand.u32 2147483647, %v1243
    %vm1254 = vcmp.eq.f32.partialorder %v1253, 8.507059e+37
    %v1255 = vand.u32 %v1243, 2147483648
    %v1256 = vor.u32 1.1754944e-38, %v1255
    %v1257 = vsel %vm1254, %v1256, %v1252
    %v1258 = vmul.f32 1.0, %v1257
    %v1259 = vtanh.pop %v1239
    %v1260 = vmul.f32 %v1258, %v1205
    %1262 = vrot.lane.b32.xlu0 %v1259, 64
    %v1263 = vpop.permute.xlu0 %1262
    %v1265 = vmul.f32 %v1258, %v1263
    %1267 = vrot.lane.b32.xlu0 %v1265, 32
    %v1268 = vpop.permute.xlu0 %1267
    %v1270 = vadd.f32 %v1260, %v1268
    %v1271 = vtanh.pop %v1270
    %1273 = vrot.lane.b32.xlu0 %v1271, 64
    %v1274 = vpop.permute.xlu0 %1273
    %v1276 = vmul.f32 %v1258, %v1274
    %v1277 = vrot.slane %v821, 1
    %v1278 = vrot.slane %v821, 2
    %v1279 = vrot.slane %v821, 3
    %vm1280 = vcmask 1040384
    %v1281 = vsel %vm1280, %v821, %v1277
    %vm1282 = vcmask 1042434
    %v1283 = vsel %vm1282, %v1278, %v1279
    %v1284 = vsel %vm696, %v1281, %v1283
    %vm1285 = vcmask 1041409
    %v1286 = vsel %vm1285, %v821, %v1277
    %vm1287 = vcmask 1043459
    %v1288 = vsel %vm1287, %v1278, %v1279
    %vm1289 = vcmask 1042433
    %v1290 = vsel %vm1289, %v1286, %v1288
    %v1291 = vrot.slane %v1290, 1
    %v1294 = vrot.slane %v886, 1
    %v1295 = vrot.slane %v886, 2
    %v1296 = vrot.slane %v886, 3
    %v1297 = vsel %vm1280, %v886, %v1294
    %v1298 = vsel %vm1282, %v1295, %v1296
    %v1299 = vsel %vm696, %v1297, %v1298
    %v1300 = vsel %vm1285, %v886, %v1294
    %v1301 = vsel %vm1287, %v1295, %v1296
    %v1302 = vsel %vm1289, %v1300, %v1301
    %v1303 = vrot.slane %v1302, 1
    %v1304 = vrot.slane %v951, 1
    %v1305 = vrot.slane %v951, 2
    %v1306 = vrot.slane %v951, 3
    %v1307 = vsel %vm1280, %v951, %v1304
    %v1308 = vsel %vm1282, %v1305, %v1306
    %v1309 = vsel %vm696, %v1307, %v1308
    %v1310 = vsel %vm1285, %v951, %v1304
    %v1311 = vsel %vm1287, %v1305, %v1306
    %v1312 = vsel %vm1289, %v1310, %v1311
    %v1313 = vrot.slane %v1312, 1
    %v1314 = vrot.slane %v1016, 1
    %v1315 = vrot.slane %v1016, 2
    %v1316 = vrot.slane %v1016, 3
    %v1317 = vsel %vm1280, %v1016, %v1314
    %v1318 = vsel %vm1282, %v1315, %v1316
    %v1319 = vsel %vm696, %v1317, %v1318
    %v1320 = vsel %vm1285, %v1016, %v1314
    %v1321 = vsel %vm1287, %v1315, %v1316
    %v1322 = vsel %vm1289, %v1320, %v1321
    %v1323 = vrot.slane %v1322, 1
    %v1324 = vrot.slane %v1081, 1
    %v1325 = vrot.slane %v1081, 2
    %v1326 = vrot.slane %v1081, 3
    %v1327 = vsel %vm1280, %v1081, %v1324
    %v1328 = vsel %vm1282, %v1325, %v1326
    %v1329 = vsel %vm696, %v1327, %v1328
    %v1330 = vsel %vm1285, %v1081, %v1324
    %v1331 = vsel %vm1287, %v1325, %v1326
    %v1332 = vsel %vm1289, %v1330, %v1331
    %v1333 = vrot.slane %v1332, 1
    %v1334 = vrot.slane %v1146, 1
    %v1335 = vrot.slane %v1146, 2
    %v1336 = vrot.slane %v1146, 3
    %v1337 = vsel %vm1280, %v1146, %v1334
    %v1338 = vsel %vm1282, %v1335, %v1336
    %v1339 = vsel %vm696, %v1337, %v1338
    %v1340 = vsel %vm1285, %v1146, %v1334
    %v1341 = vsel %vm1287, %v1335, %v1336
    %v1342 = vsel %vm1289, %v1340, %v1341
    %v1343 = vrot.slane %v1342, 1
    %v1344 = vrot.slane %v1211, 1
    %v1345 = vrot.slane %v1211, 2
    %v1346 = vrot.slane %v1211, 3
    %v1347 = vsel %vm1280, %v1211, %v1344
    %v1348 = vsel %vm1282, %v1345, %v1346
    %v1349 = vsel %vm696, %v1347, %v1348
    %v1350 = vsel %vm1285, %v1211, %v1344
    %v1351 = vsel %vm1287, %v1345, %v1346
    %v1352 = vsel %vm1289, %v1350, %v1351
    %v1353 = vrot.slane %v1352, 1
    %v1355 = vrot.slane %v1276, 1
    %v1356 = vrot.slane %v1276, 2
    %v1357 = vrot.slane %v1276, 3
    %v1358 = vsel %vm1280, %v1276, %v1355
    %v1359 = vsel %vm1282, %v1356, %v1357
    %v1360 = vsel %vm696, %v1358, %v1359
    %v1361 = vsel %vm1285, %v1276, %v1355
    %v1362 = vsel %vm1287, %v1356, %v1357
    %v1363 = vsel %vm1289, %v1361, %v1362
    %v1364 = vrot.slane %v1363, 1
    %v1365 = vperm.slane %v1299, 0
    %v1366 = vperm.slane %v1303, 0
    %v1369 = vperm.slane %v1309, 0
    %v1370 = vperm.slane %v1313, 0
    %v1373 = vperm.slane %v1319, 0
    %v1374 = vperm.slane %v1323, 0
    %v1377 = vperm.slane %v1329, 0
    %v1378 = vperm.slane %v1333, 0
    %v1381 = vperm.slane %v1339, 0
    %v1382 = vperm.slane %v1343, 0
    %v1385 = vperm.slane %v1349, 0
    %v1386 = vperm.slane %v1353, 0
    %v1389 = vperm.slane %v1360, 0
    %v1390 = vperm.slane %v1364, 0
    %v1393 = vsel %vm1280, %v1284, %v1365
    %v1394 = vsel %vm1280, %v1291, %v1366
    %v1395 = vsel %vm696, %v1393, %v1369
    %v1396 = vsel %vm696, %v1394, %v1370
    %vm1397 = vcmask 1042432
    %v1398 = vsel %vm1397, %v1395, %v1373
    %v1399 = vsel %vm1397, %v1396, %v1374
    %v1400 = vsel %vm698, %v1398, %v1377
    %v1401 = vsel %vm698, %v1399, %v1378
    %vm1402 = vcmask 1044480
    %v1403 = vsel %vm1402, %v1400, %v1381
    %v1404 = vsel %vm1402, %v1401, %v1382
    %v1405 = vsel %vm700, %v1403, %v1385
    %v1406 = vsel %vm700, %v1404, %v1386
    %vm1407 = vcmask 1046528
    %v1408 = vsel %vm1407, %v1405, %v1389
    %v1409 = vsel %vm1407, %v1406, %v1390
    %1412 = vrot.lane.b32.xlu0 %v1408, 32
    %v1413 = vpop.permute.xlu0 %1412
    %1414 = vrot.lane.b32.xlu0 %v1409, 32
    %v1415 = vpop.permute.xlu0 %1414
    %1418 = vst.msk [vmem:[%s9] sm:$0xff] %vm109, %v1413
    %1419 = vst.msk [vmem:[%s9 + $0x8] sm:$0xff] %vm109, %v1415
    %v1420 = vld [vmem:[#allocation4] sm:$0xff]
    %v1421 = vld [vmem:[#allocation4 + $0x8] sm:$0xff]
    %v1422 = vld [vmem:[#allocation4 + $0x10] sm:$0xff]
    %v1423 = vld [vmem:[#allocation4 + $0x18] sm:$0xff]
    %v1424 = vld [vmem:[%s8] sm:$0x1]
    %v1426 = vperm.slane %v1424, 0
    %v1428 = vsel %vm109, %v1413, 0
    %v1430 = vsel %vm109, %v1415, 0
    %1432 = vmatpush.msra.mxu0 0.0
    %1433 = vmatpush.msra.mxu0 0.0
    %1434 = vmatpush.msra.mxu0 0.0
    %1435 = vmatpush.msra.mxu0 0.0
    %1436 = vmatpush.msra.mxu0 0.0
    %1437 = vmatpush.msra.mxu0 0.0
    %1438 = vmatpush.msra.mxu0 0.0
    %1439 = vmatpush.msra.mxu0 0.0
    %1440 = vmatpush.msra.mxu0 0.0
    %1441 = vmatpush.msra.mxu0 0.0
    %1442 = vmatpush.msra.mxu0 0.0
    %1443 = vmatpush.msra.mxu0 0.0
    %1444 = vmatpush.msra.mxu0 %v1423
    %1445 = vmatpush.msra.mxu0 %v1422
    %1446 = vmatpush.msra.mxu0 %v1421
    %1447 = vmatpush.msra.mxu0 %v1420
    %1448 = vmatmul.f32.gmra.mxu0 %v1428
    %v1449 = vpop.f32.mrf.mxu0
    %v1450 = vadd.f32 %v1426, %v1449
    %1451 = vmatmul.f32.gmra.mxu0 %v1430
    %v1452 = vpop.f32.mrf.mxu0
    %v1453 = vadd.f32 %v1426, %v1452
    %1454 = vdwg.mxu0
    %1455 = vst.msk [vmem:[%s10] sm:$0xff] %vm109, %v1450
    %1456 = vst.msk [vmem:[%s10 + $0x8] sm:$0xff] %vm109, %v1453
    %1457 = vst [vmem:[#allocation1] ss:$4 sm:$0xff] %v670
    %v1458 = vld.sshfl [vmem:[#allocation1] sm:$0xff pattern:$0x73625140]
    %1459 = vrot.lane.b32.xlu0 %v1458, 32
    %v1460 = vpop.permute.xlu0 %1459
    %vm1462 = vcmask 254976
    %1463 = vst.msk [vmem:[%s11] sm:$0x3] %vm1462, %v1460
    %1464 = vst [vmem:[#allocation1] ss:$4 sm:$0xff] %v1276
    %v1465 = vld.sshfl [vmem:[#allocation1] sm:$0xff pattern:$0x73625140]
    %1466 = vrot.lane.b32.xlu0 %v1465, 32
    %v1467 = vpop.permute.xlu0 %1466
    %s1469 = scalar_lea.vmem %s11, 2
    %1470 = vst.msk [vmem:[%s1469] sm:$0x3] %vm1462, %v1467
    %1472 = vst [vmem:[#allocation1] ss:$4 sm:$0xff] %v664
    %v1473 = vld.sshfl [vmem:[#allocation1] sm:$0xff pattern:$0x73625140]
    %1474 = vrot.lane.b32.xlu0 %v1473, 96
    %v1475 = vpop.permute.xlu0 %1474
    %1477 = vst.msk [vmem:[%s12] sm:$0x3] %vm1462, %v1475
    %1479 = vst [vmem:[#allocation1] ss:$4 sm:$0xff] %v1270
    %v1480 = vld.sshfl [vmem:[#allocation1] sm:$0xff pattern:$0x73625140]
    %1481 = vrot.lane.b32.xlu0 %v1480, 96
    %v1482 = vpop.permute.xlu0 %1481
    %s1484 = scalar_lea.vmem %s12, 2
    %1485 = vst.msk [vmem:[%s1484] sm:$0x3] %vm1462, %v1482
    // Predicated region
    $region46: #{seq2seq_forward.2} parent=1 // pred_check
      _
    $region47: #{seq2seq_forward.2} parent=1 // pred_check_branch
      %1487 = sbr.rel (0) target = $region49
    $region48: #{seq2seq_forward.2} parent=1 // pred_region
      _
    $region49: #{seq2seq_forward.2} parent=1 // pred_fallthru
      _
    // Predicated region
    $region50: #{seq2seq_forward.2} parent=1 // pred_check
      _
    $region51: #{seq2seq_forward.2} parent=1 // pred_check_branch
      %1489 = sbr.rel (0) target = $region53
    $region52: #{seq2seq_forward.2} parent=1 // pred_region
      _
    $region53: #{seq2seq_forward.2} parent=1 // pred_fallthru
      _
    // Predicated region
    $region54: #{seq2seq_forward.2} parent=1 // pred_check
      _
    $region55: #{seq2seq_forward.2} parent=1 // pred_check_branch
      %1491 = sbr.rel (0) target = $region57
    $region56: #{seq2seq_forward.2} parent=1 // pred_region
      _
    $region57: #{seq2seq_forward.2} parent=1 // pred_fallthru
      _
    // Predicated region
    $region58: #{seq2seq_forward.2} parent=1 // pred_check
      _
    $region59: #{seq2seq_forward.2} parent=1 // pred_check_branch
      %1493 = sbr.rel (0) target = $region61
    $region60: #{seq2seq_forward.2} parent=1 // pred_region
      _
    $region61: #{seq2seq_forward.2} parent=1 // pred_fallthru
      _
    // Predicated region
    $region62: #{seq2seq_forward.2} parent=1 // pred_check
      _
    $region63: #{seq2seq_forward.2} parent=1 // pred_check_branch
      %1495 = sbr.rel (0) target = $region65
    $region64: #{seq2seq_forward.2} parent=1 // pred_region
      _
    $region65: #{seq2seq_forward.2} parent=1 // pred_fallthru
      _
    // Predicated region
    $region66: #{seq2seq_forward.2} parent=1 // pred_check
      _
    $region67: #{seq2seq_forward.2} parent=1 // pred_check_branch
      %1497 = sbr.rel (0) target = $region69
    $region68: #{seq2seq_forward.2} parent=1 // pred_region
      _
    $region69: #{seq2seq_forward.2} parent=1 // pred_fallthru
      _
    // Predicated region
    $region70: #{seq2seq_forward.2} parent=1 // pred_check
      _
    $region71: #{seq2seq_forward.2} parent=1 // pred_check_branch
      %1499 = sbr.rel (0) target = $region73
    $region72: #{seq2seq_forward.2} parent=1 // pred_region
      _
    $region73: #{seq2seq_forward.2} parent=1 // pred_fallthru
      _
    // Predicated region
    $region74: #{seq2seq_forward.2} parent=1 // pred_check
      _
    $region75: #{seq2seq_forward.2} parent=1 // pred_check_branch
      %1501 = sbr.rel (0) target = $region77
    $region76: #{seq2seq_forward.2} parent=1 // pred_region
      _
    $region77: #{seq2seq_forward.2} parent=1 // pred_fallthru
      _
    %1502 = vsyncpa [#allocation3], 1
    %1503 = vsyncpa [#allocation5], 1

</llo_original>
